<compile_context>
chip_gen: v7x
topology: tpu7x:2x2x1
jax: 0.10.0
libtpu: 0.0.40
codegen_flags: <defaults>
</compile_context>

<pallas_src>
import jax
import jax.numpy as jnp
import numpy as np
from jax import lax
from jax.experimental import pallas as pl
from jax.experimental.pallas import tpu as pltpu

_EPS = 1e-5


# ---------------------------------------------------------------------------
# geometry helpers
# ---------------------------------------------------------------------------
def _geom(H, W, nb):
    H2, W2 = H // 2, W // 2
    Wp = W2 + 2                          # pooled width incl. 1-col SAME halo
    Mi = H2 * Wp                         # interior (flat) rows per image
    R = -(-((H2 + 2) * Wp) // 8) * 8     # flat rows reserved per image (8-aligned)
    L = (nb - 1) * R + Mi                # matmul M (all images, W-halo cols kept)
    Mp = nb * R + Wp                     # scratch rows (covers the (2,2) tap reach)
    return H2, W2, Wp, Mi, R, L, Mp


def _valid_mask(H, W, nb):
    """1.0 where a flat accumulator row is a real output position, else 0.0."""
    _, W2, Wp, Mi, R, L, _ = _geom(H, W, nb)
    q = np.arange(L)
    r = q % R
    valid = (r < Mi) & ((r % Wp) < W2)
    return jnp.asarray(valid.astype(np.float32).reshape(L, 1))


# ---------------------------------------------------------------------------
# Pallas kernel
# ---------------------------------------------------------------------------
def _make_down_call(N, H, W, Cin, Cout, *, nb, compute_dtype, out_dtype):
    assert H % 2 == 0 and W % 2 == 0 and N % nb == 0
    H2, W2, Wp, Mi, R, L, Mp = _geom(H, W, nb)
    cdt = compute_dtype
    taps = [(dy, dx) for dy in range(3) for dx in range(3)]

    def kernel(x_ref, mask_ref, w1_ref, s1_ref, b1_ref, w2_ref, s2_ref, b2_ref,
               o_ref, pad1, pad2):
        # ---- zero only the halo rows (cheap; interiors rewritten below) -----
        def zero_halos(ref, c):
            ref[pl.ds(0, Wp + 1), :] = jnp.zeros((Wp + 1, c), cdt)
            for n in range(nb):
                ref[pl.ds(n * R + Mi + Wp, R - Mi), :] = jnp.zeros((R - Mi, c), cdt)

        zero_halos(pad1, Cin)
        zero_halos(pad2, Cout)

        # ---- MaxPool2d(2) + fill the flat zero-padded conv1 input ----------
        # x_ref[n, hp, wp] is the (H2*Wp, Cin) slab of one pooling parity; the
        # left/right halo columns arrive as the wrapper's zero W-padding, so
        # one contiguous store per image writes the whole padded interior.
        for n in range(nb):
            p = jnp.maximum(jnp.maximum(x_ref[n, 0, 0], x_ref[n, 0, 1]),
                            jnp.maximum(x_ref[n, 1, 0], x_ref[n, 1, 1]))
            pad1[pl.ds(n * R + Wp, Mi), :] = p.astype(cdt)

        # ---- Conv1 3x3 SAME + folded BN + ReLU ------------------------------
        # Each tap is ONE contiguous pl.ds load of the flat padded map.
        acc1 = jnp.zeros((L, Cout), jnp.float32)
        for k, (dy, dx) in enumerate(taps):
            acc1 = acc1 + jnp.dot(pad1[pl.ds(dy * Wp + dx, L), :], w1_ref[k],
                                  preferred_element_type=jnp.float32)
        h1 = jnp.maximum(acc1 * s1_ref[...] + b1_ref[...], 0.0)

        # h1 -> padded conv2 input: zero the rows that are not valid output
        # positions (W-halo cols / inter-image gap rows), then a single
        # contiguous store with a uniform flat shift of Wp+1 lands every valid
        # value at its padded position.
        pad2[pl.ds(Wp + 1, L), :] = (h1 * mask_ref[...]).astype(cdt)

        # ---- Conv2 3x3 SAME + folded BN + ReLU ------------------------------
        acc2 = jnp.zeros((L, Cout), jnp.float32)
        for k, (dy, dx) in enumerate(taps):
            acc2 = acc2 + jnp.dot(pad2[pl.ds(dy * Wp + dx, L), :], w2_ref[k],
                                  preferred_element_type=jnp.float32)
        h2 = jnp.maximum(acc2 * s2_ref[...] + b2_ref[...], 0.0)

        # ---- lane-dense slab output (W halo cols kept; wrapper slices) ------
        for n in range(nb):
            o_ref[n] = h2[n * R:n * R + Mi].astype(o_ref.dtype)

    grid_spec = pltpu.PrefetchScalarGridSpec(
        num_scalar_prefetch=0,
        grid=(N // nb,),
        in_specs=[
            pl.BlockSpec((nb, 2, 2, Mi, Cin), lambda g: (g, 0, 0, 0, 0)),  # x
            pl.BlockSpec((L, 1), lambda g: (0, 0)),                        # mask
            pl.BlockSpec((9, Cin, Cout), lambda g: (0, 0, 0)),             # w1
            pl.BlockSpec((1, Cout), lambda g: (0, 0)),                     # s1
            pl.BlockSpec((1, Cout), lambda g: (0, 0)),                     # b1
            pl.BlockSpec((9, Cout, Cout), lambda g: (0, 0, 0)),            # w2
            pl.BlockSpec((1, Cout), lambda g: (0, 0)),                     # s2
            pl.BlockSpec((1, Cout), lambda g: (0, 0)),                     # b2
        ],
        out_specs=pl.BlockSpec((nb, Mi, Cout), lambda g: (g, 0, 0)),
        scratch_shapes=[
            pltpu.VMEM((Mp, Cin), cdt),    # flat zero-padded pooled map
            pltpu.VMEM((Mp, Cout), cdt),   # flat zero-padded hidden map
        ],
    )

    return pl.pallas_call(
        kernel,
        out_shape=jax.ShapeDtypeStruct((N, Mi, Cout), out_dtype),
        grid_spec=grid_spec,
        compiler_params=pltpu.CompilerParams(
            dimension_semantics=("parallel",),
            vmem_limit_bytes=32 * 1024 * 1024),
    )


# ---------------------------------------------------------------------------
# Parameters (deterministic, synthetic) and BN folding (inference mode)
# ---------------------------------------------------------------------------
def init_params(key, Cin, Cout):
    k1, k2, k3, k4 = jax.random.split(key, 4)
    arange = jnp.arange(Cout, dtype=jnp.float32)
    return dict(
        w1=jax.random.normal(k1, (3, 3, Cin, Cout), jnp.float32) * 0.2,   # HWIO
        cb1=jax.random.normal(k2, (Cout,), jnp.float32) * 0.1,
        g1=1.0 + 0.1 * arange / Cout,
        be1=0.05 * arange,
        m1=0.02 * arange,
        v1=1.0 + 0.03 * arange,
        w2=jax.random.normal(k3, (3, 3, Cout, Cout), jnp.float32) * 0.2,  # HWIO
        cb2=jax.random.normal(k4, (Cout,), jnp.float32) * 0.1,
        g2=1.0 - 0.05 * arange / Cout,
        be2=-0.03 * arange,
        m2=-0.01 * arange,
        v2=1.0 + 0.02 * arange,
    )


def fold_params(raw):
    """Fold conv bias + inference-mode BatchNorm into per-channel scale/bias."""
    def fold(w, cb, g, be, m, v):
        scale = g / jnp.sqrt(v + _EPS)
        bias = (cb - m) * scale + be
        Cin, Cout = w.shape[-2], w.shape[-1]
        return w.reshape(9, Cin, Cout), scale.reshape(1, Cout), bias.reshape(1, Cout)

    w1, s1, b1 = fold(raw["w1"], raw["cb1"], raw["g1"], raw["be1"], raw["m1"], raw["v1"])
    w2, s2, b2 = fold(raw["w2"], raw["cb2"], raw["g2"], raw["be2"], raw["m2"], raw["v2"])
    return w1, s1, b1, w2, s2, b2


# ---------------------------------------------------------------------------
# Public forward (NCHW in / NCHW out, matching the PyTorch module)
# ---------------------------------------------------------------------------
def down_forward(x_nchw, raw_params, *, compute_dtype=jnp.bfloat16, nb=None):
    N, Cin, H, W = x_nchw.shape
    H2, W2 = H // 2, W // 2
    Wp = W2 + 2
    w1, s1, b1, w2, s2, b2 = fold_params(raw_params)
    Cout = w1.shape[-1]

    if nb is None:
        # batch enough images per grid step that the MXU M dim is ~256,
        # while keeping nb a divisor of N.
        nb = max(1, min(N, max(1, 256 // (H2 * Wp))))
        while N % nb:
            nb -= 1
    _, _, _, Mi, _, _, _ = _geom(H, W, nb)

    # Wrapper-side layout plumbing only (no compute hoisted out of the kernel):
    # NCHW -> NHWC, add 2 zero W-columns per side (they become the conv1 SAME
    # halo after the in-kernel 2x2 pool), and expose the pooling parities as
    # leading dims with a flat (H2*Wp, Cin) spatial layout.
    x = jnp.transpose(x_nchw, (0, 2, 3, 1))                 # NHWC
    x = jnp.pad(x, ((0, 0), (0, 0), (2, 2), (0, 0)))        # W halo
    x = x.reshape(N, H2, 2, Wp, 2, Cin)
    x = jnp.transpose(x, (0, 2, 4, 1, 3, 5)).reshape(N, 2, 2, Mi, Cin)

    mask = _valid_mask(H, W, nb)
    call = _make_down_call(N, H, W, Cin, Cout, nb=nb,
                           compute_dtype=compute_dtype, out_dtype=x_nchw.dtype)
    slab = call(x, mask,
                w1.astype(compute_dtype), s1, b1,
                w2.astype(compute_dtype), s2, b2)
    out = slab.reshape(N, H2, Wp, Cout)[:, :, :W2, :]       # drop W halo cols
    return jnp.transpose(out, (0, 3, 1, 2))                 # back to NCHW


# ---------------------------------------------------------------------------
# Pure-JAX reference (for correctness checking)
# ---------------------------------------------------------------------------
def ref_down(x_nchw, raw):
    x = jnp.transpose(x_nchw, (0, 2, 3, 1))
    p = lax.reduce_window(x, -jnp.inf, lax.max, (1, 2, 2, 1), (1, 2, 2, 1), "VALID")

    def block(y, w, cb, g, be, m, v):
        y = lax.conv_general_dilated(y, w, (1, 1), "SAME",
                                     dimension_numbers=("NHWC", "HWIO", "NHWC"))
        y = y + cb
        y = (y - m) / jnp.sqrt(v + _EPS) * g + be
        return jnp.maximum(y, 0.0)

    y = block(p, raw["w1"], raw["cb1"], raw["g1"], raw["be1"], raw["m1"], raw["v1"])
    y = block(y, raw["w2"], raw["cb2"], raw["g2"], raw["be2"], raw["m2"], raw["v2"])
    return jnp.transpose(y, (0, 3, 1, 2))


# ---------------------------------------------------------------------------
if __name__ == "__main__":
    # NOTE: BatchNorm is implemented in inference mode (running stats), the
    # standard deployment semantics for this block.
    key = jax.random.PRNGKey(0)
    kx, kp = jax.random.split(key)

    N, Cin, H, W, Cout = 2, 4, 16, 16, 8
    x = jax.random.normal(kx, (N, Cin, H, W), jnp.float32)
    raw = init_params(kp, Cin, Cout)

    ref = jax.block_until_ready(ref_down(x, raw))

    # Exact path (f32 MXU operands): tight check.
    out_f32 = jax.block_until_ready(down_forward(x, raw, compute_dtype=jnp.float32))
    np.testing.assert_allclose(np.asarray(out_f32), np.asarray(ref),
                               rtol=1e-4, atol=1e-4)

    # Fast path (bf16 MXU operands, f32 accumulate / BN): loose check.
    out_bf16 = jax.block_until_ready(down_forward(x, raw, compute_dtype=jnp.bfloat16))
    np.testing.assert_allclose(np.asarray(out_bf16), np.asarray(ref),
                               rtol=5e-2, atol=1e-1)

    print("KERNEL_OK")
</pallas_src>

<mosaic_0001>
module attributes {stable_mosaic.version = 11 : i64} {
  func.func @kernel(%arg0: i32, %arg1: memref<2x2x2x80x4xf32, #tpu.memory_space<vmem>>, %arg2: memref<184x1xf32, #tpu.memory_space<vmem>>, %arg3: memref<9x4x8xf32, #tpu.memory_space<vmem>>, %arg4: memref<1x8xf32, #tpu.memory_space<vmem>>, %arg5: memref<1x8xf32, #tpu.memory_space<vmem>>, %arg6: memref<9x8x8xf32, #tpu.memory_space<vmem>>, %arg7: memref<1x8xf32, #tpu.memory_space<vmem>>, %arg8: memref<1x8xf32, #tpu.memory_space<vmem>>, %arg9: memref<2x80x8xf32, #tpu.memory_space<vmem>>, %arg10: memref<218x4xf32, #tpu.memory_space<vmem>>, %arg11: memref<218x8xf32, #tpu.memory_space<vmem>>) attributes {dimension_semantics = [#tpu.dimension_semantics<parallel>], iteration_bounds = array<i64: 1>, scalar_prefetch = 0 : i64, scratch_operands = 2 : i64, tpu.core_type = #tpu.core_type<tc>, window_params = [{transform_indices = @transform_0, window_bounds = array<i64: 2, 2, 2, 80, 4>}, {pipeline_mode = #tpu.pipeline_mode<synchronous>, transform_indices = @transform_1, window_bounds = array<i64: 184, 1>}, {pipeline_mode = #tpu.pipeline_mode<synchronous>, transform_indices = @transform_2, window_bounds = array<i64: 9, 4, 8>}, {pipeline_mode = #tpu.pipeline_mode<synchronous>, transform_indices = @transform_3, window_bounds = array<i64: 1, 8>}, {pipeline_mode = #tpu.pipeline_mode<synchronous>, transform_indices = @transform_4, window_bounds = array<i64: 1, 8>}, {pipeline_mode = #tpu.pipeline_mode<synchronous>, transform_indices = @transform_5, window_bounds = array<i64: 9, 8, 8>}, {pipeline_mode = #tpu.pipeline_mode<synchronous>, transform_indices = @transform_6, window_bounds = array<i64: 1, 8>}, {pipeline_mode = #tpu.pipeline_mode<synchronous>, transform_indices = @transform_7, window_bounds = array<i64: 1, 8>}, {transform_indices = @transform_8, window_bounds = array<i64: 2, 80, 8>}]} {
    %cst = arith.constant 0.000000e+00 : f32
    %0 = vector.broadcast %cst : f32 to vector<11x4xf32>
    %c0 = arith.constant 0 : index
    %c0_0 = arith.constant 0 : index
    %1 = vector.load %arg10[%c0, %c0_0] : memref<218x4xf32, #tpu.memory_space<vmem>>, vector<11x4xf32>
    tpu.vector_store %arg10[%c0, %c0_0], %0 {strides = array<i32>} : memref<218x4xf32, #tpu.memory_space<vmem>>, vector<11x4xf32>,
    %cst_1 = arith.constant 0.000000e+00 : f32
    %2 = vector.broadcast %cst_1 : f32 to vector<24x4xf32>
    %c90 = arith.constant 90 : index
    %c0_2 = arith.constant 0 : index
    %3 = vector.load %arg10[%c90, %c0_2] : memref<218x4xf32, #tpu.memory_space<vmem>>, vector<24x4xf32>
    tpu.vector_store %arg10[%c90, %c0_2], %2 {strides = array<i32>} : memref<218x4xf32, #tpu.memory_space<vmem>>, vector<24x4xf32>,
    %cst_3 = arith.constant 0.000000e+00 : f32
    %4 = vector.broadcast %cst_3 : f32 to vector<24x4xf32>
    %c194 = arith.constant 194 : index
    %c0_4 = arith.constant 0 : index
    %5 = vector.load %arg10[%c194, %c0_4] : memref<218x4xf32, #tpu.memory_space<vmem>>, vector<24x4xf32>
    tpu.vector_store %arg10[%c194, %c0_4], %4 {strides = array<i32>} : memref<218x4xf32, #tpu.memory_space<vmem>>, vector<24x4xf32>,
    %cst_5 = arith.constant 0.000000e+00 : f32
    %6 = vector.broadcast %cst_5 : f32 to vector<11x8xf32>
    %c0_6 = arith.constant 0 : index
    %c0_7 = arith.constant 0 : index
    %7 = vector.load %arg11[%c0_6, %c0_7] : memref<218x8xf32, #tpu.memory_space<vmem>>, vector<11x8xf32>
    tpu.vector_store %arg11[%c0_6, %c0_7], %6 {strides = array<i32>} : memref<218x8xf32, #tpu.memory_space<vmem>>, vector<11x8xf32>,
    %cst_8 = arith.constant 0.000000e+00 : f32
    %8 = vector.broadcast %cst_8 : f32 to vector<24x8xf32>
    %c90_9 = arith.constant 90 : index
    %c0_10 = arith.constant 0 : index
    %9 = vector.load %arg11[%c90_9, %c0_10] : memref<218x8xf32, #tpu.memory_space<vmem>>, vector<24x8xf32>
    tpu.vector_store %arg11[%c90_9, %c0_10], %8 {strides = array<i32>} : memref<218x8xf32, #tpu.memory_space<vmem>>, vector<24x8xf32>,
    %cst_11 = arith.constant 0.000000e+00 : f32
    %10 = vector.broadcast %cst_11 : f32 to vector<24x8xf32>
    %c194_12 = arith.constant 194 : index
    %c0_13 = arith.constant 0 : index
    %11 = vector.load %arg11[%c194_12, %c0_13] : memref<218x8xf32, #tpu.memory_space<vmem>>, vector<24x8xf32>
    tpu.vector_store %arg11[%c194_12, %c0_13], %10 {strides = array<i32>} : memref<218x8xf32, #tpu.memory_space<vmem>>, vector<24x8xf32>,
    %c0_14 = arith.constant 0 : index
    %c0_15 = arith.constant 0 : index
    %c0_16 = arith.constant 0 : index
    %c0_17 = arith.constant 0 : index
    %c0_18 = arith.constant 0 : index
    %12 = vector.load %arg1[%c0_14, %c0_15, %c0_16, %c0_17, %c0_18] : memref<2x2x2x80x4xf32, #tpu.memory_space<vmem>>, vector<1x1x1x80x4xf32>
    %13 = vector.shape_cast %12 : vector<1x1x1x80x4xf32> to vector<80x4xf32>
    %c0_19 = arith.constant 0 : index
    %c0_20 = arith.constant 0 : index
    %c1 = arith.constant 1 : index
    %c0_21 = arith.constant 0 : index
    %c0_22 = arith.constant 0 : index
    %14 = vector.load %arg1[%c0_19, %c0_20, %c1, %c0_21, %c0_22] : memref<2x2x2x80x4xf32, #tpu.memory_space<vmem>>, vector<1x1x1x80x4xf32>
    %15 = vector.shape_cast %14 : vector<1x1x1x80x4xf32> to vector<80x4xf32>
    %16 = arith.maximumf %13, %15 : vector<80x4xf32>
    %c0_23 = arith.constant 0 : index
    %c1_24 = arith.constant 1 : index
    %c0_25 = arith.constant 0 : index
    %c0_26 = arith.constant 0 : index
    %c0_27 = arith.constant 0 : index
    %17 = vector.load %arg1[%c0_23, %c1_24, %c0_25, %c0_26, %c0_27] : memref<2x2x2x80x4xf32, #tpu.memory_space<vmem>>, vector<1x1x1x80x4xf32>
    %18 = vector.shape_cast %17 : vector<1x1x1x80x4xf32> to vector<80x4xf32>
    %c0_28 = arith.constant 0 : index
    %c1_29 = arith.constant 1 : index
    %c1_30 = arith.constant 1 : index
    %c0_31 = arith.constant 0 : index
    %c0_32 = arith.constant 0 : index
    %19 = vector.load %arg1[%c0_28, %c1_29, %c1_30, %c0_31, %c0_32] : memref<2x2x2x80x4xf32, #tpu.memory_space<vmem>>, vector<1x1x1x80x4xf32>
    %20 = vector.shape_cast %19 : vector<1x1x1x80x4xf32> to vector<80x4xf32>
    %21 = arith.maximumf %18, %20 : vector<80x4xf32>
    %22 = arith.maximumf %16, %21 : vector<80x4xf32>
    %c10 = arith.constant 10 : index
    %c0_33 = arith.constant 0 : index
    %23 = vector.load %arg10[%c10, %c0_33] : memref<218x4xf32, #tpu.memory_space<vmem>>, vector<80x4xf32>
    tpu.vector_store %arg10[%c10, %c0_33], %22 {strides = array<i32>} : memref<218x4xf32, #tpu.memory_space<vmem>>, vector<80x4xf32>,
    %c1_34 = arith.constant 1 : index
    %c0_35 = arith.constant 0 : index
    %c0_36 = arith.constant 0 : index
    %c0_37 = arith.constant 0 : index
    %c0_38 = arith.constant 0 : index
    %24 = vector.load %arg1[%c1_34, %c0_35, %c0_36, %c0_37, %c0_38] : memref<2x2x2x80x4xf32, #tpu.memory_space<vmem>>, vector<1x1x1x80x4xf32>
    %25 = vector.shape_cast %24 : vector<1x1x1x80x4xf32> to vector<80x4xf32>
    %c1_39 = arith.constant 1 : index
    %c0_40 = arith.constant 0 : index
    %c1_41 = arith.constant 1 : index
    %c0_42 = arith.constant 0 : index
    %c0_43 = arith.constant 0 : index
    %26 = vector.load %arg1[%c1_39, %c0_40, %c1_41, %c0_42, %c0_43] : memref<2x2x2x80x4xf32, #tpu.memory_space<vmem>>, vector<1x1x1x80x4xf32>
    %27 = vector.shape_cast %26 : vector<1x1x1x80x4xf32> to vector<80x4xf32>
    %28 = arith.maximumf %25, %27 : vector<80x4xf32>
    %c1_44 = arith.constant 1 : index
    %c1_45 = arith.constant 1 : index
    %c0_46 = arith.constant 0 : index
    %c0_47 = arith.constant 0 : index
    %c0_48 = arith.constant 0 : index
    %29 = vector.load %arg1[%c1_44, %c1_45, %c0_46, %c0_47, %c0_48] : memref<2x2x2x80x4xf32, #tpu.memory_space<vmem>>, vector<1x1x1x80x4xf32>
    %30 = vector.shape_cast %29 : vector<1x1x1x80x4xf32> to vector<80x4xf32>
    %c1_49 = arith.constant 1 : index
    %c1_50 = arith.constant 1 : index
    %c1_51 = arith.constant 1 : index
    %c0_52 = arith.constant 0 : index
    %c0_53 = arith.constant 0 : index
    %31 = vector.load %arg1[%c1_49, %c1_50, %c1_51, %c0_52, %c0_53] : memref<2x2x2x80x4xf32, #tpu.memory_space<vmem>>, vector<1x1x1x80x4xf32>
    %32 = vector.shape_cast %31 : vector<1x1x1x80x4xf32> to vector<80x4xf32>
    %33 = arith.maximumf %30, %32 : vector<80x4xf32>
    %34 = arith.maximumf %28, %33 : vector<80x4xf32>
    %c114 = arith.constant 114 : index
    %c0_54 = arith.constant 0 : index
    %35 = vector.load %arg10[%c114, %c0_54] : memref<218x4xf32, #tpu.memory_space<vmem>>, vector<80x4xf32>
    tpu.vector_store %arg10[%c114, %c0_54], %34 {strides = array<i32>} : memref<218x4xf32, #tpu.memory_space<vmem>>, vector<80x4xf32>,
    %cst_55 = arith.constant 0.000000e+00 : f32
    %36 = vector.broadcast %cst_55 : f32 to vector<184x8xf32>
    %c0_56 = arith.constant 0 : index
    %c0_57 = arith.constant 0 : index
    %37 = vector.load %arg10[%c0_56, %c0_57] : memref<218x4xf32, #tpu.memory_space<vmem>>, vector<184x4xf32>
    %c0_58 = arith.constant 0 : index
    %c0_59 = arith.constant 0 : index
    %c0_60 = arith.constant 0 : index
    %38 = vector.load %arg3[%c0_58, %c0_59, %c0_60] : memref<9x4x8xf32, #tpu.memory_space<vmem>>, vector<1x4x8xf32>
    %39 = vector.shape_cast %38 : vector<1x4x8xf32> to vector<4x8xf32>
    %cst_61 = arith.constant dense<0.000000e+00> : vector<184x8xf32>
    %40 = tpu.matmul %37, %39, %cst_61 {dimension_numbers = #tpu.dot_dimension_numbers<[1], [0], [0], [1], [0, 0, 1, 1], [], []>} : vector<184x4xf32>, vector<4x8xf32>, vector<184x8xf32> -> vector<184x8xf32>
    %41 = arith.addf %36, %40 : vector<184x8xf32>
    %c1_62 = arith.constant 1 : index
    %c0_63 = arith.constant 0 : index
    %42 = vector.load %arg10[%c1_62, %c0_63] : memref<218x4xf32, #tpu.memory_space<vmem>>, vector<184x4xf32>
    %c1_64 = arith.constant 1 : index
    %c0_65 = arith.constant 0 : index
    %c0_66 = arith.constant 0 : index
    %43 = vector.load %arg3[%c1_64, %c0_65, %c0_66] : memref<9x4x8xf32, #tpu.memory_space<vmem>>, vector<1x4x8xf32>
    %44 = vector.shape_cast %43 : vector<1x4x8xf32> to vector<4x8xf32>
    %cst_67 = arith.constant dense<0.000000e+00> : vector<184x8xf32>
    %45 = tpu.matmul %42, %44, %cst_67 {dimension_numbers = #tpu.dot_dimension_numbers<[1], [0], [0], [1], [0, 0, 1, 1], [], []>} : vector<184x4xf32>, vector<4x8xf32>, vector<184x8xf32> -> vector<184x8xf32>
    %46 = arith.addf %41, %45 : vector<184x8xf32>
    %c2 = arith.constant 2 : index
    %c0_68 = arith.constant 0 : index
    %47 = vector.load %arg10[%c2, %c0_68] : memref<218x4xf32, #tpu.memory_space<vmem>>, vector<184x4xf32>
    %c2_69 = arith.constant 2 : index
    %c0_70 = arith.constant 0 : index
    %c0_71 = arith.constant 0 : index
    %48 = vector.load %arg3[%c2_69, %c0_70, %c0_71] : memref<9x4x8xf32, #tpu.memory_space<vmem>>, vector<1x4x8xf32>
    %49 = vector.shape_cast %48 : vector<1x4x8xf32> to vector<4x8xf32>
    %cst_72 = arith.constant dense<0.000000e+00> : vector<184x8xf32>
    %50 = tpu.matmul %47, %49, %cst_72 {dimension_numbers = #tpu.dot_dimension_numbers<[1], [0], [0], [1], [0, 0, 1, 1], [], []>} : vector<184x4xf32>, vector<4x8xf32>, vector<184x8xf32> -> vector<184x8xf32>
    %51 = arith.addf %46, %50 : vector<184x8xf32>
    %c10_73 = arith.constant 10 : index
    %c0_74 = arith.constant 0 : index
    %52 = vector.load %arg10[%c10_73, %c0_74] : memref<218x4xf32, #tpu.memory_space<vmem>>, vector<184x4xf32>
    %c3 = arith.constant 3 : index
    %c0_75 = arith.constant 0 : index
    %c0_76 = arith.constant 0 : index
    %53 = vector.load %arg3[%c3, %c0_75, %c0_76] : memref<9x4x8xf32, #tpu.memory_space<vmem>>, vector<1x4x8xf32>
    %54 = vector.shape_cast %53 : vector<1x4x8xf32> to vector<4x8xf32>
    %cst_77 = arith.constant dense<0.000000e+00> : vector<184x8xf32>
    %55 = tpu.matmul %52, %54, %cst_77 {dimension_numbers = #tpu.dot_dimension_numbers<[1], [0], [0], [1], [0, 0, 1, 1], [], []>} : vector<184x4xf32>, vector<4x8xf32>, vector<184x8xf32> -> vector<184x8xf32>
    %56 = arith.addf %51, %55 : vector<184x8xf32>
    %c11 = arith.constant 11 : index
    %c0_78 = arith.constant 0 : index
    %57 = vector.load %arg10[%c11, %c0_78] : memref<218x4xf32, #tpu.memory_space<vmem>>, vector<184x4xf32>
    %c4 = arith.constant 4 : index
    %c0_79 = arith.constant 0 : index
    %c0_80 = arith.constant 0 : index
    %58 = vector.load %arg3[%c4, %c0_79, %c0_80] : memref<9x4x8xf32, #tpu.memory_space<vmem>>, vector<1x4x8xf32>
    %59 = vector.shape_cast %58 : vector<1x4x8xf32> to vector<4x8xf32>
    %cst_81 = arith.constant dense<0.000000e+00> : vector<184x8xf32>
    %60 = tpu.matmul %57, %59, %cst_81 {dimension_numbers = #tpu.dot_dimension_numbers<[1], [0], [0], [1], [0, 0, 1, 1], [], []>} : vector<184x4xf32>, vector<4x8xf32>, vector<184x8xf32> -> vector<184x8xf32>
    %61 = arith.addf %56, %60 : vector<184x8xf32>
    %c12 = arith.constant 12 : index
    %c0_82 = arith.constant 0 : index
    %62 = vector.load %arg10[%c12, %c0_82] : memref<218x4xf32, #tpu.memory_space<vmem>>, vector<184x4xf32>
    %c5 = arith.constant 5 : index
    %c0_83 = arith.constant 0 : index
    %c0_84 = arith.constant 0 : index
    %63 = vector.load %arg3[%c5, %c0_83, %c0_84] : memref<9x4x8xf32, #tpu.memory_space<vmem>>, vector<1x4x8xf32>
    %64 = vector.shape_cast %63 : vector<1x4x8xf32> to vector<4x8xf32>
    %cst_85 = arith.constant dense<0.000000e+00> : vector<184x8xf32>
    %65 = tpu.matmul %62, %64, %cst_85 {dimension_numbers = #tpu.dot_dimension_numbers<[1], [0], [0], [1], [0, 0, 1, 1], [], []>} : vector<184x4xf32>, vector<4x8xf32>, vector<184x8xf32> -> vector<184x8xf32>
    %66 = arith.addf %61, %65 : vector<184x8xf32>
    %c20 = arith.constant 20 : index
    %c0_86 = arith.constant 0 : index
    %67 = vector.load %arg10[%c20, %c0_86] : memref<218x4xf32, #tpu.memory_space<vmem>>, vector<184x4xf32>
    %c6 = arith.constant 6 : index
    %c0_87 = arith.constant 0 : index
    %c0_88 = arith.constant 0 : index
    %68 = vector.load %arg3[%c6, %c0_87, %c0_88] : memref<9x4x8xf32, #tpu.memory_space<vmem>>, vector<1x4x8xf32>
    %69 = vector.shape_cast %68 : vector<1x4x8xf32> to vector<4x8xf32>
    %cst_89 = arith.constant dense<0.000000e+00> : vector<184x8xf32>
    %70 = tpu.matmul %67, %69, %cst_89 {dimension_numbers = #tpu.dot_dimension_numbers<[1], [0], [0], [1], [0, 0, 1, 1], [], []>} : vector<184x4xf32>, vector<4x8xf32>, vector<184x8xf32> -> vector<184x8xf32>
    %71 = arith.addf %66, %70 : vector<184x8xf32>
    %c21 = arith.constant 21 : index
    %c0_90 = arith.constant 0 : index
    %72 = vector.load %arg10[%c21, %c0_90] : memref<218x4xf32, #tpu.memory_space<vmem>>, vector<184x4xf32>
    %c7 = arith.constant 7 : index
    %c0_91 = arith.constant 0 : index
    %c0_92 = arith.constant 0 : index
    %73 = vector.load %arg3[%c7, %c0_91, %c0_92] : memref<9x4x8xf32, #tpu.memory_space<vmem>>, vector<1x4x8xf32>
    %74 = vector.shape_cast %73 : vector<1x4x8xf32> to vector<4x8xf32>
    %cst_93 = arith.constant dense<0.000000e+00> : vector<184x8xf32>
    %75 = tpu.matmul %72, %74, %cst_93 {dimension_numbers = #tpu.dot_dimension_numbers<[1], [0], [0], [1], [0, 0, 1, 1], [], []>} : vector<184x4xf32>, vector<4x8xf32>, vector<184x8xf32> -> vector<184x8xf32>
    %76 = arith.addf %71, %75 : vector<184x8xf32>
    %c22 = arith.constant 22 : index
    %c0_94 = arith.constant 0 : index
    %77 = vector.load %arg10[%c22, %c0_94] : memref<218x4xf32, #tpu.memory_space<vmem>>, vector<184x4xf32>
    %c8 = arith.constant 8 : index
    %c0_95 = arith.constant 0 : index
    %c0_96 = arith.constant 0 : index
    %78 = vector.load %arg3[%c8, %c0_95, %c0_96] : memref<9x4x8xf32, #tpu.memory_space<vmem>>, vector<1x4x8xf32>
    %79 = vector.shape_cast %78 : vector<1x4x8xf32> to vector<4x8xf32>
    %cst_97 = arith.constant dense<0.000000e+00> : vector<184x8xf32>
    %80 = tpu.matmul %77, %79, %cst_97 {dimension_numbers = #tpu.dot_dimension_numbers<[1], [0], [0], [1], [0, 0, 1, 1], [], []>} : vector<184x4xf32>, vector<4x8xf32>, vector<184x8xf32> -> vector<184x8xf32>
    %81 = arith.addf %76, %80 : vector<184x8xf32>
    %c0_98 = arith.constant 0 : index
    %c0_99 = arith.constant 0 : index
    %82 = vector.load %arg4[%c0_98, %c0_99] : memref<1x8xf32, #tpu.memory_space<vmem>>, vector<1x8xf32>
    %83 = vector.broadcast %82 : vector<1x8xf32> to vector<184x8xf32>
    %84 = arith.mulf %81, %83 : vector<184x8xf32>
    %c0_100 = arith.constant 0 : index
    %c0_101 = arith.constant 0 : index
    %85 = vector.load %arg5[%c0_100, %c0_101] : memref<1x8xf32, #tpu.memory_space<vmem>>, vector<1x8xf32>
    %86 = vector.broadcast %85 : vector<1x8xf32> to vector<184x8xf32>
    %87 = arith.addf %84, %86 : vector<184x8xf32>
    %cst_102 = arith.constant 0.000000e+00 : f32
    %88 = vector.broadcast %cst_102 : f32 to vector<184x8xf32>
    %89 = arith.maximumf %87, %88 : vector<184x8xf32>
    %c0_103 = arith.constant 0 : index
    %c0_104 = arith.constant 0 : index
    %90 = vector.load %arg2[%c0_103, %c0_104] : memref<184x1xf32, #tpu.memory_space<vmem>>, vector<184x1xf32>
    %91 = vector.broadcast %90 : vector<184x1xf32> to vector<184x8xf32>
    %92 = arith.mulf %89, %91 : vector<184x8xf32>
    %c11_105 = arith.constant 11 : index
    %c0_106 = arith.constant 0 : index
    %93 = vector.load %arg11[%c11_105, %c0_106] : memref<218x8xf32, #tpu.memory_space<vmem>>, vector<184x8xf32>
    tpu.vector_store %arg11[%c11_105, %c0_106], %92 {strides = array<i32>} : memref<218x8xf32, #tpu.memory_space<vmem>>, vector<184x8xf32>,
    %cst_107 = arith.constant 0.000000e+00 : f32
    %94 = vector.broadcast %cst_107 : f32 to vector<184x8xf32>
    %c0_108 = arith.constant 0 : index
    %c0_109 = arith.constant 0 : index
    %95 = vector.load %arg11[%c0_108, %c0_109] : memref<218x8xf32, #tpu.memory_space<vmem>>, vector<184x8xf32>
    %c0_110 = arith.constant 0 : index
    %c0_111 = arith.constant 0 : index
    %c0_112 = arith.constant 0 : index
    %96 = vector.load %arg6[%c0_110, %c0_111, %c0_112] : memref<9x8x8xf32, #tpu.memory_space<vmem>>, vector<1x8x8xf32>
    %97 = vector.shape_cast %96 : vector<1x8x8xf32> to vector<8x8xf32>
    %cst_113 = arith.constant dense<0.000000e+00> : vector<184x8xf32>
    %98 = tpu.matmul %95, %97, %cst_113 {dimension_numbers = #tpu.dot_dimension_numbers<[1], [0], [0], [1], [0, 0, 1, 1], [], []>} : vector<184x8xf32>, vector<8x8xf32>, vector<184x8xf32> -> vector<184x8xf32>
    %99 = arith.addf %94, %98 : vector<184x8xf32>
    %c1_114 = arith.constant 1 : index
    %c0_115 = arith.constant 0 : index
    %100 = vector.load %arg11[%c1_114, %c0_115] : memref<218x8xf32, #tpu.memory_space<vmem>>, vector<184x8xf32>
    %c1_116 = arith.constant 1 : index
    %c0_117 = arith.constant 0 : index
    %c0_118 = arith.constant 0 : index
    %101 = vector.load %arg6[%c1_116, %c0_117, %c0_118] : memref<9x8x8xf32, #tpu.memory_space<vmem>>, vector<1x8x8xf32>
    %102 = vector.shape_cast %101 : vector<1x8x8xf32> to vector<8x8xf32>
    %cst_119 = arith.constant dense<0.000000e+00> : vector<184x8xf32>
    %103 = tpu.matmul %100, %102, %cst_119 {dimension_numbers = #tpu.dot_dimension_numbers<[1], [0], [0], [1], [0, 0, 1, 1], [], []>} : vector<184x8xf32>, vector<8x8xf32>, vector<184x8xf32> -> vector<184x8xf32>
    %104 = arith.addf %99, %103 : vector<184x8xf32>
    %c2_120 = arith.constant 2 : index
    %c0_121 = arith.constant 0 : index
    %105 = vector.load %arg11[%c2_120, %c0_121] : memref<218x8xf32, #tpu.memory_space<vmem>>, vector<184x8xf32>
    %c2_122 = arith.constant 2 : index
    %c0_123 = arith.constant 0 : index
    %c0_124 = arith.constant 0 : index
    %106 = vector.load %arg6[%c2_122, %c0_123, %c0_124] : memref<9x8x8xf32, #tpu.memory_space<vmem>>, vector<1x8x8xf32>
    %107 = vector.shape_cast %106 : vector<1x8x8xf32> to vector<8x8xf32>
    %cst_125 = arith.constant dense<0.000000e+00> : vector<184x8xf32>
    %108 = tpu.matmul %105, %107, %cst_125 {dimension_numbers = #tpu.dot_dimension_numbers<[1], [0], [0], [1], [0, 0, 1, 1], [], []>} : vector<184x8xf32>, vector<8x8xf32>, vector<184x8xf32> -> vector<184x8xf32>
    %109 = arith.addf %104, %108 : vector<184x8xf32>
    %c10_126 = arith.constant 10 : index
    %c0_127 = arith.constant 0 : index
    %110 = vector.load %arg11[%c10_126, %c0_127] : memref<218x8xf32, #tpu.memory_space<vmem>>, vector<184x8xf32>
    %c3_128 = arith.constant 3 : index
    %c0_129 = arith.constant 0 : index
    %c0_130 = arith.constant 0 : index
    %111 = vector.load %arg6[%c3_128, %c0_129, %c0_130] : memref<9x8x8xf32, #tpu.memory_space<vmem>>, vector<1x8x8xf32>
    %112 = vector.shape_cast %111 : vector<1x8x8xf32> to vector<8x8xf32>
    %cst_131 = arith.constant dense<0.000000e+00> : vector<184x8xf32>
    %113 = tpu.matmul %110, %112, %cst_131 {dimension_numbers = #tpu.dot_dimension_numbers<[1], [0], [0], [1], [0, 0, 1, 1], [], []>} : vector<184x8xf32>, vector<8x8xf32>, vector<184x8xf32> -> vector<184x8xf32>
    %114 = arith.addf %109, %113 : vector<184x8xf32>
    %c11_132 = arith.constant 11 : index
    %c0_133 = arith.constant 0 : index
    %115 = vector.load %arg11[%c11_132, %c0_133] : memref<218x8xf32, #tpu.memory_space<vmem>>, vector<184x8xf32>
    %c4_134 = arith.constant 4 : index
    %c0_135 = arith.constant 0 : index
    %c0_136 = arith.constant 0 : index
    %116 = vector.load %arg6[%c4_134, %c0_135, %c0_136] : memref<9x8x8xf32, #tpu.memory_space<vmem>>, vector<1x8x8xf32>
    %117 = vector.shape_cast %116 : vector<1x8x8xf32> to vector<8x8xf32>
    %cst_137 = arith.constant dense<0.000000e+00> : vector<184x8xf32>
    %118 = tpu.matmul %115, %117, %cst_137 {dimension_numbers = #tpu.dot_dimension_numbers<[1], [0], [0], [1], [0, 0, 1, 1], [], []>} : vector<184x8xf32>, vector<8x8xf32>, vector<184x8xf32> -> vector<184x8xf32>
    %119 = arith.addf %114, %118 : vector<184x8xf32>
    %c12_138 = arith.constant 12 : index
    %c0_139 = arith.constant 0 : index
    %120 = vector.load %arg11[%c12_138, %c0_139] : memref<218x8xf32, #tpu.memory_space<vmem>>, vector<184x8xf32>
    %c5_140 = arith.constant 5 : index
    %c0_141 = arith.constant 0 : index
    %c0_142 = arith.constant 0 : index
    %121 = vector.load %arg6[%c5_140, %c0_141, %c0_142] : memref<9x8x8xf32, #tpu.memory_space<vmem>>, vector<1x8x8xf32>
    %122 = vector.shape_cast %121 : vector<1x8x8xf32> to vector<8x8xf32>
    %cst_143 = arith.constant dense<0.000000e+00> : vector<184x8xf32>
    %123 = tpu.matmul %120, %122, %cst_143 {dimension_numbers = #tpu.dot_dimension_numbers<[1], [0], [0], [1], [0, 0, 1, 1], [], []>} : vector<184x8xf32>, vector<8x8xf32>, vector<184x8xf32> -> vector<184x8xf32>
    %124 = arith.addf %119, %123 : vector<184x8xf32>
    %c20_144 = arith.constant 20 : index
    %c0_145 = arith.constant 0 : index
    %125 = vector.load %arg11[%c20_144, %c0_145] : memref<218x8xf32, #tpu.memory_space<vmem>>, vector<184x8xf32>
    %c6_146 = arith.constant 6 : index
    %c0_147 = arith.constant 0 : index
    %c0_148 = arith.constant 0 : index
    %126 = vector.load %arg6[%c6_146, %c0_147, %c0_148] : memref<9x8x8xf32, #tpu.memory_space<vmem>>, vector<1x8x8xf32>
    %127 = vector.shape_cast %126 : vector<1x8x8xf32> to vector<8x8xf32>
    %cst_149 = arith.constant dense<0.000000e+00> : vector<184x8xf32>
    %128 = tpu.matmul %125, %127, %cst_149 {dimension_numbers = #tpu.dot_dimension_numbers<[1], [0], [0], [1], [0, 0, 1, 1], [], []>} : vector<184x8xf32>, vector<8x8xf32>, vector<184x8xf32> -> vector<184x8xf32>
    %129 = arith.addf %124, %128 : vector<184x8xf32>
    %c21_150 = arith.constant 21 : index
    %c0_151 = arith.constant 0 : index
    %130 = vector.load %arg11[%c21_150, %c0_151] : memref<218x8xf32, #tpu.memory_space<vmem>>, vector<184x8xf32>
    %c7_152 = arith.constant 7 : index
    %c0_153 = arith.constant 0 : index
    %c0_154 = arith.constant 0 : index
    %131 = vector.load %arg6[%c7_152, %c0_153, %c0_154] : memref<9x8x8xf32, #tpu.memory_space<vmem>>, vector<1x8x8xf32>
    %132 = vector.shape_cast %131 : vector<1x8x8xf32> to vector<8x8xf32>
    %cst_155 = arith.constant dense<0.000000e+00> : vector<184x8xf32>
    %133 = tpu.matmul %130, %132, %cst_155 {dimension_numbers = #tpu.dot_dimension_numbers<[1], [0], [0], [1], [0, 0, 1, 1], [], []>} : vector<184x8xf32>, vector<8x8xf32>, vector<184x8xf32> -> vector<184x8xf32>
    %134 = arith.addf %129, %133 : vector<184x8xf32>
    %c22_156 = arith.constant 22 : index
    %c0_157 = arith.constant 0 : index
    %135 = vector.load %arg11[%c22_156, %c0_157] : memref<218x8xf32, #tpu.memory_space<vmem>>, vector<184x8xf32>
    %c8_158 = arith.constant 8 : index
    %c0_159 = arith.constant 0 : index
    %c0_160 = arith.constant 0 : index
    %136 = vector.load %arg6[%c8_158, %c0_159, %c0_160] : memref<9x8x8xf32, #tpu.memory_space<vmem>>, vector<1x8x8xf32>
    %137 = vector.shape_cast %136 : vector<1x8x8xf32> to vector<8x8xf32>
    %cst_161 = arith.constant dense<0.000000e+00> : vector<184x8xf32>
    %138 = tpu.matmul %135, %137, %cst_161 {dimension_numbers = #tpu.dot_dimension_numbers<[1], [0], [0], [1], [0, 0, 1, 1], [], []>} : vector<184x8xf32>, vector<8x8xf32>, vector<184x8xf32> -> vector<184x8xf32>
    %139 = arith.addf %134, %138 : vector<184x8xf32>
    %c0_162 = arith.constant 0 : index
    %c0_163 = arith.constant 0 : index
    %140 = vector.load %arg7[%c0_162, %c0_163] : memref<1x8xf32, #tpu.memory_space<vmem>>, vector<1x8xf32>
    %141 = vector.broadcast %140 : vector<1x8xf32> to vector<184x8xf32>
    %142 = arith.mulf %139, %141 : vector<184x8xf32>
    %c0_164 = arith.constant 0 : index
    %c0_165 = arith.constant 0 : index
    %143 = vector.load %arg8[%c0_164, %c0_165] : memref<1x8xf32, #tpu.memory_space<vmem>>, vector<1x8xf32>
    %144 = vector.broadcast %143 : vector<1x8xf32> to vector<184x8xf32>
    %145 = arith.addf %142, %144 : vector<184x8xf32>
    %cst_166 = arith.constant 0.000000e+00 : f32
    %146 = vector.broadcast %cst_166 : f32 to vector<184x8xf32>
    %147 = arith.maximumf %145, %146 : vector<184x8xf32>
    %148 = vector.extract_strided_slice %147 {offsets = [0, 0], sizes = [80, 8], strides = [1, 1]} : vector<184x8xf32> to vector<80x8xf32>
    %c0_167 = arith.constant 0 : index
    %c0_168 = arith.constant 0 : index
    %c0_169 = arith.constant 0 : index
    %149 = vector.load %arg9[%c0_167, %c0_168, %c0_169] : memref<2x80x8xf32, #tpu.memory_space<vmem>>, vector<1x80x8xf32>
    %150 = vector.shape_cast %149 : vector<1x80x8xf32> to vector<80x8xf32>
    %151 = vector.shape_cast %148 : vector<80x8xf32> to vector<1x80x8xf32>
    tpu.vector_store %arg9[%c0_167, %c0_168, %c0_169], %151 {strides = array<i32>} : memref<2x80x8xf32, #tpu.memory_space<vmem>>, vector<1x80x8xf32>,
    %152 = vector.extract_strided_slice %147 {offsets = [104, 0], sizes = [80, 8], strides = [1, 1]} : vector<184x8xf32> to vector<80x8xf32>
    %c1_170 = arith.constant 1 : index
    %c0_171 = arith.constant 0 : index
    %c0_172 = arith.constant 0 : index
    %153 = vector.load %arg9[%c1_170, %c0_171, %c0_172] : memref<2x80x8xf32, #tpu.memory_space<vmem>>, vector<1x80x8xf32>
    %154 = vector.shape_cast %153 : vector<1x80x8xf32> to vector<80x8xf32>
    %155 = vector.shape_cast %152 : vector<80x8xf32> to vector<1x80x8xf32>
    tpu.vector_store %arg9[%c1_170, %c0_171, %c0_172], %155 {strides = array<i32>} : memref<2x80x8xf32, #tpu.memory_space<vmem>>, vector<1x80x8xf32>,
    return
  }
  func.func @transform_0(%arg0: i32) -> (i32, i32, i32, i32, i32) {
    %c0_i32 = arith.constant 0 : i32
    %c0_i32_0 = arith.constant 0 : i32
    %c0_i32_1 = arith.constant 0 : i32
    %c0_i32_2 = arith.constant 0 : i32
    %c0_i32_3 = arith.constant 0 : i32
    return %arg0, %c0_i32, %c0_i32_0, %c0_i32_1, %c0_i32_2 : i32, i32, i32, i32, i32
  }
  func.func @transform_1(%arg0: i32) -> (i32, i32) {
    %c0_i32 = arith.constant 0 : i32
    %c0_i32_0 = arith.constant 0 : i32
    %c0_i32_1 = arith.constant 0 : i32
    return %c0_i32, %c0_i32_0 : i32, i32
  }
  func.func @transform_2(%arg0: i32) -> (i32, i32, i32) {
    %c0_i32 = arith.constant 0 : i32
    %c0_i32_0 = arith.constant 0 : i32
    %c0_i32_1 = arith.constant 0 : i32
    %c0_i32_2 = arith.constant 0 : i32
    return %c0_i32, %c0_i32_0, %c0_i32_1 : i32, i32, i32
  }
  func.func @transform_3(%arg0: i32) -> (i32, i32) {
    %c0_i32 = arith.constant 0 : i32
    %c0_i32_0 = arith.constant 0 : i32
    %c0_i32_1 = arith.constant 0 : i32
    return %c0_i32, %c0_i32_0 : i32, i32
  }
  func.func @transform_4(%arg0: i32) -> (i32, i32) {
    %c0_i32 = arith.constant 0 : i32
    %c0_i32_0 = arith.constant 0 : i32
    %c0_i32_1 = arith.constant 0 : i32
    return %c0_i32, %c0_i32_0 : i32, i32
  }
  func.func @transform_5(%arg0: i32) -> (i32, i32, i32) {
    %c0_i32 = arith.constant 0 : i32
    %c0_i32_0 = arith.constant 0 : i32
    %c0_i32_1 = arith.constant 0 : i32
    %c0_i32_2 = arith.constant 0 : i32
    return %c0_i32, %c0_i32_0, %c0_i32_1 : i32, i32, i32
  }
  func.func @transform_6(%arg0: i32) -> (i32, i32) {
    %c0_i32 = arith.constant 0 : i32
    %c0_i32_0 = arith.constant 0 : i32
    %c0_i32_1 = arith.constant 0 : i32
    return %c0_i32, %c0_i32_0 : i32, i32
  }
  func.func @transform_7(%arg0: i32) -> (i32, i32) {
    %c0_i32 = arith.constant 0 : i32
    %c0_i32_0 = arith.constant 0 : i32
    %c0_i32_1 = arith.constant 0 : i32
    return %c0_i32, %c0_i32_0 : i32, i32
  }
  func.func @transform_8(%arg0: i32) -> (i32, i32, i32) {
    %c0_i32 = arith.constant 0 : i32
    %c0_i32_0 = arith.constant 0 : i32
    %c0_i32_1 = arith.constant 0 : i32
    return %arg0, %c0_i32, %c0_i32_0 : i32, i32, i32
  }
}

</mosaic_0001>

<llo_original>
// kernel: tpu_custom_call.1
$region0: #{tpu_custom_call.1}
  #allocation0 [shape = 'u32[]', space=smem, size = 0x4, offset = 0x4, fixed_abs, tag = 'smem constant byte address 0x4 - core index']
  #allocation1 [shape = 'u32[144,128]{1,0:T(1,128)}', space=vmem, size = 0x12000, scoped, tag = 'internal scratch']
  #allocation2 [shape = 'f32[218,4]{1,0:T(8,128)}', space=vmem, size = 0x1c000, scoped, tag = 'scratch operand']
  #allocation3 [shape = 'f32[218,8]{1,0:T(8,128)}', space=vmem, size = 0x1c000, scoped, tag = 'scratch operand']
  %s0 = inlined_call_operand.vmem [shape: f32[2,2,2,80,4], index: 0, kind: input, shape index: {}]
  %s1 = inlined_call_operand.vmem [shape: f32[184,1], index: 1, kind: input, shape index: {}]
  %s2 = inlined_call_operand.vmem [shape: f32[9,4,8], index: 2, kind: input, shape index: {}]
  %s3 = inlined_call_operand.vmem [shape: f32[1,8], index: 3, kind: input, shape index: {}]
  %s4 = inlined_call_operand.vmem [shape: f32[1,8], index: 4, kind: input, shape index: {}]
  %s5 = inlined_call_operand.vmem [shape: f32[9,8,8], index: 5, kind: input, shape index: {}]
  %s6 = inlined_call_operand.vmem [shape: f32[1,8], index: 6, kind: input, shape index: {}]
  %s7 = inlined_call_operand.vmem [shape: f32[1,8], index: 7, kind: input, shape index: {}]
  %s8 = inlined_call_operand.vmem [shape: f32[2,80,8], index: 8, kind: output, shape index: {}]
  %s9 = sld [smem:[#allocation0]]
  $region42: #{tpu_custom_call.1} parent=0
    _
  %s11 = ssub.s32 1, %s9
  %s12 = scalar_select 0, %s11, %s9
  // Predicated region
  $region2: #{tpu_custom_call.1} parent=0 // pred_check
    _
  $region3: #{tpu_custom_call.1} parent=0 // pred_check_branch
    %14 = sbr.rel (0) target = $region5
  $region4: #{tpu_custom_call.1} parent=0 // pred_region
    _
  $region5: #{tpu_custom_call.1} parent=0 // pred_fallthru
    _
  // Predicated region
  $region6: #{tpu_custom_call.1} parent=0 // pred_check
    _
  $region7: #{tpu_custom_call.1} parent=0 // pred_check_branch
    %16 = sbr.rel (0) target = $region9
  $region8: #{tpu_custom_call.1} parent=0 // pred_region
    _
  $region9: #{tpu_custom_call.1} parent=0 // pred_fallthru
    _
  // Predicated region
  $region10: #{tpu_custom_call.1} parent=0 // pred_check
    _
  $region11: #{tpu_custom_call.1} parent=0 // pred_check_branch
    %18 = sbr.rel (0) target = $region13
  $region12: #{tpu_custom_call.1} parent=0 // pred_region
    _
  $region13: #{tpu_custom_call.1} parent=0 // pred_fallthru
    _
  // Predicated region
  $region14: #{tpu_custom_call.1} parent=0 // pred_check
    _
  $region15: #{tpu_custom_call.1} parent=0 // pred_check_branch
    %20 = sbr.rel (0) target = $region17
  $region16: #{tpu_custom_call.1} parent=0 // pred_region
    _
  $region17: #{tpu_custom_call.1} parent=0 // pred_fallthru
    _
  // Predicated region
  $region18: #{tpu_custom_call.1} parent=0 // pred_check
    _
  $region19: #{tpu_custom_call.1} parent=0 // pred_check_branch
    %22 = sbr.rel (0) target = $region21
  $region20: #{tpu_custom_call.1} parent=0 // pred_region
    _
  $region21: #{tpu_custom_call.1} parent=0 // pred_fallthru
    _
  // Predicated region
  $region22: #{tpu_custom_call.1} parent=0 // pred_check
    _
  $region23: #{tpu_custom_call.1} parent=0 // pred_check_branch
    %24 = sbr.rel (0) target = $region25
  $region24: #{tpu_custom_call.1} parent=0 // pred_region
    _
  $region25: #{tpu_custom_call.1} parent=0 // pred_fallthru
    _
  // Predicated region
  $region26: #{tpu_custom_call.1} parent=0 // pred_check
    _
  $region27: #{tpu_custom_call.1} parent=0 // pred_check_branch
    %26 = sbr.rel (0) target = $region29
  $region28: #{tpu_custom_call.1} parent=0 // pred_region
    _
  $region29: #{tpu_custom_call.1} parent=0 // pred_fallthru
    _
  // Predicated region
  $region30: #{tpu_custom_call.1} parent=0 // pred_check
    _
  $region31: #{tpu_custom_call.1} parent=0 // pred_check_branch
    %28 = sbr.rel (0) target = $region33
  $region32: #{tpu_custom_call.1} parent=0 // pred_region
    _
  $region33: #{tpu_custom_call.1} parent=0 // pred_fallthru
    _
  %vm29 = vcmask 31744
  %30 = vst.msk [vmem:[#allocation2] sm:$0xff] %vm29, 0.0
  %vm31 = vcmask 26624
  %32 = vst.msk [vmem:[#allocation2 + $0x8] sm:$0x7] %vm31, 0.0
  %33 = vst.msk [vmem:[#allocation2 + $0x5a] sm:$0xff] %vm29, 0.0
  %34 = vst.msk [vmem:[#allocation2 + $0x62] sm:$0xff] %vm29, 0.0
  %35 = vst.msk [vmem:[#allocation2 + $0x6a] sm:$0xff] %vm29, 0.0
  %36 = vst.msk [vmem:[#allocation2 + $0xc2] sm:$0xff] %vm29, 0.0
  %37 = vst.msk [vmem:[#allocation2 + $0xca] sm:$0xff] %vm29, 0.0
  %38 = vst.msk [vmem:[#allocation2 + $0xd2] sm:$0xff] %vm29, 0.0
  %vm39 = vcmask 64512
  %40 = vst.msk [vmem:[#allocation3] sm:$0xff] %vm39, 0.0
  %vm41 = vcmask 59392
  %42 = vst.msk [vmem:[#allocation3 + $0x8] sm:$0x7] %vm41, 0.0
  %43 = vst.msk [vmem:[#allocation3 + $0x5a] sm:$0xff] %vm39, 0.0
  %44 = vst.msk [vmem:[#allocation3 + $0x62] sm:$0xff] %vm39, 0.0
  %45 = vst.msk [vmem:[#allocation3 + $0x6a] sm:$0xff] %vm39, 0.0
  %46 = vst.msk [vmem:[#allocation3 + $0xc2] sm:$0xff] %vm39, 0.0
  %47 = vst.msk [vmem:[#allocation3 + $0xca] sm:$0xff] %vm39, 0.0
  %48 = vst.msk [vmem:[#allocation3 + $0xd2] sm:$0xff] %vm39, 0.0
  %v49 = vld [vmem:[%s0] sm:$0xff]
  %v50 = vld [vmem:[%s0 + $0x8] sm:$0xff]
  %v51 = vld [vmem:[%s0 + $0x10] sm:$0xff]
  %v52 = vld [vmem:[%s0 + $0x18] sm:$0xff]
  %v53 = vld [vmem:[%s0 + $0x20] sm:$0xff]
  %v54 = vld [vmem:[%s0 + $0x28] sm:$0xff]
  %v55 = vld [vmem:[%s0 + $0x30] sm:$0xff]
  %v56 = vld [vmem:[%s0 + $0x38] sm:$0xff]
  %v57 = vld [vmem:[%s0 + $0x40] sm:$0xff]
  %v58 = vld [vmem:[%s0 + $0x48] sm:$0xff]
  %s59 = scalar_lea.vmem %s0, 80
  %v60 = vld [vmem:[%s59] sm:$0xff]
  %v61 = vld [vmem:[%s59 + $0x8] sm:$0xff]
  %v62 = vld [vmem:[%s59 + $0x10] sm:$0xff]
  %v63 = vld [vmem:[%s59 + $0x18] sm:$0xff]
  %v64 = vld [vmem:[%s59 + $0x20] sm:$0xff]
  %v65 = vld [vmem:[%s59 + $0x28] sm:$0xff]
  %v66 = vld [vmem:[%s59 + $0x30] sm:$0xff]
  %v67 = vld [vmem:[%s59 + $0x38] sm:$0xff]
  %v68 = vld [vmem:[%s59 + $0x40] sm:$0xff]
  %v69 = vld [vmem:[%s59 + $0x48] sm:$0xff]
  %v70 = vmax.f32 %v49, %v60
  %v71 = vmax.f32 %v50, %v61
  %v72 = vmax.f32 %v51, %v62
  %v73 = vmax.f32 %v52, %v63
  %v74 = vmax.f32 %v53, %v64
  %v75 = vmax.f32 %v54, %v65
  %v76 = vmax.f32 %v55, %v66
  %v77 = vmax.f32 %v56, %v67
  %v78 = vmax.f32 %v57, %v68
  %v79 = vmax.f32 %v58, %v69
  %s80 = scalar_lea.vmem %s0, 160
  %v81 = vld [vmem:[%s80] sm:$0xff]
  %v82 = vld [vmem:[%s80 + $0x8] sm:$0xff]
  %v83 = vld [vmem:[%s80 + $0x10] sm:$0xff]
  %v84 = vld [vmem:[%s80 + $0x18] sm:$0xff]
  %v85 = vld [vmem:[%s80 + $0x20] sm:$0xff]
  %v86 = vld [vmem:[%s80 + $0x28] sm:$0xff]
  %v87 = vld [vmem:[%s80 + $0x30] sm:$0xff]
  %v88 = vld [vmem:[%s80 + $0x38] sm:$0xff]
  %v89 = vld [vmem:[%s80 + $0x40] sm:$0xff]
  %v90 = vld [vmem:[%s80 + $0x48] sm:$0xff]
  %s91 = scalar_lea.vmem %s0, 240
  %v92 = vld [vmem:[%s91] sm:$0xff]
  %v93 = vld [vmem:[%s91 + $0x8] sm:$0xff]
  %v94 = vld [vmem:[%s91 + $0x10] sm:$0xff]
  %v95 = vld [vmem:[%s91 + $0x18] sm:$0xff]
  %v96 = vld [vmem:[%s91 + $0x20] sm:$0xff]
  %v97 = vld [vmem:[%s91 + $0x28] sm:$0xff]
  %v98 = vld [vmem:[%s91 + $0x30] sm:$0xff]
  %v99 = vld [vmem:[%s91 + $0x38] sm:$0xff]
  %v100 = vld [vmem:[%s91 + $0x40] sm:$0xff]
  %v101 = vld [vmem:[%s91 + $0x48] sm:$0xff]
  %v102 = vmax.f32 %v81, %v92
  %v103 = vmax.f32 %v82, %v93
  %v104 = vmax.f32 %v83, %v94
  %v105 = vmax.f32 %v84, %v95
  %v106 = vmax.f32 %v85, %v96
  %v107 = vmax.f32 %v86, %v97
  %v108 = vmax.f32 %v87, %v98
  %v109 = vmax.f32 %v88, %v99
  %v110 = vmax.f32 %v89, %v100
  %v111 = vmax.f32 %v90, %v101
  %v112 = vmax.f32 %v70, %v102
  %v113 = vmax.f32 %v71, %v103
  %v114 = vmax.f32 %v72, %v104
  %v115 = vmax.f32 %v73, %v105
  %v116 = vmax.f32 %v74, %v106
  %v117 = vmax.f32 %v75, %v107
  %v118 = vmax.f32 %v76, %v108
  %v119 = vmax.f32 %v77, %v109
  %v120 = vmax.f32 %v78, %v110
  %v121 = vmax.f32 %v79, %v111
  %122 = vst.msk [vmem:[#allocation2 + $0xa] sm:$0xff] %vm29, %v112
  %123 = vst.msk [vmem:[#allocation2 + $0x12] sm:$0xff] %vm29, %v113
  %124 = vst.msk [vmem:[#allocation2 + $0x1a] sm:$0xff] %vm29, %v114
  %125 = vst.msk [vmem:[#allocation2 + $0x22] sm:$0xff] %vm29, %v115
  %126 = vst.msk [vmem:[#allocation2 + $0x2a] sm:$0xff] %vm29, %v116
  %127 = vst.msk [vmem:[#allocation2 + $0x32] sm:$0xff] %vm29, %v117
  %128 = vst.msk [vmem:[#allocation2 + $0x3a] sm:$0xff] %vm29, %v118
  %129 = vst.msk [vmem:[#allocation2 + $0x42] sm:$0xff] %vm29, %v119
  %130 = vst.msk [vmem:[#allocation2 + $0x4a] sm:$0xff] %vm29, %v120
  %131 = vst.msk [vmem:[#allocation2 + $0x52] sm:$0xff] %vm29, %v121
  %s132 = scalar_lea.vmem %s0, 320
  %v133 = vld [vmem:[%s132] sm:$0xff]
  %v134 = vld [vmem:[%s132 + $0x8] sm:$0xff]
  %v135 = vld [vmem:[%s132 + $0x10] sm:$0xff]
  %v136 = vld [vmem:[%s132 + $0x18] sm:$0xff]
  %v137 = vld [vmem:[%s132 + $0x20] sm:$0xff]
  %v138 = vld [vmem:[%s132 + $0x28] sm:$0xff]
  %v139 = vld [vmem:[%s132 + $0x30] sm:$0xff]
  %v140 = vld [vmem:[%s132 + $0x38] sm:$0xff]
  %v141 = vld [vmem:[%s132 + $0x40] sm:$0xff]
  %v142 = vld [vmem:[%s132 + $0x48] sm:$0xff]
  %s143 = scalar_lea.vmem %s0, 400
  %v144 = vld [vmem:[%s143] sm:$0xff]
  %v145 = vld [vmem:[%s143 + $0x8] sm:$0xff]
  %v146 = vld [vmem:[%s143 + $0x10] sm:$0xff]
  %v147 = vld [vmem:[%s143 + $0x18] sm:$0xff]
  %v148 = vld [vmem:[%s143 + $0x20] sm:$0xff]
  %v149 = vld [vmem:[%s143 + $0x28] sm:$0xff]
  %v150 = vld [vmem:[%s143 + $0x30] sm:$0xff]
  %v151 = vld [vmem:[%s143 + $0x38] sm:$0xff]
  %v152 = vld [vmem:[%s143 + $0x40] sm:$0xff]
  %v153 = vld [vmem:[%s143 + $0x48] sm:$0xff]
  %v154 = vmax.f32 %v133, %v144
  %v155 = vmax.f32 %v134, %v145
  %v156 = vmax.f32 %v135, %v146
  %v157 = vmax.f32 %v136, %v147
  %v158 = vmax.f32 %v137, %v148
  %v159 = vmax.f32 %v138, %v149
  %v160 = vmax.f32 %v139, %v150
  %v161 = vmax.f32 %v140, %v151
  %v162 = vmax.f32 %v141, %v152
  %v163 = vmax.f32 %v142, %v153
  %s164 = scalar_lea.vmem %s0, 480
  %v165 = vld [vmem:[%s164] sm:$0xff]
  %v166 = vld [vmem:[%s164 + $0x8] sm:$0xff]
  %v167 = vld [vmem:[%s164 + $0x10] sm:$0xff]
  %v168 = vld [vmem:[%s164 + $0x18] sm:$0xff]
  %v169 = vld [vmem:[%s164 + $0x20] sm:$0xff]
  %v170 = vld [vmem:[%s164 + $0x28] sm:$0xff]
  %v171 = vld [vmem:[%s164 + $0x30] sm:$0xff]
  %v172 = vld [vmem:[%s164 + $0x38] sm:$0xff]
  %v173 = vld [vmem:[%s164 + $0x40] sm:$0xff]
  %v174 = vld [vmem:[%s164 + $0x48] sm:$0xff]
  %s175 = scalar_lea.vmem %s0, 560
  %v176 = vld [vmem:[%s175] sm:$0xff]
  %v177 = vld [vmem:[%s175 + $0x8] sm:$0xff]
  %v178 = vld [vmem:[%s175 + $0x10] sm:$0xff]
  %v179 = vld [vmem:[%s175 + $0x18] sm:$0xff]
  %v180 = vld [vmem:[%s175 + $0x20] sm:$0xff]
  %v181 = vld [vmem:[%s175 + $0x28] sm:$0xff]
  %v182 = vld [vmem:[%s175 + $0x30] sm:$0xff]
  %v183 = vld [vmem:[%s175 + $0x38] sm:$0xff]
  %v184 = vld [vmem:[%s175 + $0x40] sm:$0xff]
  %v185 = vld [vmem:[%s175 + $0x48] sm:$0xff]
  %v186 = vmax.f32 %v165, %v176
  %v187 = vmax.f32 %v166, %v177
  %v188 = vmax.f32 %v167, %v178
  %v189 = vmax.f32 %v168, %v179
  %v190 = vmax.f32 %v169, %v180
  %v191 = vmax.f32 %v170, %v181
  %v192 = vmax.f32 %v171, %v182
  %v193 = vmax.f32 %v172, %v183
  %v194 = vmax.f32 %v173, %v184
  %v195 = vmax.f32 %v174, %v185
  %v196 = vmax.f32 %v154, %v186
  %v197 = vmax.f32 %v155, %v187
  %v198 = vmax.f32 %v156, %v188
  %v199 = vmax.f32 %v157, %v189
  %v200 = vmax.f32 %v158, %v190
  %v201 = vmax.f32 %v159, %v191
  %v202 = vmax.f32 %v160, %v192
  %v203 = vmax.f32 %v161, %v193
  %v204 = vmax.f32 %v162, %v194
  %v205 = vmax.f32 %v163, %v195
  %206 = vst.msk [vmem:[#allocation2 + $0x72] sm:$0xff] %vm29, %v196
  %207 = vst.msk [vmem:[#allocation2 + $0x7a] sm:$0xff] %vm29, %v197
  %208 = vst.msk [vmem:[#allocation2 + $0x82] sm:$0xff] %vm29, %v198
  %209 = vst.msk [vmem:[#allocation2 + $0x8a] sm:$0xff] %vm29, %v199
  %210 = vst.msk [vmem:[#allocation2 + $0x92] sm:$0xff] %vm29, %v200
  %211 = vst.msk [vmem:[#allocation2 + $0x9a] sm:$0xff] %vm29, %v201
  %212 = vst.msk [vmem:[#allocation2 + $0xa2] sm:$0xff] %vm29, %v202
  %213 = vst.msk [vmem:[#allocation2 + $0xaa] sm:$0xff] %vm29, %v203
  %214 = vst.msk [vmem:[#allocation2 + $0xb2] sm:$0xff] %vm29, %v204
  %215 = vst.msk [vmem:[#allocation2 + $0xba] sm:$0xff] %vm29, %v205
  %v216 = vld [vmem:[#allocation2] sm:$0xff]
  %v217 = vld [vmem:[#allocation2 + $0x8] sm:$0xff]
  %v218 = vld [vmem:[#allocation2 + $0x10] sm:$0xff]
  %v219 = vld [vmem:[#allocation2 + $0x18] sm:$0xff]
  %v220 = vld [vmem:[#allocation2 + $0x20] sm:$0xff]
  %v221 = vld [vmem:[#allocation2 + $0x28] sm:$0xff]
  %v222 = vld [vmem:[#allocation2 + $0x30] sm:$0xff]
  %v223 = vld [vmem:[#allocation2 + $0x38] sm:$0xff]
  %v224 = vld [vmem:[#allocation2 + $0x40] sm:$0xff]
  %v225 = vld [vmem:[#allocation2 + $0x48] sm:$0xff]
  %v226 = vld [vmem:[#allocation2 + $0x50] sm:$0xff]
  %v227 = vld [vmem:[#allocation2 + $0x58] sm:$0xff]
  %v228 = vld [vmem:[#allocation2 + $0x60] sm:$0xff]
  %v229 = vld [vmem:[#allocation2 + $0x68] sm:$0xff]
  %v230 = vld [vmem:[#allocation2 + $0x70] sm:$0xff]
  %v231 = vld [vmem:[#allocation2 + $0x78] sm:$0xff]
  %v232 = vld [vmem:[#allocation2 + $0x80] sm:$0xff]
  %v233 = vld [vmem:[#allocation2 + $0x88] sm:$0xff]
  %v234 = vld [vmem:[#allocation2 + $0x90] sm:$0xff]
  %v235 = vld [vmem:[#allocation2 + $0x98] sm:$0xff]
  %v236 = vld [vmem:[#allocation2 + $0xa0] sm:$0xff]
  %v237 = vld [vmem:[#allocation2 + $0xa8] sm:$0xff]
  %v238 = vld [vmem:[#allocation2 + $0xb0] sm:$0xff]
  %v239 = vld [vmem:[%s2] sm:$0xf]
  %v240 = vld [vmem:[#allocation2 + $0x1] sm:$0xff]
  %v241 = vld [vmem:[#allocation2 + $0x9] sm:$0xff]
  %v242 = vld [vmem:[#allocation2 + $0x11] sm:$0xff]
  %v243 = vld [vmem:[#allocation2 + $0x19] sm:$0xff]
  %v244 = vld [vmem:[#allocation2 + $0x21] sm:$0xff]
  %v245 = vld [vmem:[#allocation2 + $0x29] sm:$0xff]
  %v246 = vld [vmem:[#allocation2 + $0x31] sm:$0xff]
  %v247 = vld [vmem:[#allocation2 + $0x39] sm:$0xff]
  %v248 = vld [vmem:[#allocation2 + $0x41] sm:$0xff]
  %v249 = vld [vmem:[#allocation2 + $0x49] sm:$0xff]
  %v250 = vld [vmem:[#allocation2 + $0x51] sm:$0xff]
  %v251 = vld [vmem:[#allocation2 + $0x59] sm:$0xff]
  %v252 = vld [vmem:[#allocation2 + $0x61] sm:$0xff]
  %v253 = vld [vmem:[#allocation2 + $0x69] sm:$0xff]
  %v254 = vld [vmem:[#allocation2 + $0x71] sm:$0xff]
  %v255 = vld [vmem:[#allocation2 + $0x79] sm:$0xff]
  %v256 = vld [vmem:[#allocation2 + $0x81] sm:$0xff]
  %v257 = vld [vmem:[#allocation2 + $0x89] sm:$0xff]
  %v258 = vld [vmem:[#allocation2 + $0x91] sm:$0xff]
  %v259 = vld [vmem:[#allocation2 + $0x99] sm:$0xff]
  %v260 = vld [vmem:[#allocation2 + $0xa1] sm:$0xff]
  %v261 = vld [vmem:[#allocation2 + $0xa9] sm:$0xff]
  %v262 = vld [vmem:[#allocation2 + $0xb1] sm:$0xff]
  %s263 = scalar_lea.vmem %s2, 4
  %v264 = vld [vmem:[%s263] sm:$0xf]
  %v266 = vsel %vm29, %v240, 0
  %v269 = vsel %vm29, %v241, 0
  %v272 = vsel %vm29, %v242, 0
  %v275 = vsel %vm29, %v243, 0
  %v278 = vsel %vm29, %v244, 0
  %v281 = vsel %vm29, %v245, 0
  %v284 = vsel %vm29, %v246, 0
  %v287 = vsel %vm29, %v247, 0
  %v290 = vsel %vm29, %v248, 0
  %v293 = vsel %vm29, %v249, 0
  %v296 = vsel %vm29, %v250, 0
  %v299 = vsel %vm29, %v251, 0
  %v302 = vsel %vm29, %v252, 0
  %v305 = vsel %vm29, %v253, 0
  %v308 = vsel %vm29, %v254, 0
  %v311 = vsel %vm29, %v255, 0
  %v314 = vsel %vm29, %v256, 0
  %v317 = vsel %vm29, %v257, 0
  %v320 = vsel %vm29, %v258, 0
  %v323 = vsel %vm29, %v259, 0
  %v326 = vsel %vm29, %v260, 0
  %v329 = vsel %vm29, %v261, 0
  %v332 = vsel %vm29, %v262, 0
  %vm334 = vcmask 1043456
  %v336 = vsel %vm334, %v264, 0
  %338 = vmatprep.subr.mxu0 0.0
  %339 = vmatpush1.msra.mxu0 %v336
  %340 = vmatprep.subr.mxu0 0.0
  %341 = vmatpush1.msra.mxu0 0.0
  %342 = vmatprep.subr.mxu0 0.0
  %343 = vmatpush1.msra.mxu0 0.0
  %344 = vmatprep.subr.mxu0 0.0
  %345 = vmatpush1.msra.mxu0 0.0
  %346 = vmatprep.subr.mxu0 0.0
  %347 = vmatpush1.msra.mxu0 0.0
  %348 = vmatprep.subr.mxu0 0.0
  %349 = vmatpush1.msra.mxu0 0.0
  %350 = vmatprep.subr.mxu0 0.0
  %351 = vmatpush1.msra.mxu0 0.0
  %352 = vmatprep.subr.mxu0 0.0
  %353 = vmatpush1.msra.mxu0 0.0
  %354 = vmatprep.subr.mxu0 0.0
  %355 = vmatpush1.msra.mxu0 0.0
  %356 = vmatprep.subr.mxu0 0.0
  %357 = vmatpush1.msra.mxu0 0.0
  %358 = vmatprep.subr.mxu0 0.0
  %359 = vmatpush1.msra.mxu0 0.0
  %360 = vmatprep.subr.mxu0 0.0
  %361 = vmatpush1.msra.mxu0 0.0
  %362 = vmatprep.subr.mxu0 0.0
  %363 = vmatpush1.msra.mxu0 0.0
  %364 = vmatprep.subr.mxu0 0.0
  %365 = vmatpush1.msra.mxu0 0.0
  %366 = vmatprep.subr.mxu0 0.0
  %367 = vmatpush1.msra.mxu0 0.0
  %368 = vmatprep.subr.mxu0 0.0
  %369 = vmatpush1.msra.mxu0 0.0
  %370 = vmatprep.subr.mxu0 0.0
  %371 = vmatpush1.msra.mxu0 0.0
  %372 = vmatprep.subr.mxu0 0.0
  %373 = vmatpush1.msra.mxu0 0.0
  %374 = vmatprep.subr.mxu0 0.0
  %375 = vmatpush1.msra.mxu0 0.0
  %376 = vmatprep.subr.mxu0 0.0
  %377 = vmatpush1.msra.mxu0 0.0
  %378 = vmatprep.subr.mxu0 0.0
  %379 = vmatpush1.msra.mxu0 0.0
  %380 = vmatprep.subr.mxu0 0.0
  %381 = vmatpush1.msra.mxu0 0.0
  %382 = vmatprep.subr.mxu0 0.0
  %383 = vmatpush1.msra.mxu0 0.0
  %384 = vmatprep.subr.mxu0 0.0
  %385 = vmatpush1.msra.mxu0 0.0
  %386 = vmatprep.subr.mxu0 0.0
  %387 = vmatpush1.msra.mxu0 0.0
  %388 = vmatprep.subr.mxu0 0.0
  %389 = vmatpush1.msra.mxu0 0.0
  %390 = vmatprep.subr.mxu0 0.0
  %391 = vmatpush1.msra.mxu0 0.0
  %392 = vmatprep.subr.mxu0 0.0
  %393 = vmatpush1.msra.mxu0 0.0
  %394 = vmatprep.subr.mxu0 0.0
  %395 = vmatpush1.msra.mxu0 0.0
  %396 = vmatprep.subr.mxu0 0.0
  %397 = vmatpush1.msra.mxu0 0.0
  %398 = vmatprep.subr.mxu0 0.0
  %399 = vmatpush1.msra.mxu0 0.0
  %400 = vmatprep.subr.mxu0 0.0
  %401 = vmatpush1.msra.mxu0 0.0
  %402 = vmatprep.mubr.f32.mxu0 0.0
  %403 = vmatmul.mubr.f32.gmra.mrb[0].mxu0 %v266
  %v404 = vpop.f32.mrb[0].mxu0
  %v405 = vadd.f32 0.0, %v404
  %v406 = vpop.f32.mrb[0].mxu0
  %407 = vmatprep.mubr.f32.mxu0 0.0
  %408 = vmatmul.mubr.f32.gmra.mrb[0].mxu0 %v269
  %v409 = vpop.f32.mrb[0].mxu0
  %v410 = vadd.f32 0.0, %v409
  %v411 = vpop.f32.mrb[0].mxu0
  %412 = vmatprep.mubr.f32.mxu0 0.0
  %413 = vmatmul.mubr.f32.gmra.mrb[0].mxu0 %v272
  %v414 = vpop.f32.mrb[0].mxu0
  %v415 = vadd.f32 0.0, %v414
  %v416 = vpop.f32.mrb[0].mxu0
  %417 = vmatprep.mubr.f32.mxu0 0.0
  %418 = vmatmul.mubr.f32.gmra.mrb[0].mxu0 %v275
  %v419 = vpop.f32.mrb[0].mxu0
  %v420 = vadd.f32 0.0, %v419
  %v421 = vpop.f32.mrb[0].mxu0
  %422 = vmatprep.mubr.f32.mxu0 0.0
  %423 = vmatmul.mubr.f32.gmra.mrb[0].mxu0 %v278
  %v424 = vpop.f32.mrb[0].mxu0
  %v425 = vadd.f32 0.0, %v424
  %v426 = vpop.f32.mrb[0].mxu0
  %427 = vmatprep.mubr.f32.mxu0 0.0
  %428 = vmatmul.mubr.f32.gmra.mrb[0].mxu0 %v281
  %v429 = vpop.f32.mrb[0].mxu0
  %v430 = vadd.f32 0.0, %v429
  %v431 = vpop.f32.mrb[0].mxu0
  %432 = vmatprep.mubr.f32.mxu0 0.0
  %433 = vmatmul.mubr.f32.gmra.mrb[0].mxu0 %v284
  %v434 = vpop.f32.mrb[0].mxu0
  %v435 = vadd.f32 0.0, %v434
  %v436 = vpop.f32.mrb[0].mxu0
  %437 = vmatprep.mubr.f32.mxu0 0.0
  %438 = vmatmul.mubr.f32.gmra.mrb[0].mxu0 %v287
  %v439 = vpop.f32.mrb[0].mxu0
  %v440 = vadd.f32 0.0, %v439
  %v441 = vpop.f32.mrb[0].mxu0
  %442 = vmatprep.mubr.f32.mxu0 0.0
  %443 = vmatmul.mubr.f32.gmra.mrb[0].mxu0 %v290
  %v444 = vpop.f32.mrb[0].mxu0
  %v445 = vadd.f32 0.0, %v444
  %v446 = vpop.f32.mrb[0].mxu0
  %447 = vmatprep.mubr.f32.mxu0 0.0
  %448 = vmatmul.mubr.f32.gmra.mrb[0].mxu0 %v293
  %v449 = vpop.f32.mrb[0].mxu0
  %v450 = vadd.f32 0.0, %v449
  %v451 = vpop.f32.mrb[0].mxu0
  %452 = vmatprep.mubr.f32.mxu0 0.0
  %453 = vmatmul.mubr.f32.gmra.mrb[0].mxu0 %v296
  %v454 = vpop.f32.mrb[0].mxu0
  %v455 = vadd.f32 0.0, %v454
  %v456 = vpop.f32.mrb[0].mxu0
  %457 = vmatprep.mubr.f32.mxu0 0.0
  %458 = vmatmul.mubr.f32.gmra.mrb[0].mxu0 %v299
  %v459 = vpop.f32.mrb[0].mxu0
  %v460 = vadd.f32 0.0, %v459
  %v461 = vpop.f32.mrb[0].mxu0
  %462 = vmatprep.mubr.f32.mxu0 0.0
  %463 = vmatmul.mubr.f32.gmra.mrb[0].mxu0 %v302
  %v464 = vpop.f32.mrb[0].mxu0
  %v465 = vadd.f32 0.0, %v464
  %v466 = vpop.f32.mrb[0].mxu0
  %467 = vmatprep.mubr.f32.mxu0 0.0
  %468 = vmatmul.mubr.f32.gmra.mrb[0].mxu0 %v305
  %v469 = vpop.f32.mrb[0].mxu0
  %v470 = vadd.f32 0.0, %v469
  %v471 = vpop.f32.mrb[0].mxu0
  %472 = vmatprep.mubr.f32.mxu0 0.0
  %473 = vmatmul.mubr.f32.gmra.mrb[0].mxu0 %v308
  %v474 = vpop.f32.mrb[0].mxu0
  %v475 = vadd.f32 0.0, %v474
  %v476 = vpop.f32.mrb[0].mxu0
  %477 = vmatprep.mubr.f32.mxu0 0.0
  %478 = vmatmul.mubr.f32.gmra.mrb[0].mxu0 %v311
  %v479 = vpop.f32.mrb[0].mxu0
  %v480 = vadd.f32 0.0, %v479
  %v481 = vpop.f32.mrb[0].mxu0
  %482 = vmatprep.mubr.f32.mxu0 0.0
  %483 = vmatmul.mubr.f32.gmra.mrb[0].mxu0 %v314
  %v484 = vpop.f32.mrb[0].mxu0
  %v485 = vadd.f32 0.0, %v484
  %v486 = vpop.f32.mrb[0].mxu0
  %487 = vmatprep.mubr.f32.mxu0 0.0
  %488 = vmatmul.mubr.f32.gmra.mrb[0].mxu0 %v317
  %v489 = vpop.f32.mrb[0].mxu0
  %v490 = vadd.f32 0.0, %v489
  %v491 = vpop.f32.mrb[0].mxu0
  %492 = vmatprep.mubr.f32.mxu0 0.0
  %493 = vmatmul.mubr.f32.gmra.mrb[0].mxu0 %v320
  %v494 = vpop.f32.mrb[0].mxu0
  %v495 = vadd.f32 0.0, %v494
  %v496 = vpop.f32.mrb[0].mxu0
  %497 = vmatprep.mubr.f32.mxu0 0.0
  %498 = vmatmul.mubr.f32.gmra.mrb[0].mxu0 %v323
  %v499 = vpop.f32.mrb[0].mxu0
  %v500 = vadd.f32 0.0, %v499
  %v501 = vpop.f32.mrb[0].mxu0
  %502 = vmatprep.mubr.f32.mxu0 0.0
  %503 = vmatmul.mubr.f32.gmra.mrb[0].mxu0 %v326
  %v504 = vpop.f32.mrb[0].mxu0
  %v505 = vadd.f32 0.0, %v504
  %v506 = vpop.f32.mrb[0].mxu0
  %507 = vmatprep.mubr.f32.mxu0 0.0
  %508 = vmatmul.mubr.f32.gmra.mrb[0].mxu0 %v329
  %v509 = vpop.f32.mrb[0].mxu0
  %v510 = vadd.f32 0.0, %v509
  %v511 = vpop.f32.mrb[0].mxu0
  %512 = vmatprep.mubr.f32.mxu0 0.0
  %513 = vmatmul.mubr.f32.gmra.mrb[0].mxu0 %v332
  %v514 = vpop.f32.mrb[0].mxu0
  %v515 = vadd.f32 0.0, %v514
  %v516 = vpop.f32.mrb[0].mxu0
  %517 = vdwg.mxu0
  %v519 = vsel %vm29, %v216, 0
  %v522 = vsel %vm29, %v217, 0
  %v525 = vsel %vm29, %v218, 0
  %v528 = vsel %vm29, %v219, 0
  %v531 = vsel %vm29, %v220, 0
  %v534 = vsel %vm29, %v221, 0
  %v537 = vsel %vm29, %v222, 0
  %v540 = vsel %vm29, %v223, 0
  %v543 = vsel %vm29, %v224, 0
  %v546 = vsel %vm29, %v225, 0
  %v549 = vsel %vm29, %v226, 0
  %v552 = vsel %vm29, %v227, 0
  %v555 = vsel %vm29, %v228, 0
  %v558 = vsel %vm29, %v229, 0
  %v561 = vsel %vm29, %v230, 0
  %v564 = vsel %vm29, %v231, 0
  %v567 = vsel %vm29, %v232, 0
  %v570 = vsel %vm29, %v233, 0
  %v573 = vsel %vm29, %v234, 0
  %v576 = vsel %vm29, %v235, 0
  %v579 = vsel %vm29, %v236, 0
  %v582 = vsel %vm29, %v237, 0
  %v585 = vsel %vm29, %v238, 0
  %v588 = vsel %vm334, %v239, 0
  %590 = vmatprep.subr.mxu0 0.0
  %591 = vmatpush1.msra.mxu0 %v588
  %592 = vmatprep.subr.mxu0 0.0
  %593 = vmatpush1.msra.mxu0 0.0
  %594 = vmatprep.subr.mxu0 0.0
  %595 = vmatpush1.msra.mxu0 0.0
  %596 = vmatprep.subr.mxu0 0.0
  %597 = vmatpush1.msra.mxu0 0.0
  %598 = vmatprep.subr.mxu0 0.0
  %599 = vmatpush1.msra.mxu0 0.0
  %600 = vmatprep.subr.mxu0 0.0
  %601 = vmatpush1.msra.mxu0 0.0
  %602 = vmatprep.subr.mxu0 0.0
  %603 = vmatpush1.msra.mxu0 0.0
  %604 = vmatprep.subr.mxu0 0.0
  %605 = vmatpush1.msra.mxu0 0.0
  %606 = vmatprep.subr.mxu0 0.0
  %607 = vmatpush1.msra.mxu0 0.0
  %608 = vmatprep.subr.mxu0 0.0
  %609 = vmatpush1.msra.mxu0 0.0
  %610 = vmatprep.subr.mxu0 0.0
  %611 = vmatpush1.msra.mxu0 0.0
  %612 = vmatprep.subr.mxu0 0.0
  %613 = vmatpush1.msra.mxu0 0.0
  %614 = vmatprep.subr.mxu0 0.0
  %615 = vmatpush1.msra.mxu0 0.0
  %616 = vmatprep.subr.mxu0 0.0
  %617 = vmatpush1.msra.mxu0 0.0
  %618 = vmatprep.subr.mxu0 0.0
  %619 = vmatpush1.msra.mxu0 0.0
  %620 = vmatprep.subr.mxu0 0.0
  %621 = vmatpush1.msra.mxu0 0.0
  %622 = vmatprep.subr.mxu0 0.0
  %623 = vmatpush1.msra.mxu0 0.0
  %624 = vmatprep.subr.mxu0 0.0
  %625 = vmatpush1.msra.mxu0 0.0
  %626 = vmatprep.subr.mxu0 0.0
  %627 = vmatpush1.msra.mxu0 0.0
  %628 = vmatprep.subr.mxu0 0.0
  %629 = vmatpush1.msra.mxu0 0.0
  %630 = vmatprep.subr.mxu0 0.0
  %631 = vmatpush1.msra.mxu0 0.0
  %632 = vmatprep.subr.mxu0 0.0
  %633 = vmatpush1.msra.mxu0 0.0
  %634 = vmatprep.subr.mxu0 0.0
  %635 = vmatpush1.msra.mxu0 0.0
  %636 = vmatprep.subr.mxu0 0.0
  %637 = vmatpush1.msra.mxu0 0.0
  %638 = vmatprep.subr.mxu0 0.0
  %639 = vmatpush1.msra.mxu0 0.0
  %640 = vmatprep.subr.mxu0 0.0
  %641 = vmatpush1.msra.mxu0 0.0
  %642 = vmatprep.subr.mxu0 0.0
  %643 = vmatpush1.msra.mxu0 0.0
  %644 = vmatprep.subr.mxu0 0.0
  %645 = vmatpush1.msra.mxu0 0.0
  %646 = vmatprep.subr.mxu0 0.0
  %647 = vmatpush1.msra.mxu0 0.0
  %648 = vmatprep.subr.mxu0 0.0
  %649 = vmatpush1.msra.mxu0 0.0
  %650 = vmatprep.subr.mxu0 0.0
  %651 = vmatpush1.msra.mxu0 0.0
  %652 = vmatprep.subr.mxu0 0.0
  %653 = vmatpush1.msra.mxu0 0.0
  %654 = vmatprep.mubr.f32.mxu0 0.0
  %655 = vmatmul.mubr.f32.gmra.mrb[0].mxu0 %v519
  %v656 = vpop.f32.mrb[0].mxu0
  %v657 = vadd.f32 %v405, %v656
  %v658 = vpop.f32.mrb[0].mxu0
  %659 = vmatprep.mubr.f32.mxu0 0.0
  %660 = vmatmul.mubr.f32.gmra.mrb[0].mxu0 %v522
  %v661 = vpop.f32.mrb[0].mxu0
  %v662 = vadd.f32 %v410, %v661
  %v663 = vpop.f32.mrb[0].mxu0
  %664 = vmatprep.mubr.f32.mxu0 0.0
  %665 = vmatmul.mubr.f32.gmra.mrb[0].mxu0 %v525
  %v666 = vpop.f32.mrb[0].mxu0
  %v667 = vadd.f32 %v415, %v666
  %v668 = vpop.f32.mrb[0].mxu0
  %669 = vmatprep.mubr.f32.mxu0 0.0
  %670 = vmatmul.mubr.f32.gmra.mrb[0].mxu0 %v528
  %v671 = vpop.f32.mrb[0].mxu0
  %v672 = vadd.f32 %v420, %v671
  %v673 = vpop.f32.mrb[0].mxu0
  %674 = vmatprep.mubr.f32.mxu0 0.0
  %675 = vmatmul.mubr.f32.gmra.mrb[0].mxu0 %v531
  %v676 = vpop.f32.mrb[0].mxu0
  %v677 = vadd.f32 %v425, %v676
  %v678 = vpop.f32.mrb[0].mxu0
  %679 = vmatprep.mubr.f32.mxu0 0.0
  %680 = vmatmul.mubr.f32.gmra.mrb[0].mxu0 %v534
  %v681 = vpop.f32.mrb[0].mxu0
  %v682 = vadd.f32 %v430, %v681
  %v683 = vpop.f32.mrb[0].mxu0
  %684 = vmatprep.mubr.f32.mxu0 0.0
  %685 = vmatmul.mubr.f32.gmra.mrb[0].mxu0 %v537
  %v686 = vpop.f32.mrb[0].mxu0
  %v687 = vadd.f32 %v435, %v686
  %v688 = vpop.f32.mrb[0].mxu0
  %689 = vmatprep.mubr.f32.mxu0 0.0
  %690 = vmatmul.mubr.f32.gmra.mrb[0].mxu0 %v540
  %v691 = vpop.f32.mrb[0].mxu0
  %v692 = vadd.f32 %v440, %v691
  %v693 = vpop.f32.mrb[0].mxu0
  %694 = vmatprep.mubr.f32.mxu0 0.0
  %695 = vmatmul.mubr.f32.gmra.mrb[0].mxu0 %v543
  %v696 = vpop.f32.mrb[0].mxu0
  %v697 = vadd.f32 %v445, %v696
  %v698 = vpop.f32.mrb[0].mxu0
  %699 = vmatprep.mubr.f32.mxu0 0.0
  %700 = vmatmul.mubr.f32.gmra.mrb[0].mxu0 %v546
  %v701 = vpop.f32.mrb[0].mxu0
  %v702 = vadd.f32 %v450, %v701
  %v703 = vpop.f32.mrb[0].mxu0
  %704 = vmatprep.mubr.f32.mxu0 0.0
  %705 = vmatmul.mubr.f32.gmra.mrb[0].mxu0 %v549
  %v706 = vpop.f32.mrb[0].mxu0
  %v707 = vadd.f32 %v455, %v706
  %v708 = vpop.f32.mrb[0].mxu0
  %709 = vmatprep.mubr.f32.mxu0 0.0
  %710 = vmatmul.mubr.f32.gmra.mrb[0].mxu0 %v552
  %v711 = vpop.f32.mrb[0].mxu0
  %v712 = vadd.f32 %v460, %v711
  %v713 = vpop.f32.mrb[0].mxu0
  %714 = vmatprep.mubr.f32.mxu0 0.0
  %715 = vmatmul.mubr.f32.gmra.mrb[0].mxu0 %v555
  %v716 = vpop.f32.mrb[0].mxu0
  %v717 = vadd.f32 %v465, %v716
  %v718 = vpop.f32.mrb[0].mxu0
  %719 = vmatprep.mubr.f32.mxu0 0.0
  %720 = vmatmul.mubr.f32.gmra.mrb[0].mxu0 %v558
  %v721 = vpop.f32.mrb[0].mxu0
  %v722 = vadd.f32 %v470, %v721
  %v723 = vpop.f32.mrb[0].mxu0
  %724 = vmatprep.mubr.f32.mxu0 0.0
  %725 = vmatmul.mubr.f32.gmra.mrb[0].mxu0 %v561
  %v726 = vpop.f32.mrb[0].mxu0
  %v727 = vadd.f32 %v475, %v726
  %v728 = vpop.f32.mrb[0].mxu0
  %729 = vmatprep.mubr.f32.mxu0 0.0
  %730 = vmatmul.mubr.f32.gmra.mrb[0].mxu0 %v564
  %v731 = vpop.f32.mrb[0].mxu0
  %v732 = vadd.f32 %v480, %v731
  %v733 = vpop.f32.mrb[0].mxu0
  %734 = vmatprep.mubr.f32.mxu0 0.0
  %735 = vmatmul.mubr.f32.gmra.mrb[0].mxu0 %v567
  %v736 = vpop.f32.mrb[0].mxu0
  %v737 = vadd.f32 %v485, %v736
  %v738 = vpop.f32.mrb[0].mxu0
  %739 = vmatprep.mubr.f32.mxu0 0.0
  %740 = vmatmul.mubr.f32.gmra.mrb[0].mxu0 %v570
  %v741 = vpop.f32.mrb[0].mxu0
  %v742 = vadd.f32 %v490, %v741
  %v743 = vpop.f32.mrb[0].mxu0
  %744 = vmatprep.mubr.f32.mxu0 0.0
  %745 = vmatmul.mubr.f32.gmra.mrb[0].mxu0 %v573
  %v746 = vpop.f32.mrb[0].mxu0
  %v747 = vadd.f32 %v495, %v746
  %v748 = vpop.f32.mrb[0].mxu0
  %749 = vmatprep.mubr.f32.mxu0 0.0
  %750 = vmatmul.mubr.f32.gmra.mrb[0].mxu0 %v576
  %v751 = vpop.f32.mrb[0].mxu0
  %v752 = vadd.f32 %v500, %v751
  %v753 = vpop.f32.mrb[0].mxu0
  %754 = vmatprep.mubr.f32.mxu0 0.0
  %755 = vmatmul.mubr.f32.gmra.mrb[0].mxu0 %v579
  %v756 = vpop.f32.mrb[0].mxu0
  %v757 = vadd.f32 %v505, %v756
  %v758 = vpop.f32.mrb[0].mxu0
  %759 = vmatprep.mubr.f32.mxu0 0.0
  %760 = vmatmul.mubr.f32.gmra.mrb[0].mxu0 %v582
  %v761 = vpop.f32.mrb[0].mxu0
  %v762 = vadd.f32 %v510, %v761
  %v763 = vpop.f32.mrb[0].mxu0
  %764 = vmatprep.mubr.f32.mxu0 0.0
  %765 = vmatmul.mubr.f32.gmra.mrb[0].mxu0 %v585
  %v766 = vpop.f32.mrb[0].mxu0
  %v767 = vadd.f32 %v515, %v766
  %v768 = vpop.f32.mrb[0].mxu0
  %769 = vdwg.mxu0
  %v770 = vld [vmem:[#allocation2 + $0x2] sm:$0xff]
  %v771 = vld [vmem:[#allocation2 + $0xa] sm:$0xff]
  %v772 = vld [vmem:[#allocation2 + $0x12] sm:$0xff]
  %v773 = vld [vmem:[#allocation2 + $0x1a] sm:$0xff]
  %v774 = vld [vmem:[#allocation2 + $0x22] sm:$0xff]
  %v775 = vld [vmem:[#allocation2 + $0x2a] sm:$0xff]
  %v776 = vld [vmem:[#allocation2 + $0x32] sm:$0xff]
  %v777 = vld [vmem:[#allocation2 + $0x3a] sm:$0xff]
  %v778 = vld [vmem:[#allocation2 + $0x42] sm:$0xff]
  %v779 = vld [vmem:[#allocation2 + $0x4a] sm:$0xff]
  %v780 = vld [vmem:[#allocation2 + $0x52] sm:$0xff]
  %v781 = vld [vmem:[#allocation2 + $0x5a] sm:$0xff]
  %v782 = vld [vmem:[#allocation2 + $0x62] sm:$0xff]
  %v783 = vld [vmem:[#allocation2 + $0x6a] sm:$0xff]
  %v784 = vld [vmem:[#allocation2 + $0x72] sm:$0xff]
  %v785 = vld [vmem:[#allocation2 + $0x7a] sm:$0xff]
  %v786 = vld [vmem:[#allocation2 + $0x82] sm:$0xff]
  %v787 = vld [vmem:[#allocation2 + $0x8a] sm:$0xff]
  %v788 = vld [vmem:[#allocation2 + $0x92] sm:$0xff]
  %v789 = vld [vmem:[#allocation2 + $0x9a] sm:$0xff]
  %v790 = vld [vmem:[#allocation2 + $0xa2] sm:$0xff]
  %v791 = vld [vmem:[#allocation2 + $0xaa] sm:$0xff]
  %v792 = vld [vmem:[#allocation2 + $0xb2] sm:$0xff]
  %s793 = scalar_lea.vmem %s2, 8
  %v794 = vld [vmem:[%s793] sm:$0xf]
  %v796 = vsel %vm29, %v770, 0
  %v799 = vsel %vm29, %v771, 0
  %v802 = vsel %vm29, %v772, 0
  %v805 = vsel %vm29, %v773, 0
  %v808 = vsel %vm29, %v774, 0
  %v811 = vsel %vm29, %v775, 0
  %v814 = vsel %vm29, %v776, 0
  %v817 = vsel %vm29, %v777, 0
  %v820 = vsel %vm29, %v778, 0
  %v823 = vsel %vm29, %v779, 0
  %v826 = vsel %vm29, %v780, 0
  %v829 = vsel %vm29, %v781, 0
  %v832 = vsel %vm29, %v782, 0
  %v835 = vsel %vm29, %v783, 0
  %v838 = vsel %vm29, %v784, 0
  %v841 = vsel %vm29, %v785, 0
  %v844 = vsel %vm29, %v786, 0
  %v847 = vsel %vm29, %v787, 0
  %v850 = vsel %vm29, %v788, 0
  %v853 = vsel %vm29, %v789, 0
  %v856 = vsel %vm29, %v790, 0
  %v859 = vsel %vm29, %v791, 0
  %v862 = vsel %vm29, %v792, 0
  %v865 = vsel %vm334, %v794, 0
  %867 = vmatprep.subr.mxu0 0.0
  %868 = vmatpush1.msra.mxu0 %v865
  %869 = vmatprep.subr.mxu0 0.0
  %870 = vmatpush1.msra.mxu0 0.0
  %871 = vmatprep.subr.mxu0 0.0
  %872 = vmatpush1.msra.mxu0 0.0
  %873 = vmatprep.subr.mxu0 0.0
  %874 = vmatpush1.msra.mxu0 0.0
  %875 = vmatprep.subr.mxu0 0.0
  %876 = vmatpush1.msra.mxu0 0.0
  %877 = vmatprep.subr.mxu0 0.0
  %878 = vmatpush1.msra.mxu0 0.0
  %879 = vmatprep.subr.mxu0 0.0
  %880 = vmatpush1.msra.mxu0 0.0
  %881 = vmatprep.subr.mxu0 0.0
  %882 = vmatpush1.msra.mxu0 0.0
  %883 = vmatprep.subr.mxu0 0.0
  %884 = vmatpush1.msra.mxu0 0.0
  %885 = vmatprep.subr.mxu0 0.0
  %886 = vmatpush1.msra.mxu0 0.0
  %887 = vmatprep.subr.mxu0 0.0
  %888 = vmatpush1.msra.mxu0 0.0
  %889 = vmatprep.subr.mxu0 0.0
  %890 = vmatpush1.msra.mxu0 0.0
  %891 = vmatprep.subr.mxu0 0.0
  %892 = vmatpush1.msra.mxu0 0.0
  %893 = vmatprep.subr.mxu0 0.0
  %894 = vmatpush1.msra.mxu0 0.0
  %895 = vmatprep.subr.mxu0 0.0
  %896 = vmatpush1.msra.mxu0 0.0
  %897 = vmatprep.subr.mxu0 0.0
  %898 = vmatpush1.msra.mxu0 0.0
  %899 = vmatprep.subr.mxu0 0.0
  %900 = vmatpush1.msra.mxu0 0.0
  %901 = vmatprep.subr.mxu0 0.0
  %902 = vmatpush1.msra.mxu0 0.0
  %903 = vmatprep.subr.mxu0 0.0
  %904 = vmatpush1.msra.mxu0 0.0
  %905 = vmatprep.subr.mxu0 0.0
  %906 = vmatpush1.msra.mxu0 0.0
  %907 = vmatprep.subr.mxu0 0.0
  %908 = vmatpush1.msra.mxu0 0.0
  %909 = vmatprep.subr.mxu0 0.0
  %910 = vmatpush1.msra.mxu0 0.0
  %911 = vmatprep.subr.mxu0 0.0
  %912 = vmatpush1.msra.mxu0 0.0
  %913 = vmatprep.subr.mxu0 0.0
  %914 = vmatpush1.msra.mxu0 0.0
  %915 = vmatprep.subr.mxu0 0.0
  %916 = vmatpush1.msra.mxu0 0.0
  %917 = vmatprep.subr.mxu0 0.0
  %918 = vmatpush1.msra.mxu0 0.0
  %919 = vmatprep.subr.mxu0 0.0
  %920 = vmatpush1.msra.mxu0 0.0
  %921 = vmatprep.subr.mxu0 0.0
  %922 = vmatpush1.msra.mxu0 0.0
  %923 = vmatprep.subr.mxu0 0.0
  %924 = vmatpush1.msra.mxu0 0.0
  %925 = vmatprep.subr.mxu0 0.0
  %926 = vmatpush1.msra.mxu0 0.0
  %927 = vmatprep.subr.mxu0 0.0
  %928 = vmatpush1.msra.mxu0 0.0
  %929 = vmatprep.subr.mxu0 0.0
  %930 = vmatpush1.msra.mxu0 0.0
  %931 = vmatprep.mubr.f32.mxu0 0.0
  %932 = vmatmul.mubr.f32.gmra.mrb[0].mxu0 %v796
  %v933 = vpop.f32.mrb[0].mxu0
  %v934 = vadd.f32 0.0, %v933
  %v935 = vpop.f32.mrb[0].mxu0
  %936 = vmatprep.mubr.f32.mxu0 0.0
  %937 = vmatmul.mubr.f32.gmra.mrb[0].mxu0 %v799
  %v938 = vpop.f32.mrb[0].mxu0
  %v939 = vadd.f32 0.0, %v938
  %v940 = vpop.f32.mrb[0].mxu0
  %941 = vmatprep.mubr.f32.mxu0 0.0
  %942 = vmatmul.mubr.f32.gmra.mrb[0].mxu0 %v802
  %v943 = vpop.f32.mrb[0].mxu0
  %v944 = vadd.f32 0.0, %v943
  %v945 = vpop.f32.mrb[0].mxu0
  %946 = vmatprep.mubr.f32.mxu0 0.0
  %947 = vmatmul.mubr.f32.gmra.mrb[0].mxu0 %v805
  %v948 = vpop.f32.mrb[0].mxu0
  %v949 = vadd.f32 0.0, %v948
  %v950 = vpop.f32.mrb[0].mxu0
  %951 = vmatprep.mubr.f32.mxu0 0.0
  %952 = vmatmul.mubr.f32.gmra.mrb[0].mxu0 %v808
  %v953 = vpop.f32.mrb[0].mxu0
  %v954 = vadd.f32 0.0, %v953
  %v955 = vpop.f32.mrb[0].mxu0
  %956 = vmatprep.mubr.f32.mxu0 0.0
  %957 = vmatmul.mubr.f32.gmra.mrb[0].mxu0 %v811
  %v958 = vpop.f32.mrb[0].mxu0
  %v959 = vadd.f32 0.0, %v958
  %v960 = vpop.f32.mrb[0].mxu0
  %961 = vmatprep.mubr.f32.mxu0 0.0
  %962 = vmatmul.mubr.f32.gmra.mrb[0].mxu0 %v814
  %v963 = vpop.f32.mrb[0].mxu0
  %v964 = vadd.f32 0.0, %v963
  %v965 = vpop.f32.mrb[0].mxu0
  %966 = vmatprep.mubr.f32.mxu0 0.0
  %967 = vmatmul.mubr.f32.gmra.mrb[0].mxu0 %v817
  %v968 = vpop.f32.mrb[0].mxu0
  %v969 = vadd.f32 0.0, %v968
  %v970 = vpop.f32.mrb[0].mxu0
  %971 = vmatprep.mubr.f32.mxu0 0.0
  %972 = vmatmul.mubr.f32.gmra.mrb[0].mxu0 %v820
  %v973 = vpop.f32.mrb[0].mxu0
  %v974 = vadd.f32 0.0, %v973
  %v975 = vpop.f32.mrb[0].mxu0
  %976 = vmatprep.mubr.f32.mxu0 0.0
  %977 = vmatmul.mubr.f32.gmra.mrb[0].mxu0 %v823
  %v978 = vpop.f32.mrb[0].mxu0
  %v979 = vadd.f32 0.0, %v978
  %v980 = vpop.f32.mrb[0].mxu0
  %981 = vmatprep.mubr.f32.mxu0 0.0
  %982 = vmatmul.mubr.f32.gmra.mrb[0].mxu0 %v826
  %v983 = vpop.f32.mrb[0].mxu0
  %v984 = vadd.f32 0.0, %v983
  %v985 = vpop.f32.mrb[0].mxu0
  %986 = vmatprep.mubr.f32.mxu0 0.0
  %987 = vmatmul.mubr.f32.gmra.mrb[0].mxu0 %v829
  %v988 = vpop.f32.mrb[0].mxu0
  %v989 = vadd.f32 0.0, %v988
  %v990 = vpop.f32.mrb[0].mxu0
  %991 = vmatprep.mubr.f32.mxu0 0.0
  %992 = vmatmul.mubr.f32.gmra.mrb[0].mxu0 %v832
  %v993 = vpop.f32.mrb[0].mxu0
  %v994 = vadd.f32 0.0, %v993
  %v995 = vpop.f32.mrb[0].mxu0
  %996 = vmatprep.mubr.f32.mxu0 0.0
  %997 = vmatmul.mubr.f32.gmra.mrb[0].mxu0 %v835
  %v998 = vpop.f32.mrb[0].mxu0
  %v999 = vadd.f32 0.0, %v998
  %v1000 = vpop.f32.mrb[0].mxu0
  %1001 = vmatprep.mubr.f32.mxu0 0.0
  %1002 = vmatmul.mubr.f32.gmra.mrb[0].mxu0 %v838
  %v1003 = vpop.f32.mrb[0].mxu0
  %v1004 = vadd.f32 0.0, %v1003
  %v1005 = vpop.f32.mrb[0].mxu0
  %1006 = vmatprep.mubr.f32.mxu0 0.0
  %1007 = vmatmul.mubr.f32.gmra.mrb[0].mxu0 %v841
  %v1008 = vpop.f32.mrb[0].mxu0
  %v1009 = vadd.f32 0.0, %v1008
  %v1010 = vpop.f32.mrb[0].mxu0
  %1011 = vmatprep.mubr.f32.mxu0 0.0
  %1012 = vmatmul.mubr.f32.gmra.mrb[0].mxu0 %v844
  %v1013 = vpop.f32.mrb[0].mxu0
  %v1014 = vadd.f32 0.0, %v1013
  %v1015 = vpop.f32.mrb[0].mxu0
  %1016 = vmatprep.mubr.f32.mxu0 0.0
  %1017 = vmatmul.mubr.f32.gmra.mrb[0].mxu0 %v847
  %v1018 = vpop.f32.mrb[0].mxu0
  %v1019 = vadd.f32 0.0, %v1018
  %v1020 = vpop.f32.mrb[0].mxu0
  %1021 = vmatprep.mubr.f32.mxu0 0.0
  %1022 = vmatmul.mubr.f32.gmra.mrb[0].mxu0 %v850
  %v1023 = vpop.f32.mrb[0].mxu0
  %v1024 = vadd.f32 0.0, %v1023
  %v1025 = vpop.f32.mrb[0].mxu0
  %1026 = vmatprep.mubr.f32.mxu0 0.0
  %1027 = vmatmul.mubr.f32.gmra.mrb[0].mxu0 %v853
  %v1028 = vpop.f32.mrb[0].mxu0
  %v1029 = vadd.f32 0.0, %v1028
  %v1030 = vpop.f32.mrb[0].mxu0
  %1031 = vmatprep.mubr.f32.mxu0 0.0
  %1032 = vmatmul.mubr.f32.gmra.mrb[0].mxu0 %v856
  %v1033 = vpop.f32.mrb[0].mxu0
  %v1034 = vadd.f32 0.0, %v1033
  %v1035 = vpop.f32.mrb[0].mxu0
  %1036 = vmatprep.mubr.f32.mxu0 0.0
  %1037 = vmatmul.mubr.f32.gmra.mrb[0].mxu0 %v859
  %v1038 = vpop.f32.mrb[0].mxu0
  %v1039 = vadd.f32 0.0, %v1038
  %v1040 = vpop.f32.mrb[0].mxu0
  %1041 = vmatprep.mubr.f32.mxu0 0.0
  %1042 = vmatmul.mubr.f32.gmra.mrb[0].mxu0 %v862
  %v1043 = vpop.f32.mrb[0].mxu0
  %v1044 = vadd.f32 0.0, %v1043
  %v1045 = vpop.f32.mrb[0].mxu0
  %1046 = vdwg.mxu0
  %v1047 = vadd.f32 %v657, %v934
  %v1048 = vadd.f32 %v662, %v939
  %v1049 = vadd.f32 %v667, %v944
  %v1050 = vadd.f32 %v672, %v949
  %v1051 = vadd.f32 %v677, %v954
  %v1052 = vadd.f32 %v682, %v959
  %v1053 = vadd.f32 %v687, %v964
  %v1054 = vadd.f32 %v692, %v969
  %v1055 = vadd.f32 %v697, %v974
  %v1056 = vadd.f32 %v702, %v979
  %v1057 = vadd.f32 %v707, %v984
  %v1058 = vadd.f32 %v712, %v989
  %v1059 = vadd.f32 %v717, %v994
  %v1060 = vadd.f32 %v722, %v999
  %v1061 = vadd.f32 %v727, %v1004
  %v1062 = vadd.f32 %v732, %v1009
  %v1063 = vadd.f32 %v737, %v1014
  %v1064 = vadd.f32 %v742, %v1019
  %v1065 = vadd.f32 %v747, %v1024
  %v1066 = vadd.f32 %v752, %v1029
  %v1067 = vadd.f32 %v757, %v1034
  %v1068 = vadd.f32 %v762, %v1039
  %v1069 = vadd.f32 %v767, %v1044
  %v1070 = vld [vmem:[#allocation2 + $0xa] sm:$0xff]
  %v1071 = vld [vmem:[#allocation2 + $0x12] sm:$0xff]
  %v1072 = vld [vmem:[#allocation2 + $0x1a] sm:$0xff]
  %v1073 = vld [vmem:[#allocation2 + $0x22] sm:$0xff]
  %v1074 = vld [vmem:[#allocation2 + $0x2a] sm:$0xff]
  %v1075 = vld [vmem:[#allocation2 + $0x32] sm:$0xff]
  %v1076 = vld [vmem:[#allocation2 + $0x3a] sm:$0xff]
  %v1077 = vld [vmem:[#allocation2 + $0x42] sm:$0xff]
  %v1078 = vld [vmem:[#allocation2 + $0x4a] sm:$0xff]
  %v1079 = vld [vmem:[#allocation2 + $0x52] sm:$0xff]
  %v1080 = vld [vmem:[#allocation2 + $0x5a] sm:$0xff]
  %v1081 = vld [vmem:[#allocation2 + $0x62] sm:$0xff]
  %v1082 = vld [vmem:[#allocation2 + $0x6a] sm:$0xff]
  %v1083 = vld [vmem:[#allocation2 + $0x72] sm:$0xff]
  %v1084 = vld [vmem:[#allocation2 + $0x7a] sm:$0xff]
  %v1085 = vld [vmem:[#allocation2 + $0x82] sm:$0xff]
  %v1086 = vld [vmem:[#allocation2 + $0x8a] sm:$0xff]
  %v1087 = vld [vmem:[#allocation2 + $0x92] sm:$0xff]
  %v1088 = vld [vmem:[#allocation2 + $0x9a] sm:$0xff]
  %v1089 = vld [vmem:[#allocation2 + $0xa2] sm:$0xff]
  %v1090 = vld [vmem:[#allocation2 + $0xaa] sm:$0xff]
  %v1091 = vld [vmem:[#allocation2 + $0xb2] sm:$0xff]
  %v1092 = vld [vmem:[#allocation2 + $0xba] sm:$0xff]
  %s1093 = scalar_lea.vmem %s2, 12
  %v1094 = vld [vmem:[%s1093] sm:$0xf]
  %v1096 = vsel %vm29, %v1070, 0
  %v1099 = vsel %vm29, %v1071, 0
  %v1102 = vsel %vm29, %v1072, 0
  %v1105 = vsel %vm29, %v1073, 0
  %v1108 = vsel %vm29, %v1074, 0
  %v1111 = vsel %vm29, %v1075, 0
  %v1114 = vsel %vm29, %v1076, 0
  %v1117 = vsel %vm29, %v1077, 0
  %v1120 = vsel %vm29, %v1078, 0
  %v1123 = vsel %vm29, %v1079, 0
  %v1126 = vsel %vm29, %v1080, 0
  %v1129 = vsel %vm29, %v1081, 0
  %v1132 = vsel %vm29, %v1082, 0
  %v1135 = vsel %vm29, %v1083, 0
  %v1138 = vsel %vm29, %v1084, 0
  %v1141 = vsel %vm29, %v1085, 0
  %v1144 = vsel %vm29, %v1086, 0
  %v1147 = vsel %vm29, %v1087, 0
  %v1150 = vsel %vm29, %v1088, 0
  %v1153 = vsel %vm29, %v1089, 0
  %v1156 = vsel %vm29, %v1090, 0
  %v1159 = vsel %vm29, %v1091, 0
  %v1162 = vsel %vm29, %v1092, 0
  %v1165 = vsel %vm334, %v1094, 0
  %1167 = vmatprep.subr.mxu0 0.0
  %1168 = vmatpush1.msra.mxu0 %v1165
  %1169 = vmatprep.subr.mxu0 0.0
  %1170 = vmatpush1.msra.mxu0 0.0
  %1171 = vmatprep.subr.mxu0 0.0
  %1172 = vmatpush1.msra.mxu0 0.0
  %1173 = vmatprep.subr.mxu0 0.0
  %1174 = vmatpush1.msra.mxu0 0.0
  %1175 = vmatprep.subr.mxu0 0.0
  %1176 = vmatpush1.msra.mxu0 0.0
  %1177 = vmatprep.subr.mxu0 0.0
  %1178 = vmatpush1.msra.mxu0 0.0
  %1179 = vmatprep.subr.mxu0 0.0
  %1180 = vmatpush1.msra.mxu0 0.0
  %1181 = vmatprep.subr.mxu0 0.0
  %1182 = vmatpush1.msra.mxu0 0.0
  %1183 = vmatprep.subr.mxu0 0.0
  %1184 = vmatpush1.msra.mxu0 0.0
  %1185 = vmatprep.subr.mxu0 0.0
  %1186 = vmatpush1.msra.mxu0 0.0
  %1187 = vmatprep.subr.mxu0 0.0
  %1188 = vmatpush1.msra.mxu0 0.0
  %1189 = vmatprep.subr.mxu0 0.0
  %1190 = vmatpush1.msra.mxu0 0.0
  %1191 = vmatprep.subr.mxu0 0.0
  %1192 = vmatpush1.msra.mxu0 0.0
  %1193 = vmatprep.subr.mxu0 0.0
  %1194 = vmatpush1.msra.mxu0 0.0
  %1195 = vmatprep.subr.mxu0 0.0
  %1196 = vmatpush1.msra.mxu0 0.0
  %1197 = vmatprep.subr.mxu0 0.0
  %1198 = vmatpush1.msra.mxu0 0.0
  %1199 = vmatprep.subr.mxu0 0.0
  %1200 = vmatpush1.msra.mxu0 0.0
  %1201 = vmatprep.subr.mxu0 0.0
  %1202 = vmatpush1.msra.mxu0 0.0
  %1203 = vmatprep.subr.mxu0 0.0
  %1204 = vmatpush1.msra.mxu0 0.0
  %1205 = vmatprep.subr.mxu0 0.0
  %1206 = vmatpush1.msra.mxu0 0.0
  %1207 = vmatprep.subr.mxu0 0.0
  %1208 = vmatpush1.msra.mxu0 0.0
  %1209 = vmatprep.subr.mxu0 0.0
  %1210 = vmatpush1.msra.mxu0 0.0
  %1211 = vmatprep.subr.mxu0 0.0
  %1212 = vmatpush1.msra.mxu0 0.0
  %1213 = vmatprep.subr.mxu0 0.0
  %1214 = vmatpush1.msra.mxu0 0.0
  %1215 = vmatprep.subr.mxu0 0.0
  %1216 = vmatpush1.msra.mxu0 0.0
  %1217 = vmatprep.subr.mxu0 0.0
  %1218 = vmatpush1.msra.mxu0 0.0
  %1219 = vmatprep.subr.mxu0 0.0
  %1220 = vmatpush1.msra.mxu0 0.0
  %1221 = vmatprep.subr.mxu0 0.0
  %1222 = vmatpush1.msra.mxu0 0.0
  %1223 = vmatprep.subr.mxu0 0.0
  %1224 = vmatpush1.msra.mxu0 0.0
  %1225 = vmatprep.subr.mxu0 0.0
  %1226 = vmatpush1.msra.mxu0 0.0
  %1227 = vmatprep.subr.mxu0 0.0
  %1228 = vmatpush1.msra.mxu0 0.0
  %1229 = vmatprep.subr.mxu0 0.0
  %1230 = vmatpush1.msra.mxu0 0.0
  %1231 = vmatprep.mubr.f32.mxu0 0.0
  %1232 = vmatmul.mubr.f32.gmra.mrb[0].mxu0 %v1096
  %v1233 = vpop.f32.mrb[0].mxu0
  %v1234 = vadd.f32 0.0, %v1233
  %v1235 = vpop.f32.mrb[0].mxu0
  %1236 = vmatprep.mubr.f32.mxu0 0.0
  %1237 = vmatmul.mubr.f32.gmra.mrb[0].mxu0 %v1099
  %v1238 = vpop.f32.mrb[0].mxu0
  %v1239 = vadd.f32 0.0, %v1238
  %v1240 = vpop.f32.mrb[0].mxu0
  %1241 = vmatprep.mubr.f32.mxu0 0.0
  %1242 = vmatmul.mubr.f32.gmra.mrb[0].mxu0 %v1102
  %v1243 = vpop.f32.mrb[0].mxu0
  %v1244 = vadd.f32 0.0, %v1243
  %v1245 = vpop.f32.mrb[0].mxu0
  %1246 = vmatprep.mubr.f32.mxu0 0.0
  %1247 = vmatmul.mubr.f32.gmra.mrb[0].mxu0 %v1105
  %v1248 = vpop.f32.mrb[0].mxu0
  %v1249 = vadd.f32 0.0, %v1248
  %v1250 = vpop.f32.mrb[0].mxu0
  %1251 = vmatprep.mubr.f32.mxu0 0.0
  %1252 = vmatmul.mubr.f32.gmra.mrb[0].mxu0 %v1108
  %v1253 = vpop.f32.mrb[0].mxu0
  %v1254 = vadd.f32 0.0, %v1253
  %v1255 = vpop.f32.mrb[0].mxu0
  %1256 = vmatprep.mubr.f32.mxu0 0.0
  %1257 = vmatmul.mubr.f32.gmra.mrb[0].mxu0 %v1111
  %v1258 = vpop.f32.mrb[0].mxu0
  %v1259 = vadd.f32 0.0, %v1258
  %v1260 = vpop.f32.mrb[0].mxu0
  %1261 = vmatprep.mubr.f32.mxu0 0.0
  %1262 = vmatmul.mubr.f32.gmra.mrb[0].mxu0 %v1114
  %v1263 = vpop.f32.mrb[0].mxu0
  %v1264 = vadd.f32 0.0, %v1263
  %v1265 = vpop.f32.mrb[0].mxu0
  %1266 = vmatprep.mubr.f32.mxu0 0.0
  %1267 = vmatmul.mubr.f32.gmra.mrb[0].mxu0 %v1117
  %v1268 = vpop.f32.mrb[0].mxu0
  %v1269 = vadd.f32 0.0, %v1268
  %v1270 = vpop.f32.mrb[0].mxu0
  %1271 = vmatprep.mubr.f32.mxu0 0.0
  %1272 = vmatmul.mubr.f32.gmra.mrb[0].mxu0 %v1120
  %v1273 = vpop.f32.mrb[0].mxu0
  %v1274 = vadd.f32 0.0, %v1273
  %v1275 = vpop.f32.mrb[0].mxu0
  %1276 = vmatprep.mubr.f32.mxu0 0.0
  %1277 = vmatmul.mubr.f32.gmra.mrb[0].mxu0 %v1123
  %v1278 = vpop.f32.mrb[0].mxu0
  %v1279 = vadd.f32 0.0, %v1278
  %v1280 = vpop.f32.mrb[0].mxu0
  %1281 = vmatprep.mubr.f32.mxu0 0.0
  %1282 = vmatmul.mubr.f32.gmra.mrb[0].mxu0 %v1126
  %v1283 = vpop.f32.mrb[0].mxu0
  %v1284 = vadd.f32 0.0, %v1283
  %v1285 = vpop.f32.mrb[0].mxu0
  %1286 = vmatprep.mubr.f32.mxu0 0.0
  %1287 = vmatmul.mubr.f32.gmra.mrb[0].mxu0 %v1129
  %v1288 = vpop.f32.mrb[0].mxu0
  %v1289 = vadd.f32 0.0, %v1288
  %v1290 = vpop.f32.mrb[0].mxu0
  %1291 = vmatprep.mubr.f32.mxu0 0.0
  %1292 = vmatmul.mubr.f32.gmra.mrb[0].mxu0 %v1132
  %v1293 = vpop.f32.mrb[0].mxu0
  %v1294 = vadd.f32 0.0, %v1293
  %v1295 = vpop.f32.mrb[0].mxu0
  %1296 = vmatprep.mubr.f32.mxu0 0.0
  %1297 = vmatmul.mubr.f32.gmra.mrb[0].mxu0 %v1135
  %v1298 = vpop.f32.mrb[0].mxu0
  %v1299 = vadd.f32 0.0, %v1298
  %v1300 = vpop.f32.mrb[0].mxu0
  %1301 = vmatprep.mubr.f32.mxu0 0.0
  %1302 = vmatmul.mubr.f32.gmra.mrb[0].mxu0 %v1138
  %v1303 = vpop.f32.mrb[0].mxu0
  %v1304 = vadd.f32 0.0, %v1303
  %v1305 = vpop.f32.mrb[0].mxu0
  %1306 = vmatprep.mubr.f32.mxu0 0.0
  %1307 = vmatmul.mubr.f32.gmra.mrb[0].mxu0 %v1141
  %v1308 = vpop.f32.mrb[0].mxu0
  %v1309 = vadd.f32 0.0, %v1308
  %v1310 = vpop.f32.mrb[0].mxu0
  %1311 = vmatprep.mubr.f32.mxu0 0.0
  %1312 = vmatmul.mubr.f32.gmra.mrb[0].mxu0 %v1144
  %v1313 = vpop.f32.mrb[0].mxu0
  %v1314 = vadd.f32 0.0, %v1313
  %v1315 = vpop.f32.mrb[0].mxu0
  %1316 = vmatprep.mubr.f32.mxu0 0.0
  %1317 = vmatmul.mubr.f32.gmra.mrb[0].mxu0 %v1147
  %v1318 = vpop.f32.mrb[0].mxu0
  %v1319 = vadd.f32 0.0, %v1318
  %v1320 = vpop.f32.mrb[0].mxu0
  %1321 = vmatprep.mubr.f32.mxu0 0.0
  %1322 = vmatmul.mubr.f32.gmra.mrb[0].mxu0 %v1150
  %v1323 = vpop.f32.mrb[0].mxu0
  %v1324 = vadd.f32 0.0, %v1323
  %v1325 = vpop.f32.mrb[0].mxu0
  %1326 = vmatprep.mubr.f32.mxu0 0.0
  %1327 = vmatmul.mubr.f32.gmra.mrb[0].mxu0 %v1153
  %v1328 = vpop.f32.mrb[0].mxu0
  %v1329 = vadd.f32 0.0, %v1328
  %v1330 = vpop.f32.mrb[0].mxu0
  %1331 = vmatprep.mubr.f32.mxu0 0.0
  %1332 = vmatmul.mubr.f32.gmra.mrb[0].mxu0 %v1156
  %v1333 = vpop.f32.mrb[0].mxu0
  %v1334 = vadd.f32 0.0, %v1333
  %v1335 = vpop.f32.mrb[0].mxu0
  %1336 = vmatprep.mubr.f32.mxu0 0.0
  %1337 = vmatmul.mubr.f32.gmra.mrb[0].mxu0 %v1159
  %v1338 = vpop.f32.mrb[0].mxu0
  %v1339 = vadd.f32 0.0, %v1338
  %v1340 = vpop.f32.mrb[0].mxu0
  %1341 = vmatprep.mubr.f32.mxu0 0.0
  %1342 = vmatmul.mubr.f32.gmra.mrb[0].mxu0 %v1162
  %v1343 = vpop.f32.mrb[0].mxu0
  %v1344 = vadd.f32 0.0, %v1343
  %v1345 = vpop.f32.mrb[0].mxu0
  %1346 = vdwg.mxu0
  %v1347 = vadd.f32 %v1047, %v1234
  %v1348 = vadd.f32 %v1048, %v1239
  %v1349 = vadd.f32 %v1049, %v1244
  %v1350 = vadd.f32 %v1050, %v1249
  %v1351 = vadd.f32 %v1051, %v1254
  %v1352 = vadd.f32 %v1052, %v1259
  %v1353 = vadd.f32 %v1053, %v1264
  %v1354 = vadd.f32 %v1054, %v1269
  %v1355 = vadd.f32 %v1055, %v1274
  %v1356 = vadd.f32 %v1056, %v1279
  %v1357 = vadd.f32 %v1057, %v1284
  %v1358 = vadd.f32 %v1058, %v1289
  %v1359 = vadd.f32 %v1059, %v1294
  %v1360 = vadd.f32 %v1060, %v1299
  %v1361 = vadd.f32 %v1061, %v1304
  %v1362 = vadd.f32 %v1062, %v1309
  %v1363 = vadd.f32 %v1063, %v1314
  %v1364 = vadd.f32 %v1064, %v1319
  %v1365 = vadd.f32 %v1065, %v1324
  %v1366 = vadd.f32 %v1066, %v1329
  %v1367 = vadd.f32 %v1067, %v1334
  %v1368 = vadd.f32 %v1068, %v1339
  %v1369 = vadd.f32 %v1069, %v1344
  %v1370 = vld [vmem:[#allocation2 + $0xb] sm:$0xff]
  %v1371 = vld [vmem:[#allocation2 + $0x13] sm:$0xff]
  %v1372 = vld [vmem:[#allocation2 + $0x1b] sm:$0xff]
  %v1373 = vld [vmem:[#allocation2 + $0x23] sm:$0xff]
  %v1374 = vld [vmem:[#allocation2 + $0x2b] sm:$0xff]
  %v1375 = vld [vmem:[#allocation2 + $0x33] sm:$0xff]
  %v1376 = vld [vmem:[#allocation2 + $0x3b] sm:$0xff]
  %v1377 = vld [vmem:[#allocation2 + $0x43] sm:$0xff]
  %v1378 = vld [vmem:[#allocation2 + $0x4b] sm:$0xff]
  %v1379 = vld [vmem:[#allocation2 + $0x53] sm:$0xff]
  %v1380 = vld [vmem:[#allocation2 + $0x5b] sm:$0xff]
  %v1381 = vld [vmem:[#allocation2 + $0x63] sm:$0xff]
  %v1382 = vld [vmem:[#allocation2 + $0x6b] sm:$0xff]
  %v1383 = vld [vmem:[#allocation2 + $0x73] sm:$0xff]
  %v1384 = vld [vmem:[#allocation2 + $0x7b] sm:$0xff]
  %v1385 = vld [vmem:[#allocation2 + $0x83] sm:$0xff]
  %v1386 = vld [vmem:[#allocation2 + $0x8b] sm:$0xff]
  %v1387 = vld [vmem:[#allocation2 + $0x93] sm:$0xff]
  %v1388 = vld [vmem:[#allocation2 + $0x9b] sm:$0xff]
  %v1389 = vld [vmem:[#allocation2 + $0xa3] sm:$0xff]
  %v1390 = vld [vmem:[#allocation2 + $0xab] sm:$0xff]
  %v1391 = vld [vmem:[#allocation2 + $0xb3] sm:$0xff]
  %v1392 = vld [vmem:[#allocation2 + $0xbb] sm:$0xff]
  %s1393 = scalar_lea.vmem %s2, 16
  %v1394 = vld [vmem:[%s1393] sm:$0xf]
  %v1396 = vsel %vm29, %v1370, 0
  %v1399 = vsel %vm29, %v1371, 0
  %v1402 = vsel %vm29, %v1372, 0
  %v1405 = vsel %vm29, %v1373, 0
  %v1408 = vsel %vm29, %v1374, 0
  %v1411 = vsel %vm29, %v1375, 0
  %v1414 = vsel %vm29, %v1376, 0
  %v1417 = vsel %vm29, %v1377, 0
  %v1420 = vsel %vm29, %v1378, 0
  %v1423 = vsel %vm29, %v1379, 0
  %v1426 = vsel %vm29, %v1380, 0
  %v1429 = vsel %vm29, %v1381, 0
  %v1432 = vsel %vm29, %v1382, 0
  %v1435 = vsel %vm29, %v1383, 0
  %v1438 = vsel %vm29, %v1384, 0
  %v1441 = vsel %vm29, %v1385, 0
  %v1444 = vsel %vm29, %v1386, 0
  %v1447 = vsel %vm29, %v1387, 0
  %v1450 = vsel %vm29, %v1388, 0
  %v1453 = vsel %vm29, %v1389, 0
  %v1456 = vsel %vm29, %v1390, 0
  %v1459 = vsel %vm29, %v1391, 0
  %v1462 = vsel %vm29, %v1392, 0
  %v1465 = vsel %vm334, %v1394, 0
  %1467 = vmatprep.subr.mxu0 0.0
  %1468 = vmatpush1.msra.mxu0 %v1465
  %1469 = vmatprep.subr.mxu0 0.0
  %1470 = vmatpush1.msra.mxu0 0.0
  %1471 = vmatprep.subr.mxu0 0.0
  %1472 = vmatpush1.msra.mxu0 0.0
  %1473 = vmatprep.subr.mxu0 0.0
  %1474 = vmatpush1.msra.mxu0 0.0
  %1475 = vmatprep.subr.mxu0 0.0
  %1476 = vmatpush1.msra.mxu0 0.0
  %1477 = vmatprep.subr.mxu0 0.0
  %1478 = vmatpush1.msra.mxu0 0.0
  %1479 = vmatprep.subr.mxu0 0.0
  %1480 = vmatpush1.msra.mxu0 0.0
  %1481 = vmatprep.subr.mxu0 0.0
  %1482 = vmatpush1.msra.mxu0 0.0
  %1483 = vmatprep.subr.mxu0 0.0
  %1484 = vmatpush1.msra.mxu0 0.0
  %1485 = vmatprep.subr.mxu0 0.0
  %1486 = vmatpush1.msra.mxu0 0.0
  %1487 = vmatprep.subr.mxu0 0.0
  %1488 = vmatpush1.msra.mxu0 0.0
  %1489 = vmatprep.subr.mxu0 0.0
  %1490 = vmatpush1.msra.mxu0 0.0
  %1491 = vmatprep.subr.mxu0 0.0
  %1492 = vmatpush1.msra.mxu0 0.0
  %1493 = vmatprep.subr.mxu0 0.0
  %1494 = vmatpush1.msra.mxu0 0.0
  %1495 = vmatprep.subr.mxu0 0.0
  %1496 = vmatpush1.msra.mxu0 0.0
  %1497 = vmatprep.subr.mxu0 0.0
  %1498 = vmatpush1.msra.mxu0 0.0
  %1499 = vmatprep.subr.mxu0 0.0
  %1500 = vmatpush1.msra.mxu0 0.0
  %1501 = vmatprep.subr.mxu0 0.0
  %1502 = vmatpush1.msra.mxu0 0.0
  %1503 = vmatprep.subr.mxu0 0.0
  %1504 = vmatpush1.msra.mxu0 0.0
  %1505 = vmatprep.subr.mxu0 0.0
  %1506 = vmatpush1.msra.mxu0 0.0
  %1507 = vmatprep.subr.mxu0 0.0
  %1508 = vmatpush1.msra.mxu0 0.0
  %1509 = vmatprep.subr.mxu0 0.0
  %1510 = vmatpush1.msra.mxu0 0.0
  %1511 = vmatprep.subr.mxu0 0.0
  %1512 = vmatpush1.msra.mxu0 0.0
  %1513 = vmatprep.subr.mxu0 0.0
  %1514 = vmatpush1.msra.mxu0 0.0
  %1515 = vmatprep.subr.mxu0 0.0
  %1516 = vmatpush1.msra.mxu0 0.0
  %1517 = vmatprep.subr.mxu0 0.0
  %1518 = vmatpush1.msra.mxu0 0.0
  %1519 = vmatprep.subr.mxu0 0.0
  %1520 = vmatpush1.msra.mxu0 0.0
  %1521 = vmatprep.subr.mxu0 0.0
  %1522 = vmatpush1.msra.mxu0 0.0
  %1523 = vmatprep.subr.mxu0 0.0
  %1524 = vmatpush1.msra.mxu0 0.0
  %1525 = vmatprep.subr.mxu0 0.0
  %1526 = vmatpush1.msra.mxu0 0.0
  %1527 = vmatprep.subr.mxu0 0.0
  %1528 = vmatpush1.msra.mxu0 0.0
  %1529 = vmatprep.subr.mxu0 0.0
  %1530 = vmatpush1.msra.mxu0 0.0
  %1531 = vmatprep.mubr.f32.mxu0 0.0
  %1532 = vmatmul.mubr.f32.gmra.mrb[0].mxu0 %v1396
  %v1533 = vpop.f32.mrb[0].mxu0
  %v1534 = vadd.f32 0.0, %v1533
  %v1535 = vpop.f32.mrb[0].mxu0
  %1536 = vmatprep.mubr.f32.mxu0 0.0
  %1537 = vmatmul.mubr.f32.gmra.mrb[0].mxu0 %v1399
  %v1538 = vpop.f32.mrb[0].mxu0
  %v1539 = vadd.f32 0.0, %v1538
  %v1540 = vpop.f32.mrb[0].mxu0
  %1541 = vmatprep.mubr.f32.mxu0 0.0
  %1542 = vmatmul.mubr.f32.gmra.mrb[0].mxu0 %v1402
  %v1543 = vpop.f32.mrb[0].mxu0
  %v1544 = vadd.f32 0.0, %v1543
  %v1545 = vpop.f32.mrb[0].mxu0
  %1546 = vmatprep.mubr.f32.mxu0 0.0
  %1547 = vmatmul.mubr.f32.gmra.mrb[0].mxu0 %v1405
  %v1548 = vpop.f32.mrb[0].mxu0
  %v1549 = vadd.f32 0.0, %v1548
  %v1550 = vpop.f32.mrb[0].mxu0
  %1551 = vmatprep.mubr.f32.mxu0 0.0
  %1552 = vmatmul.mubr.f32.gmra.mrb[0].mxu0 %v1408
  %v1553 = vpop.f32.mrb[0].mxu0
  %v1554 = vadd.f32 0.0, %v1553
  %v1555 = vpop.f32.mrb[0].mxu0
  %1556 = vmatprep.mubr.f32.mxu0 0.0
  %1557 = vmatmul.mubr.f32.gmra.mrb[0].mxu0 %v1411
  %v1558 = vpop.f32.mrb[0].mxu0
  %v1559 = vadd.f32 0.0, %v1558
  %v1560 = vpop.f32.mrb[0].mxu0
  %1561 = vmatprep.mubr.f32.mxu0 0.0
  %1562 = vmatmul.mubr.f32.gmra.mrb[0].mxu0 %v1414
  %v1563 = vpop.f32.mrb[0].mxu0
  %v1564 = vadd.f32 0.0, %v1563
  %v1565 = vpop.f32.mrb[0].mxu0
  %1566 = vmatprep.mubr.f32.mxu0 0.0
  %1567 = vmatmul.mubr.f32.gmra.mrb[0].mxu0 %v1417
  %v1568 = vpop.f32.mrb[0].mxu0
  %v1569 = vadd.f32 0.0, %v1568
  %v1570 = vpop.f32.mrb[0].mxu0
  %1571 = vmatprep.mubr.f32.mxu0 0.0
  %1572 = vmatmul.mubr.f32.gmra.mrb[0].mxu0 %v1420
  %v1573 = vpop.f32.mrb[0].mxu0
  %v1574 = vadd.f32 0.0, %v1573
  %v1575 = vpop.f32.mrb[0].mxu0
  %1576 = vmatprep.mubr.f32.mxu0 0.0
  %1577 = vmatmul.mubr.f32.gmra.mrb[0].mxu0 %v1423
  %v1578 = vpop.f32.mrb[0].mxu0
  %v1579 = vadd.f32 0.0, %v1578
  %v1580 = vpop.f32.mrb[0].mxu0
  %1581 = vmatprep.mubr.f32.mxu0 0.0
  %1582 = vmatmul.mubr.f32.gmra.mrb[0].mxu0 %v1426
  %v1583 = vpop.f32.mrb[0].mxu0
  %v1584 = vadd.f32 0.0, %v1583
  %v1585 = vpop.f32.mrb[0].mxu0
  %1586 = vmatprep.mubr.f32.mxu0 0.0
  %1587 = vmatmul.mubr.f32.gmra.mrb[0].mxu0 %v1429
  %v1588 = vpop.f32.mrb[0].mxu0
  %v1589 = vadd.f32 0.0, %v1588
  %v1590 = vpop.f32.mrb[0].mxu0
  %1591 = vmatprep.mubr.f32.mxu0 0.0
  %1592 = vmatmul.mubr.f32.gmra.mrb[0].mxu0 %v1432
  %v1593 = vpop.f32.mrb[0].mxu0
  %v1594 = vadd.f32 0.0, %v1593
  %v1595 = vpop.f32.mrb[0].mxu0
  %1596 = vmatprep.mubr.f32.mxu0 0.0
  %1597 = vmatmul.mubr.f32.gmra.mrb[0].mxu0 %v1435
  %v1598 = vpop.f32.mrb[0].mxu0
  %v1599 = vadd.f32 0.0, %v1598
  %v1600 = vpop.f32.mrb[0].mxu0
  %1601 = vmatprep.mubr.f32.mxu0 0.0
  %1602 = vmatmul.mubr.f32.gmra.mrb[0].mxu0 %v1438
  %v1603 = vpop.f32.mrb[0].mxu0
  %v1604 = vadd.f32 0.0, %v1603
  %v1605 = vpop.f32.mrb[0].mxu0
  %1606 = vmatprep.mubr.f32.mxu0 0.0
  %1607 = vmatmul.mubr.f32.gmra.mrb[0].mxu0 %v1441
  %v1608 = vpop.f32.mrb[0].mxu0
  %v1609 = vadd.f32 0.0, %v1608
  %v1610 = vpop.f32.mrb[0].mxu0
  %1611 = vmatprep.mubr.f32.mxu0 0.0
  %1612 = vmatmul.mubr.f32.gmra.mrb[0].mxu0 %v1444
  %v1613 = vpop.f32.mrb[0].mxu0
  %v1614 = vadd.f32 0.0, %v1613
  %v1615 = vpop.f32.mrb[0].mxu0
  %1616 = vmatprep.mubr.f32.mxu0 0.0
  %1617 = vmatmul.mubr.f32.gmra.mrb[0].mxu0 %v1447
  %v1618 = vpop.f32.mrb[0].mxu0
  %v1619 = vadd.f32 0.0, %v1618
  %v1620 = vpop.f32.mrb[0].mxu0
  %1621 = vmatprep.mubr.f32.mxu0 0.0
  %1622 = vmatmul.mubr.f32.gmra.mrb[0].mxu0 %v1450
  %v1623 = vpop.f32.mrb[0].mxu0
  %v1624 = vadd.f32 0.0, %v1623
  %v1625 = vpop.f32.mrb[0].mxu0
  %1626 = vmatprep.mubr.f32.mxu0 0.0
  %1627 = vmatmul.mubr.f32.gmra.mrb[0].mxu0 %v1453
  %v1628 = vpop.f32.mrb[0].mxu0
  %v1629 = vadd.f32 0.0, %v1628
  %v1630 = vpop.f32.mrb[0].mxu0
  %1631 = vmatprep.mubr.f32.mxu0 0.0
  %1632 = vmatmul.mubr.f32.gmra.mrb[0].mxu0 %v1456
  %v1633 = vpop.f32.mrb[0].mxu0
  %v1634 = vadd.f32 0.0, %v1633
  %v1635 = vpop.f32.mrb[0].mxu0
  %1636 = vmatprep.mubr.f32.mxu0 0.0
  %1637 = vmatmul.mubr.f32.gmra.mrb[0].mxu0 %v1459
  %v1638 = vpop.f32.mrb[0].mxu0
  %v1639 = vadd.f32 0.0, %v1638
  %v1640 = vpop.f32.mrb[0].mxu0
  %1641 = vmatprep.mubr.f32.mxu0 0.0
  %1642 = vmatmul.mubr.f32.gmra.mrb[0].mxu0 %v1462
  %v1643 = vpop.f32.mrb[0].mxu0
  %v1644 = vadd.f32 0.0, %v1643
  %v1645 = vpop.f32.mrb[0].mxu0
  %1646 = vdwg.mxu0
  %v1647 = vadd.f32 %v1347, %v1534
  %v1648 = vadd.f32 %v1348, %v1539
  %v1649 = vadd.f32 %v1349, %v1544
  %v1650 = vadd.f32 %v1350, %v1549
  %v1651 = vadd.f32 %v1351, %v1554
  %v1652 = vadd.f32 %v1352, %v1559
  %v1653 = vadd.f32 %v1353, %v1564
  %v1654 = vadd.f32 %v1354, %v1569
  %v1655 = vadd.f32 %v1355, %v1574
  %v1656 = vadd.f32 %v1356, %v1579
  %v1657 = vadd.f32 %v1357, %v1584
  %v1658 = vadd.f32 %v1358, %v1589
  %v1659 = vadd.f32 %v1359, %v1594
  %v1660 = vadd.f32 %v1360, %v1599
  %v1661 = vadd.f32 %v1361, %v1604
  %v1662 = vadd.f32 %v1362, %v1609
  %v1663 = vadd.f32 %v1363, %v1614
  %v1664 = vadd.f32 %v1364, %v1619
  %v1665 = vadd.f32 %v1365, %v1624
  %v1666 = vadd.f32 %v1366, %v1629
  %v1667 = vadd.f32 %v1367, %v1634
  %v1668 = vadd.f32 %v1368, %v1639
  %v1669 = vadd.f32 %v1369, %v1644
  %v1670 = vld [vmem:[#allocation2 + $0xc] sm:$0xff]
  %v1671 = vld [vmem:[#allocation2 + $0x14] sm:$0xff]
  %v1672 = vld [vmem:[#allocation2 + $0x1c] sm:$0xff]
  %v1673 = vld [vmem:[#allocation2 + $0x24] sm:$0xff]
  %v1674 = vld [vmem:[#allocation2 + $0x2c] sm:$0xff]
  %v1675 = vld [vmem:[#allocation2 + $0x34] sm:$0xff]
  %v1676 = vld [vmem:[#allocation2 + $0x3c] sm:$0xff]
  %v1677 = vld [vmem:[#allocation2 + $0x44] sm:$0xff]
  %v1678 = vld [vmem:[#allocation2 + $0x4c] sm:$0xff]
  %v1679 = vld [vmem:[#allocation2 + $0x54] sm:$0xff]
  %v1680 = vld [vmem:[#allocation2 + $0x5c] sm:$0xff]
  %v1681 = vld [vmem:[#allocation2 + $0x64] sm:$0xff]
  %v1682 = vld [vmem:[#allocation2 + $0x6c] sm:$0xff]
  %v1683 = vld [vmem:[#allocation2 + $0x74] sm:$0xff]
  %v1684 = vld [vmem:[#allocation2 + $0x7c] sm:$0xff]
  %v1685 = vld [vmem:[#allocation2 + $0x84] sm:$0xff]
  %v1686 = vld [vmem:[#allocation2 + $0x8c] sm:$0xff]
  %v1687 = vld [vmem:[#allocation2 + $0x94] sm:$0xff]
  %v1688 = vld [vmem:[#allocation2 + $0x9c] sm:$0xff]
  %v1689 = vld [vmem:[#allocation2 + $0xa4] sm:$0xff]
  %v1690 = vld [vmem:[#allocation2 + $0xac] sm:$0xff]
  %v1691 = vld [vmem:[#allocation2 + $0xb4] sm:$0xff]
  %v1692 = vld [vmem:[#allocation2 + $0xbc] sm:$0xff]
  %s1693 = scalar_lea.vmem %s2, 20
  %v1694 = vld [vmem:[%s1693] sm:$0xf]
  %v1696 = vsel %vm29, %v1670, 0
  %v1699 = vsel %vm29, %v1671, 0
  %v1702 = vsel %vm29, %v1672, 0
  %v1705 = vsel %vm29, %v1673, 0
  %v1708 = vsel %vm29, %v1674, 0
  %v1711 = vsel %vm29, %v1675, 0
  %v1714 = vsel %vm29, %v1676, 0
  %v1717 = vsel %vm29, %v1677, 0
  %v1720 = vsel %vm29, %v1678, 0
  %v1723 = vsel %vm29, %v1679, 0
  %v1726 = vsel %vm29, %v1680, 0
  %v1729 = vsel %vm29, %v1681, 0
  %v1732 = vsel %vm29, %v1682, 0
  %v1735 = vsel %vm29, %v1683, 0
  %v1738 = vsel %vm29, %v1684, 0
  %v1741 = vsel %vm29, %v1685, 0
  %v1744 = vsel %vm29, %v1686, 0
  %v1747 = vsel %vm29, %v1687, 0
  %v1750 = vsel %vm29, %v1688, 0
  %v1753 = vsel %vm29, %v1689, 0
  %v1756 = vsel %vm29, %v1690, 0
  %v1759 = vsel %vm29, %v1691, 0
  %v1762 = vsel %vm29, %v1692, 0
  %v1765 = vsel %vm334, %v1694, 0
  %1767 = vmatprep.subr.mxu0 0.0
  %1768 = vmatpush1.msra.mxu0 %v1765
  %1769 = vmatprep.subr.mxu0 0.0
  %1770 = vmatpush1.msra.mxu0 0.0
  %1771 = vmatprep.subr.mxu0 0.0
  %1772 = vmatpush1.msra.mxu0 0.0
  %1773 = vmatprep.subr.mxu0 0.0
  %1774 = vmatpush1.msra.mxu0 0.0
  %1775 = vmatprep.subr.mxu0 0.0
  %1776 = vmatpush1.msra.mxu0 0.0
  %1777 = vmatprep.subr.mxu0 0.0
  %1778 = vmatpush1.msra.mxu0 0.0
  %1779 = vmatprep.subr.mxu0 0.0
  %1780 = vmatpush1.msra.mxu0 0.0
  %1781 = vmatprep.subr.mxu0 0.0
  %1782 = vmatpush1.msra.mxu0 0.0
  %1783 = vmatprep.subr.mxu0 0.0
  %1784 = vmatpush1.msra.mxu0 0.0
  %1785 = vmatprep.subr.mxu0 0.0
  %1786 = vmatpush1.msra.mxu0 0.0
  %1787 = vmatprep.subr.mxu0 0.0
  %1788 = vmatpush1.msra.mxu0 0.0
  %1789 = vmatprep.subr.mxu0 0.0
  %1790 = vmatpush1.msra.mxu0 0.0
  %1791 = vmatprep.subr.mxu0 0.0
  %1792 = vmatpush1.msra.mxu0 0.0
  %1793 = vmatprep.subr.mxu0 0.0
  %1794 = vmatpush1.msra.mxu0 0.0
  %1795 = vmatprep.subr.mxu0 0.0
  %1796 = vmatpush1.msra.mxu0 0.0
  %1797 = vmatprep.subr.mxu0 0.0
  %1798 = vmatpush1.msra.mxu0 0.0
  %1799 = vmatprep.subr.mxu0 0.0
  %1800 = vmatpush1.msra.mxu0 0.0
  %1801 = vmatprep.subr.mxu0 0.0
  %1802 = vmatpush1.msra.mxu0 0.0
  %1803 = vmatprep.subr.mxu0 0.0
  %1804 = vmatpush1.msra.mxu0 0.0
  %1805 = vmatprep.subr.mxu0 0.0
  %1806 = vmatpush1.msra.mxu0 0.0
  %1807 = vmatprep.subr.mxu0 0.0
  %1808 = vmatpush1.msra.mxu0 0.0
  %1809 = vmatprep.subr.mxu0 0.0
  %1810 = vmatpush1.msra.mxu0 0.0
  %1811 = vmatprep.subr.mxu0 0.0
  %1812 = vmatpush1.msra.mxu0 0.0
  %1813 = vmatprep.subr.mxu0 0.0
  %1814 = vmatpush1.msra.mxu0 0.0
  %1815 = vmatprep.subr.mxu0 0.0
  %1816 = vmatpush1.msra.mxu0 0.0
  %1817 = vmatprep.subr.mxu0 0.0
  %1818 = vmatpush1.msra.mxu0 0.0
  %1819 = vmatprep.subr.mxu0 0.0
  %1820 = vmatpush1.msra.mxu0 0.0
  %1821 = vmatprep.subr.mxu0 0.0
  %1822 = vmatpush1.msra.mxu0 0.0
  %1823 = vmatprep.subr.mxu0 0.0
  %1824 = vmatpush1.msra.mxu0 0.0
  %1825 = vmatprep.subr.mxu0 0.0
  %1826 = vmatpush1.msra.mxu0 0.0
  %1827 = vmatprep.subr.mxu0 0.0
  %1828 = vmatpush1.msra.mxu0 0.0
  %1829 = vmatprep.subr.mxu0 0.0
  %1830 = vmatpush1.msra.mxu0 0.0
  %1831 = vmatprep.mubr.f32.mxu0 0.0
  %1832 = vmatmul.mubr.f32.gmra.mrb[0].mxu0 %v1696
  %v1833 = vpop.f32.mrb[0].mxu0
  %v1834 = vadd.f32 0.0, %v1833
  %v1835 = vpop.f32.mrb[0].mxu0
  %1836 = vmatprep.mubr.f32.mxu0 0.0
  %1837 = vmatmul.mubr.f32.gmra.mrb[0].mxu0 %v1699
  %v1838 = vpop.f32.mrb[0].mxu0
  %v1839 = vadd.f32 0.0, %v1838
  %v1840 = vpop.f32.mrb[0].mxu0
  %1841 = vmatprep.mubr.f32.mxu0 0.0
  %1842 = vmatmul.mubr.f32.gmra.mrb[0].mxu0 %v1702
  %v1843 = vpop.f32.mrb[0].mxu0
  %v1844 = vadd.f32 0.0, %v1843
  %v1845 = vpop.f32.mrb[0].mxu0
  %1846 = vmatprep.mubr.f32.mxu0 0.0
  %1847 = vmatmul.mubr.f32.gmra.mrb[0].mxu0 %v1705
  %v1848 = vpop.f32.mrb[0].mxu0
  %v1849 = vadd.f32 0.0, %v1848
  %v1850 = vpop.f32.mrb[0].mxu0
  %1851 = vmatprep.mubr.f32.mxu0 0.0
  %1852 = vmatmul.mubr.f32.gmra.mrb[0].mxu0 %v1708
  %v1853 = vpop.f32.mrb[0].mxu0
  %v1854 = vadd.f32 0.0, %v1853
  %v1855 = vpop.f32.mrb[0].mxu0
  %1856 = vmatprep.mubr.f32.mxu0 0.0
  %1857 = vmatmul.mubr.f32.gmra.mrb[0].mxu0 %v1711
  %v1858 = vpop.f32.mrb[0].mxu0
  %v1859 = vadd.f32 0.0, %v1858
  %v1860 = vpop.f32.mrb[0].mxu0
  %1861 = vmatprep.mubr.f32.mxu0 0.0
  %1862 = vmatmul.mubr.f32.gmra.mrb[0].mxu0 %v1714
  %v1863 = vpop.f32.mrb[0].mxu0
  %v1864 = vadd.f32 0.0, %v1863
  %v1865 = vpop.f32.mrb[0].mxu0
  %1866 = vmatprep.mubr.f32.mxu0 0.0
  %1867 = vmatmul.mubr.f32.gmra.mrb[0].mxu0 %v1717
  %v1868 = vpop.f32.mrb[0].mxu0
  %v1869 = vadd.f32 0.0, %v1868
  %v1870 = vpop.f32.mrb[0].mxu0
  %1871 = vmatprep.mubr.f32.mxu0 0.0
  %1872 = vmatmul.mubr.f32.gmra.mrb[0].mxu0 %v1720
  %v1873 = vpop.f32.mrb[0].mxu0
  %v1874 = vadd.f32 0.0, %v1873
  %v1875 = vpop.f32.mrb[0].mxu0
  %1876 = vmatprep.mubr.f32.mxu0 0.0
  %1877 = vmatmul.mubr.f32.gmra.mrb[0].mxu0 %v1723
  %v1878 = vpop.f32.mrb[0].mxu0
  %v1879 = vadd.f32 0.0, %v1878
  %v1880 = vpop.f32.mrb[0].mxu0
  %1881 = vmatprep.mubr.f32.mxu0 0.0
  %1882 = vmatmul.mubr.f32.gmra.mrb[0].mxu0 %v1726
  %v1883 = vpop.f32.mrb[0].mxu0
  %v1884 = vadd.f32 0.0, %v1883
  %v1885 = vpop.f32.mrb[0].mxu0
  %1886 = vmatprep.mubr.f32.mxu0 0.0
  %1887 = vmatmul.mubr.f32.gmra.mrb[0].mxu0 %v1729
  %v1888 = vpop.f32.mrb[0].mxu0
  %v1889 = vadd.f32 0.0, %v1888
  %v1890 = vpop.f32.mrb[0].mxu0
  %1891 = vmatprep.mubr.f32.mxu0 0.0
  %1892 = vmatmul.mubr.f32.gmra.mrb[0].mxu0 %v1732
  %v1893 = vpop.f32.mrb[0].mxu0
  %v1894 = vadd.f32 0.0, %v1893
  %v1895 = vpop.f32.mrb[0].mxu0
  %1896 = vmatprep.mubr.f32.mxu0 0.0
  %1897 = vmatmul.mubr.f32.gmra.mrb[0].mxu0 %v1735
  %v1898 = vpop.f32.mrb[0].mxu0
  %v1899 = vadd.f32 0.0, %v1898
  %v1900 = vpop.f32.mrb[0].mxu0
  %1901 = vmatprep.mubr.f32.mxu0 0.0
  %1902 = vmatmul.mubr.f32.gmra.mrb[0].mxu0 %v1738
  %v1903 = vpop.f32.mrb[0].mxu0
  %v1904 = vadd.f32 0.0, %v1903
  %v1905 = vpop.f32.mrb[0].mxu0
  %1906 = vmatprep.mubr.f32.mxu0 0.0
  %1907 = vmatmul.mubr.f32.gmra.mrb[0].mxu0 %v1741
  %v1908 = vpop.f32.mrb[0].mxu0
  %v1909 = vadd.f32 0.0, %v1908
  %v1910 = vpop.f32.mrb[0].mxu0
  %1911 = vmatprep.mubr.f32.mxu0 0.0
  %1912 = vmatmul.mubr.f32.gmra.mrb[0].mxu0 %v1744
  %v1913 = vpop.f32.mrb[0].mxu0
  %v1914 = vadd.f32 0.0, %v1913
  %v1915 = vpop.f32.mrb[0].mxu0
  %1916 = vmatprep.mubr.f32.mxu0 0.0
  %1917 = vmatmul.mubr.f32.gmra.mrb[0].mxu0 %v1747
  %v1918 = vpop.f32.mrb[0].mxu0
  %v1919 = vadd.f32 0.0, %v1918
  %v1920 = vpop.f32.mrb[0].mxu0
  %1921 = vmatprep.mubr.f32.mxu0 0.0
  %1922 = vmatmul.mubr.f32.gmra.mrb[0].mxu0 %v1750
  %v1923 = vpop.f32.mrb[0].mxu0
  %v1924 = vadd.f32 0.0, %v1923
  %v1925 = vpop.f32.mrb[0].mxu0
  %1926 = vmatprep.mubr.f32.mxu0 0.0
  %1927 = vmatmul.mubr.f32.gmra.mrb[0].mxu0 %v1753
  %v1928 = vpop.f32.mrb[0].mxu0
  %v1929 = vadd.f32 0.0, %v1928
  %v1930 = vpop.f32.mrb[0].mxu0
  %1931 = vmatprep.mubr.f32.mxu0 0.0
  %1932 = vmatmul.mubr.f32.gmra.mrb[0].mxu0 %v1756
  %v1933 = vpop.f32.mrb[0].mxu0
  %v1934 = vadd.f32 0.0, %v1933
  %v1935 = vpop.f32.mrb[0].mxu0
  %1936 = vmatprep.mubr.f32.mxu0 0.0
  %1937 = vmatmul.mubr.f32.gmra.mrb[0].mxu0 %v1759
  %v1938 = vpop.f32.mrb[0].mxu0
  %v1939 = vadd.f32 0.0, %v1938
  %v1940 = vpop.f32.mrb[0].mxu0
  %1941 = vmatprep.mubr.f32.mxu0 0.0
  %1942 = vmatmul.mubr.f32.gmra.mrb[0].mxu0 %v1762
  %v1943 = vpop.f32.mrb[0].mxu0
  %v1944 = vadd.f32 0.0, %v1943
  %v1945 = vpop.f32.mrb[0].mxu0
  %1946 = vdwg.mxu0
  %v1947 = vadd.f32 %v1647, %v1834
  %v1948 = vadd.f32 %v1648, %v1839
  %v1949 = vadd.f32 %v1649, %v1844
  %v1950 = vadd.f32 %v1650, %v1849
  %v1951 = vadd.f32 %v1651, %v1854
  %v1952 = vadd.f32 %v1652, %v1859
  %v1953 = vadd.f32 %v1653, %v1864
  %v1954 = vadd.f32 %v1654, %v1869
  %v1955 = vadd.f32 %v1655, %v1874
  %v1956 = vadd.f32 %v1656, %v1879
  %v1957 = vadd.f32 %v1657, %v1884
  %v1958 = vadd.f32 %v1658, %v1889
  %v1959 = vadd.f32 %v1659, %v1894
  %v1960 = vadd.f32 %v1660, %v1899
  %v1961 = vadd.f32 %v1661, %v1904
  %v1962 = vadd.f32 %v1662, %v1909
  %v1963 = vadd.f32 %v1663, %v1914
  %v1964 = vadd.f32 %v1664, %v1919
  %v1965 = vadd.f32 %v1665, %v1924
  %v1966 = vadd.f32 %v1666, %v1929
  %v1967 = vadd.f32 %v1667, %v1934
  %v1968 = vadd.f32 %v1668, %v1939
  %v1969 = vadd.f32 %v1669, %v1944
  %v1970 = vld [vmem:[#allocation2 + $0x14] sm:$0xff]
  %v1971 = vld [vmem:[#allocation2 + $0x1c] sm:$0xff]
  %v1972 = vld [vmem:[#allocation2 + $0x24] sm:$0xff]
  %v1973 = vld [vmem:[#allocation2 + $0x2c] sm:$0xff]
  %v1974 = vld [vmem:[#allocation2 + $0x34] sm:$0xff]
  %v1975 = vld [vmem:[#allocation2 + $0x3c] sm:$0xff]
  %v1976 = vld [vmem:[#allocation2 + $0x44] sm:$0xff]
  %v1977 = vld [vmem:[#allocation2 + $0x4c] sm:$0xff]
  %v1978 = vld [vmem:[#allocation2 + $0x54] sm:$0xff]
  %v1979 = vld [vmem:[#allocation2 + $0x5c] sm:$0xff]
  %v1980 = vld [vmem:[#allocation2 + $0x64] sm:$0xff]
  %v1981 = vld [vmem:[#allocation2 + $0x6c] sm:$0xff]
  %v1982 = vld [vmem:[#allocation2 + $0x74] sm:$0xff]
  %v1983 = vld [vmem:[#allocation2 + $0x7c] sm:$0xff]
  %v1984 = vld [vmem:[#allocation2 + $0x84] sm:$0xff]
  %v1985 = vld [vmem:[#allocation2 + $0x8c] sm:$0xff]
  %v1986 = vld [vmem:[#allocation2 + $0x94] sm:$0xff]
  %v1987 = vld [vmem:[#allocation2 + $0x9c] sm:$0xff]
  %v1988 = vld [vmem:[#allocation2 + $0xa4] sm:$0xff]
  %v1989 = vld [vmem:[#allocation2 + $0xac] sm:$0xff]
  %v1990 = vld [vmem:[#allocation2 + $0xb4] sm:$0xff]
  %v1991 = vld [vmem:[#allocation2 + $0xbc] sm:$0xff]
  %v1992 = vld [vmem:[#allocation2 + $0xc4] sm:$0xff]
  %s1993 = scalar_lea.vmem %s2, 24
  %v1994 = vld [vmem:[%s1993] sm:$0xf]
  %v1996 = vsel %vm29, %v1970, 0
  %v1999 = vsel %vm29, %v1971, 0
  %v2002 = vsel %vm29, %v1972, 0
  %v2005 = vsel %vm29, %v1973, 0
  %v2008 = vsel %vm29, %v1974, 0
  %v2011 = vsel %vm29, %v1975, 0
  %v2014 = vsel %vm29, %v1976, 0
  %v2017 = vsel %vm29, %v1977, 0
  %v2020 = vsel %vm29, %v1978, 0
  %v2023 = vsel %vm29, %v1979, 0
  %v2026 = vsel %vm29, %v1980, 0
  %v2029 = vsel %vm29, %v1981, 0
  %v2032 = vsel %vm29, %v1982, 0
  %v2035 = vsel %vm29, %v1983, 0
  %v2038 = vsel %vm29, %v1984, 0
  %v2041 = vsel %vm29, %v1985, 0
  %v2044 = vsel %vm29, %v1986, 0
  %v2047 = vsel %vm29, %v1987, 0
  %v2050 = vsel %vm29, %v1988, 0
  %v2053 = vsel %vm29, %v1989, 0
  %v2056 = vsel %vm29, %v1990, 0
  %v2059 = vsel %vm29, %v1991, 0
  %v2062 = vsel %vm29, %v1992, 0
  %v2065 = vsel %vm334, %v1994, 0
  %2067 = vmatprep.subr.mxu0 0.0
  %2068 = vmatpush1.msra.mxu0 %v2065
  %2069 = vmatprep.subr.mxu0 0.0
  %2070 = vmatpush1.msra.mxu0 0.0
  %2071 = vmatprep.subr.mxu0 0.0
  %2072 = vmatpush1.msra.mxu0 0.0
  %2073 = vmatprep.subr.mxu0 0.0
  %2074 = vmatpush1.msra.mxu0 0.0
  %2075 = vmatprep.subr.mxu0 0.0
  %2076 = vmatpush1.msra.mxu0 0.0
  %2077 = vmatprep.subr.mxu0 0.0
  %2078 = vmatpush1.msra.mxu0 0.0
  %2079 = vmatprep.subr.mxu0 0.0
  %2080 = vmatpush1.msra.mxu0 0.0
  %2081 = vmatprep.subr.mxu0 0.0
  %2082 = vmatpush1.msra.mxu0 0.0
  %2083 = vmatprep.subr.mxu0 0.0
  %2084 = vmatpush1.msra.mxu0 0.0
  %2085 = vmatprep.subr.mxu0 0.0
  %2086 = vmatpush1.msra.mxu0 0.0
  %2087 = vmatprep.subr.mxu0 0.0
  %2088 = vmatpush1.msra.mxu0 0.0
  %2089 = vmatprep.subr.mxu0 0.0
  %2090 = vmatpush1.msra.mxu0 0.0
  %2091 = vmatprep.subr.mxu0 0.0
  %2092 = vmatpush1.msra.mxu0 0.0
  %2093 = vmatprep.subr.mxu0 0.0
  %2094 = vmatpush1.msra.mxu0 0.0
  %2095 = vmatprep.subr.mxu0 0.0
  %2096 = vmatpush1.msra.mxu0 0.0
  %2097 = vmatprep.subr.mxu0 0.0
  %2098 = vmatpush1.msra.mxu0 0.0
  %2099 = vmatprep.subr.mxu0 0.0
  %2100 = vmatpush1.msra.mxu0 0.0
  %2101 = vmatprep.subr.mxu0 0.0
  %2102 = vmatpush1.msra.mxu0 0.0
  %2103 = vmatprep.subr.mxu0 0.0
  %2104 = vmatpush1.msra.mxu0 0.0
  %2105 = vmatprep.subr.mxu0 0.0
  %2106 = vmatpush1.msra.mxu0 0.0
  %2107 = vmatprep.subr.mxu0 0.0
  %2108 = vmatpush1.msra.mxu0 0.0
  %2109 = vmatprep.subr.mxu0 0.0
  %2110 = vmatpush1.msra.mxu0 0.0
  %2111 = vmatprep.subr.mxu0 0.0
  %2112 = vmatpush1.msra.mxu0 0.0
  %2113 = vmatprep.subr.mxu0 0.0
  %2114 = vmatpush1.msra.mxu0 0.0
  %2115 = vmatprep.subr.mxu0 0.0
  %2116 = vmatpush1.msra.mxu0 0.0
  %2117 = vmatprep.subr.mxu0 0.0
  %2118 = vmatpush1.msra.mxu0 0.0
  %2119 = vmatprep.subr.mxu0 0.0
  %2120 = vmatpush1.msra.mxu0 0.0
  %2121 = vmatprep.subr.mxu0 0.0
  %2122 = vmatpush1.msra.mxu0 0.0
  %2123 = vmatprep.subr.mxu0 0.0
  %2124 = vmatpush1.msra.mxu0 0.0
  %2125 = vmatprep.subr.mxu0 0.0
  %2126 = vmatpush1.msra.mxu0 0.0
  %2127 = vmatprep.subr.mxu0 0.0
  %2128 = vmatpush1.msra.mxu0 0.0
  %2129 = vmatprep.subr.mxu0 0.0
  %2130 = vmatpush1.msra.mxu0 0.0
  %2131 = vmatprep.mubr.f32.mxu0 0.0
  %2132 = vmatmul.mubr.f32.gmra.mrb[0].mxu0 %v1996
  %v2133 = vpop.f32.mrb[0].mxu0
  %v2134 = vadd.f32 0.0, %v2133
  %v2135 = vpop.f32.mrb[0].mxu0
  %2136 = vmatprep.mubr.f32.mxu0 0.0
  %2137 = vmatmul.mubr.f32.gmra.mrb[0].mxu0 %v1999
  %v2138 = vpop.f32.mrb[0].mxu0
  %v2139 = vadd.f32 0.0, %v2138
  %v2140 = vpop.f32.mrb[0].mxu0
  %2141 = vmatprep.mubr.f32.mxu0 0.0
  %2142 = vmatmul.mubr.f32.gmra.mrb[0].mxu0 %v2002
  %v2143 = vpop.f32.mrb[0].mxu0
  %v2144 = vadd.f32 0.0, %v2143
  %v2145 = vpop.f32.mrb[0].mxu0
  %2146 = vmatprep.mubr.f32.mxu0 0.0
  %2147 = vmatmul.mubr.f32.gmra.mrb[0].mxu0 %v2005
  %v2148 = vpop.f32.mrb[0].mxu0
  %v2149 = vadd.f32 0.0, %v2148
  %v2150 = vpop.f32.mrb[0].mxu0
  %2151 = vmatprep.mubr.f32.mxu0 0.0
  %2152 = vmatmul.mubr.f32.gmra.mrb[0].mxu0 %v2008
  %v2153 = vpop.f32.mrb[0].mxu0
  %v2154 = vadd.f32 0.0, %v2153
  %v2155 = vpop.f32.mrb[0].mxu0
  %2156 = vmatprep.mubr.f32.mxu0 0.0
  %2157 = vmatmul.mubr.f32.gmra.mrb[0].mxu0 %v2011
  %v2158 = vpop.f32.mrb[0].mxu0
  %v2159 = vadd.f32 0.0, %v2158
  %v2160 = vpop.f32.mrb[0].mxu0
  %2161 = vmatprep.mubr.f32.mxu0 0.0
  %2162 = vmatmul.mubr.f32.gmra.mrb[0].mxu0 %v2014
  %v2163 = vpop.f32.mrb[0].mxu0
  %v2164 = vadd.f32 0.0, %v2163
  %v2165 = vpop.f32.mrb[0].mxu0
  %2166 = vmatprep.mubr.f32.mxu0 0.0
  %2167 = vmatmul.mubr.f32.gmra.mrb[0].mxu0 %v2017
  %v2168 = vpop.f32.mrb[0].mxu0
  %v2169 = vadd.f32 0.0, %v2168
  %v2170 = vpop.f32.mrb[0].mxu0
  %2171 = vmatprep.mubr.f32.mxu0 0.0
  %2172 = vmatmul.mubr.f32.gmra.mrb[0].mxu0 %v2020
  %v2173 = vpop.f32.mrb[0].mxu0
  %v2174 = vadd.f32 0.0, %v2173
  %v2175 = vpop.f32.mrb[0].mxu0
  %2176 = vmatprep.mubr.f32.mxu0 0.0
  %2177 = vmatmul.mubr.f32.gmra.mrb[0].mxu0 %v2023
  %v2178 = vpop.f32.mrb[0].mxu0
  %v2179 = vadd.f32 0.0, %v2178
  %v2180 = vpop.f32.mrb[0].mxu0
  %2181 = vmatprep.mubr.f32.mxu0 0.0
  %2182 = vmatmul.mubr.f32.gmra.mrb[0].mxu0 %v2026
  %v2183 = vpop.f32.mrb[0].mxu0
  %v2184 = vadd.f32 0.0, %v2183
  %v2185 = vpop.f32.mrb[0].mxu0
  %2186 = vmatprep.mubr.f32.mxu0 0.0
  %2187 = vmatmul.mubr.f32.gmra.mrb[0].mxu0 %v2029
  %v2188 = vpop.f32.mrb[0].mxu0
  %v2189 = vadd.f32 0.0, %v2188
  %v2190 = vpop.f32.mrb[0].mxu0
  %2191 = vmatprep.mubr.f32.mxu0 0.0
  %2192 = vmatmul.mubr.f32.gmra.mrb[0].mxu0 %v2032
  %v2193 = vpop.f32.mrb[0].mxu0
  %v2194 = vadd.f32 0.0, %v2193
  %v2195 = vpop.f32.mrb[0].mxu0
  %2196 = vmatprep.mubr.f32.mxu0 0.0
  %2197 = vmatmul.mubr.f32.gmra.mrb[0].mxu0 %v2035
  %v2198 = vpop.f32.mrb[0].mxu0
  %v2199 = vadd.f32 0.0, %v2198
  %v2200 = vpop.f32.mrb[0].mxu0
  %2201 = vmatprep.mubr.f32.mxu0 0.0
  %2202 = vmatmul.mubr.f32.gmra.mrb[0].mxu0 %v2038
  %v2203 = vpop.f32.mrb[0].mxu0
  %v2204 = vadd.f32 0.0, %v2203
  %v2205 = vpop.f32.mrb[0].mxu0
  %2206 = vmatprep.mubr.f32.mxu0 0.0
  %2207 = vmatmul.mubr.f32.gmra.mrb[0].mxu0 %v2041
  %v2208 = vpop.f32.mrb[0].mxu0
  %v2209 = vadd.f32 0.0, %v2208
  %v2210 = vpop.f32.mrb[0].mxu0
  %2211 = vmatprep.mubr.f32.mxu0 0.0
  %2212 = vmatmul.mubr.f32.gmra.mrb[0].mxu0 %v2044
  %v2213 = vpop.f32.mrb[0].mxu0
  %v2214 = vadd.f32 0.0, %v2213
  %v2215 = vpop.f32.mrb[0].mxu0
  %2216 = vmatprep.mubr.f32.mxu0 0.0
  %2217 = vmatmul.mubr.f32.gmra.mrb[0].mxu0 %v2047
  %v2218 = vpop.f32.mrb[0].mxu0
  %v2219 = vadd.f32 0.0, %v2218
  %v2220 = vpop.f32.mrb[0].mxu0
  %2221 = vmatprep.mubr.f32.mxu0 0.0
  %2222 = vmatmul.mubr.f32.gmra.mrb[0].mxu0 %v2050
  %v2223 = vpop.f32.mrb[0].mxu0
  %v2224 = vadd.f32 0.0, %v2223
  %v2225 = vpop.f32.mrb[0].mxu0
  %2226 = vmatprep.mubr.f32.mxu0 0.0
  %2227 = vmatmul.mubr.f32.gmra.mrb[0].mxu0 %v2053
  %v2228 = vpop.f32.mrb[0].mxu0
  %v2229 = vadd.f32 0.0, %v2228
  %v2230 = vpop.f32.mrb[0].mxu0
  %2231 = vmatprep.mubr.f32.mxu0 0.0
  %2232 = vmatmul.mubr.f32.gmra.mrb[0].mxu0 %v2056
  %v2233 = vpop.f32.mrb[0].mxu0
  %v2234 = vadd.f32 0.0, %v2233
  %v2235 = vpop.f32.mrb[0].mxu0
  %2236 = vmatprep.mubr.f32.mxu0 0.0
  %2237 = vmatmul.mubr.f32.gmra.mrb[0].mxu0 %v2059
  %v2238 = vpop.f32.mrb[0].mxu0
  %v2239 = vadd.f32 0.0, %v2238
  %v2240 = vpop.f32.mrb[0].mxu0
  %2241 = vmatprep.mubr.f32.mxu0 0.0
  %2242 = vmatmul.mubr.f32.gmra.mrb[0].mxu0 %v2062
  %v2243 = vpop.f32.mrb[0].mxu0
  %v2244 = vadd.f32 0.0, %v2243
  %v2245 = vpop.f32.mrb[0].mxu0
  %2246 = vdwg.mxu0
  %v2247 = vadd.f32 %v1947, %v2134
  %v2248 = vadd.f32 %v1948, %v2139
  %v2249 = vadd.f32 %v1949, %v2144
  %v2250 = vadd.f32 %v1950, %v2149
  %v2251 = vadd.f32 %v1951, %v2154
  %v2252 = vadd.f32 %v1952, %v2159
  %v2253 = vadd.f32 %v1953, %v2164
  %v2254 = vadd.f32 %v1954, %v2169
  %v2255 = vadd.f32 %v1955, %v2174
  %v2256 = vadd.f32 %v1956, %v2179
  %v2257 = vadd.f32 %v1957, %v2184
  %v2258 = vadd.f32 %v1958, %v2189
  %v2259 = vadd.f32 %v1959, %v2194
  %v2260 = vadd.f32 %v1960, %v2199
  %v2261 = vadd.f32 %v1961, %v2204
  %v2262 = vadd.f32 %v1962, %v2209
  %v2263 = vadd.f32 %v1963, %v2214
  %v2264 = vadd.f32 %v1964, %v2219
  %v2265 = vadd.f32 %v1965, %v2224
  %v2266 = vadd.f32 %v1966, %v2229
  %v2267 = vadd.f32 %v1967, %v2234
  %v2268 = vadd.f32 %v1968, %v2239
  %v2269 = vadd.f32 %v1969, %v2244
  %v2270 = vld [vmem:[#allocation2 + $0x15] sm:$0xff]
  %v2271 = vld [vmem:[#allocation2 + $0x1d] sm:$0xff]
  %v2272 = vld [vmem:[#allocation2 + $0x25] sm:$0xff]
  %v2273 = vld [vmem:[#allocation2 + $0x2d] sm:$0xff]
  %v2274 = vld [vmem:[#allocation2 + $0x35] sm:$0xff]
  %v2275 = vld [vmem:[#allocation2 + $0x3d] sm:$0xff]
  %v2276 = vld [vmem:[#allocation2 + $0x45] sm:$0xff]
  %v2277 = vld [vmem:[#allocation2 + $0x4d] sm:$0xff]
  %v2278 = vld [vmem:[#allocation2 + $0x55] sm:$0xff]
  %v2279 = vld [vmem:[#allocation2 + $0x5d] sm:$0xff]
  %v2280 = vld [vmem:[#allocation2 + $0x65] sm:$0xff]
  %v2281 = vld [vmem:[#allocation2 + $0x6d] sm:$0xff]
  %v2282 = vld [vmem:[#allocation2 + $0x75] sm:$0xff]
  %v2283 = vld [vmem:[#allocation2 + $0x7d] sm:$0xff]
  %v2284 = vld [vmem:[#allocation2 + $0x85] sm:$0xff]
  %v2285 = vld [vmem:[#allocation2 + $0x8d] sm:$0xff]
  %v2286 = vld [vmem:[#allocation2 + $0x95] sm:$0xff]
  %v2287 = vld [vmem:[#allocation2 + $0x9d] sm:$0xff]
  %v2288 = vld [vmem:[#allocation2 + $0xa5] sm:$0xff]
  %v2289 = vld [vmem:[#allocation2 + $0xad] sm:$0xff]
  %v2290 = vld [vmem:[#allocation2 + $0xb5] sm:$0xff]
  %v2291 = vld [vmem:[#allocation2 + $0xbd] sm:$0xff]
  %v2292 = vld [vmem:[#allocation2 + $0xc5] sm:$0xff]
  %s2293 = scalar_lea.vmem %s2, 28
  %v2294 = vld [vmem:[%s2293] sm:$0xf]
  %v2296 = vsel %vm29, %v2270, 0
  %v2299 = vsel %vm29, %v2271, 0
  %v2302 = vsel %vm29, %v2272, 0
  %v2305 = vsel %vm29, %v2273, 0
  %v2308 = vsel %vm29, %v2274, 0
  %v2311 = vsel %vm29, %v2275, 0
  %v2314 = vsel %vm29, %v2276, 0
  %v2317 = vsel %vm29, %v2277, 0
  %v2320 = vsel %vm29, %v2278, 0
  %v2323 = vsel %vm29, %v2279, 0
  %v2326 = vsel %vm29, %v2280, 0
  %v2329 = vsel %vm29, %v2281, 0
  %v2332 = vsel %vm29, %v2282, 0
  %v2335 = vsel %vm29, %v2283, 0
  %v2338 = vsel %vm29, %v2284, 0
  %v2341 = vsel %vm29, %v2285, 0
  %v2344 = vsel %vm29, %v2286, 0
  %v2347 = vsel %vm29, %v2287, 0
  %v2350 = vsel %vm29, %v2288, 0
  %v2353 = vsel %vm29, %v2289, 0
  %v2356 = vsel %vm29, %v2290, 0
  %v2359 = vsel %vm29, %v2291, 0
  %v2362 = vsel %vm29, %v2292, 0
  %v2365 = vsel %vm334, %v2294, 0
  %2367 = vmatprep.subr.mxu0 0.0
  %2368 = vmatpush1.msra.mxu0 %v2365
  %2369 = vmatprep.subr.mxu0 0.0
  %2370 = vmatpush1.msra.mxu0 0.0
  %2371 = vmatprep.subr.mxu0 0.0
  %2372 = vmatpush1.msra.mxu0 0.0
  %2373 = vmatprep.subr.mxu0 0.0
  %2374 = vmatpush1.msra.mxu0 0.0
  %2375 = vmatprep.subr.mxu0 0.0
  %2376 = vmatpush1.msra.mxu0 0.0
  %2377 = vmatprep.subr.mxu0 0.0
  %2378 = vmatpush1.msra.mxu0 0.0
  %2379 = vmatprep.subr.mxu0 0.0
  %2380 = vmatpush1.msra.mxu0 0.0
  %2381 = vmatprep.subr.mxu0 0.0
  %2382 = vmatpush1.msra.mxu0 0.0
  %2383 = vmatprep.subr.mxu0 0.0
  %2384 = vmatpush1.msra.mxu0 0.0
  %2385 = vmatprep.subr.mxu0 0.0
  %2386 = vmatpush1.msra.mxu0 0.0
  %2387 = vmatprep.subr.mxu0 0.0
  %2388 = vmatpush1.msra.mxu0 0.0
  %2389 = vmatprep.subr.mxu0 0.0
  %2390 = vmatpush1.msra.mxu0 0.0
  %2391 = vmatprep.subr.mxu0 0.0
  %2392 = vmatpush1.msra.mxu0 0.0
  %2393 = vmatprep.subr.mxu0 0.0
  %2394 = vmatpush1.msra.mxu0 0.0
  %2395 = vmatprep.subr.mxu0 0.0
  %2396 = vmatpush1.msra.mxu0 0.0
  %2397 = vmatprep.subr.mxu0 0.0
  %2398 = vmatpush1.msra.mxu0 0.0
  %2399 = vmatprep.subr.mxu0 0.0
  %2400 = vmatpush1.msra.mxu0 0.0
  %2401 = vmatprep.subr.mxu0 0.0
  %2402 = vmatpush1.msra.mxu0 0.0
  %2403 = vmatprep.subr.mxu0 0.0
  %2404 = vmatpush1.msra.mxu0 0.0
  %2405 = vmatprep.subr.mxu0 0.0
  %2406 = vmatpush1.msra.mxu0 0.0
  %2407 = vmatprep.subr.mxu0 0.0
  %2408 = vmatpush1.msra.mxu0 0.0
  %2409 = vmatprep.subr.mxu0 0.0
  %2410 = vmatpush1.msra.mxu0 0.0
  %2411 = vmatprep.subr.mxu0 0.0
  %2412 = vmatpush1.msra.mxu0 0.0
  %2413 = vmatprep.subr.mxu0 0.0
  %2414 = vmatpush1.msra.mxu0 0.0
  %2415 = vmatprep.subr.mxu0 0.0
  %2416 = vmatpush1.msra.mxu0 0.0
  %2417 = vmatprep.subr.mxu0 0.0
  %2418 = vmatpush1.msra.mxu0 0.0
  %2419 = vmatprep.subr.mxu0 0.0
  %2420 = vmatpush1.msra.mxu0 0.0
  %2421 = vmatprep.subr.mxu0 0.0
  %2422 = vmatpush1.msra.mxu0 0.0
  %2423 = vmatprep.subr.mxu0 0.0
  %2424 = vmatpush1.msra.mxu0 0.0
  %2425 = vmatprep.subr.mxu0 0.0
  %2426 = vmatpush1.msra.mxu0 0.0
  %2427 = vmatprep.subr.mxu0 0.0
  %2428 = vmatpush1.msra.mxu0 0.0
  %2429 = vmatprep.subr.mxu0 0.0
  %2430 = vmatpush1.msra.mxu0 0.0
  %2431 = vmatprep.mubr.f32.mxu0 0.0
  %2432 = vmatmul.mubr.f32.gmra.mrb[0].mxu0 %v2296
  %v2433 = vpop.f32.mrb[0].mxu0
  %v2434 = vadd.f32 0.0, %v2433
  %v2435 = vpop.f32.mrb[0].mxu0
  %2436 = vmatprep.mubr.f32.mxu0 0.0
  %2437 = vmatmul.mubr.f32.gmra.mrb[0].mxu0 %v2299
  %v2438 = vpop.f32.mrb[0].mxu0
  %v2439 = vadd.f32 0.0, %v2438
  %v2440 = vpop.f32.mrb[0].mxu0
  %2441 = vmatprep.mubr.f32.mxu0 0.0
  %2442 = vmatmul.mubr.f32.gmra.mrb[0].mxu0 %v2302
  %v2443 = vpop.f32.mrb[0].mxu0
  %v2444 = vadd.f32 0.0, %v2443
  %v2445 = vpop.f32.mrb[0].mxu0
  %2446 = vmatprep.mubr.f32.mxu0 0.0
  %2447 = vmatmul.mubr.f32.gmra.mrb[0].mxu0 %v2305
  %v2448 = vpop.f32.mrb[0].mxu0
  %v2449 = vadd.f32 0.0, %v2448
  %v2450 = vpop.f32.mrb[0].mxu0
  %2451 = vmatprep.mubr.f32.mxu0 0.0
  %2452 = vmatmul.mubr.f32.gmra.mrb[0].mxu0 %v2308
  %v2453 = vpop.f32.mrb[0].mxu0
  %v2454 = vadd.f32 0.0, %v2453
  %v2455 = vpop.f32.mrb[0].mxu0
  %2456 = vmatprep.mubr.f32.mxu0 0.0
  %2457 = vmatmul.mubr.f32.gmra.mrb[0].mxu0 %v2311
  %v2458 = vpop.f32.mrb[0].mxu0
  %v2459 = vadd.f32 0.0, %v2458
  %v2460 = vpop.f32.mrb[0].mxu0
  %2461 = vmatprep.mubr.f32.mxu0 0.0
  %2462 = vmatmul.mubr.f32.gmra.mrb[0].mxu0 %v2314
  %v2463 = vpop.f32.mrb[0].mxu0
  %v2464 = vadd.f32 0.0, %v2463
  %v2465 = vpop.f32.mrb[0].mxu0
  %2466 = vmatprep.mubr.f32.mxu0 0.0
  %2467 = vmatmul.mubr.f32.gmra.mrb[0].mxu0 %v2317
  %v2468 = vpop.f32.mrb[0].mxu0
  %v2469 = vadd.f32 0.0, %v2468
  %v2470 = vpop.f32.mrb[0].mxu0
  %2471 = vmatprep.mubr.f32.mxu0 0.0
  %2472 = vmatmul.mubr.f32.gmra.mrb[0].mxu0 %v2320
  %v2473 = vpop.f32.mrb[0].mxu0
  %v2474 = vadd.f32 0.0, %v2473
  %v2475 = vpop.f32.mrb[0].mxu0
  %2476 = vmatprep.mubr.f32.mxu0 0.0
  %2477 = vmatmul.mubr.f32.gmra.mrb[0].mxu0 %v2323
  %v2478 = vpop.f32.mrb[0].mxu0
  %v2479 = vadd.f32 0.0, %v2478
  %v2480 = vpop.f32.mrb[0].mxu0
  %2481 = vmatprep.mubr.f32.mxu0 0.0
  %2482 = vmatmul.mubr.f32.gmra.mrb[0].mxu0 %v2326
  %v2483 = vpop.f32.mrb[0].mxu0
  %v2484 = vadd.f32 0.0, %v2483
  %v2485 = vpop.f32.mrb[0].mxu0
  %2486 = vmatprep.mubr.f32.mxu0 0.0
  %2487 = vmatmul.mubr.f32.gmra.mrb[0].mxu0 %v2329
  %v2488 = vpop.f32.mrb[0].mxu0
  %v2489 = vadd.f32 0.0, %v2488
  %v2490 = vpop.f32.mrb[0].mxu0
  %2491 = vmatprep.mubr.f32.mxu0 0.0
  %2492 = vmatmul.mubr.f32.gmra.mrb[0].mxu0 %v2332
  %v2493 = vpop.f32.mrb[0].mxu0
  %v2494 = vadd.f32 0.0, %v2493
  %v2495 = vpop.f32.mrb[0].mxu0
  %2496 = vmatprep.mubr.f32.mxu0 0.0
  %2497 = vmatmul.mubr.f32.gmra.mrb[0].mxu0 %v2335
  %v2498 = vpop.f32.mrb[0].mxu0
  %v2499 = vadd.f32 0.0, %v2498
  %v2500 = vpop.f32.mrb[0].mxu0
  %2501 = vmatprep.mubr.f32.mxu0 0.0
  %2502 = vmatmul.mubr.f32.gmra.mrb[0].mxu0 %v2338
  %v2503 = vpop.f32.mrb[0].mxu0
  %v2504 = vadd.f32 0.0, %v2503
  %v2505 = vpop.f32.mrb[0].mxu0
  %2506 = vmatprep.mubr.f32.mxu0 0.0
  %2507 = vmatmul.mubr.f32.gmra.mrb[0].mxu0 %v2341
  %v2508 = vpop.f32.mrb[0].mxu0
  %v2509 = vadd.f32 0.0, %v2508
  %v2510 = vpop.f32.mrb[0].mxu0
  %2511 = vmatprep.mubr.f32.mxu0 0.0
  %2512 = vmatmul.mubr.f32.gmra.mrb[0].mxu0 %v2344
  %v2513 = vpop.f32.mrb[0].mxu0
  %v2514 = vadd.f32 0.0, %v2513
  %v2515 = vpop.f32.mrb[0].mxu0
  %2516 = vmatprep.mubr.f32.mxu0 0.0
  %2517 = vmatmul.mubr.f32.gmra.mrb[0].mxu0 %v2347
  %v2518 = vpop.f32.mrb[0].mxu0
  %v2519 = vadd.f32 0.0, %v2518
  %v2520 = vpop.f32.mrb[0].mxu0
  %2521 = vmatprep.mubr.f32.mxu0 0.0
  %2522 = vmatmul.mubr.f32.gmra.mrb[0].mxu0 %v2350
  %v2523 = vpop.f32.mrb[0].mxu0
  %v2524 = vadd.f32 0.0, %v2523
  %v2525 = vpop.f32.mrb[0].mxu0
  %2526 = vmatprep.mubr.f32.mxu0 0.0
  %2527 = vmatmul.mubr.f32.gmra.mrb[0].mxu0 %v2353
  %v2528 = vpop.f32.mrb[0].mxu0
  %v2529 = vadd.f32 0.0, %v2528
  %v2530 = vpop.f32.mrb[0].mxu0
  %2531 = vmatprep.mubr.f32.mxu0 0.0
  %2532 = vmatmul.mubr.f32.gmra.mrb[0].mxu0 %v2356
  %v2533 = vpop.f32.mrb[0].mxu0
  %v2534 = vadd.f32 0.0, %v2533
  %v2535 = vpop.f32.mrb[0].mxu0
  %2536 = vmatprep.mubr.f32.mxu0 0.0
  %2537 = vmatmul.mubr.f32.gmra.mrb[0].mxu0 %v2359
  %v2538 = vpop.f32.mrb[0].mxu0
  %v2539 = vadd.f32 0.0, %v2538
  %v2540 = vpop.f32.mrb[0].mxu0
  %2541 = vmatprep.mubr.f32.mxu0 0.0
  %2542 = vmatmul.mubr.f32.gmra.mrb[0].mxu0 %v2362
  %v2543 = vpop.f32.mrb[0].mxu0
  %v2544 = vadd.f32 0.0, %v2543
  %v2545 = vpop.f32.mrb[0].mxu0
  %2546 = vdwg.mxu0
  %v2547 = vadd.f32 %v2247, %v2434
  %v2548 = vadd.f32 %v2248, %v2439
  %v2549 = vadd.f32 %v2249, %v2444
  %v2550 = vadd.f32 %v2250, %v2449
  %v2551 = vadd.f32 %v2251, %v2454
  %v2552 = vadd.f32 %v2252, %v2459
  %v2553 = vadd.f32 %v2253, %v2464
  %v2554 = vadd.f32 %v2254, %v2469
  %v2555 = vadd.f32 %v2255, %v2474
  %v2556 = vadd.f32 %v2256, %v2479
  %v2557 = vadd.f32 %v2257, %v2484
  %v2558 = vadd.f32 %v2258, %v2489
  %v2559 = vadd.f32 %v2259, %v2494
  %v2560 = vadd.f32 %v2260, %v2499
  %v2561 = vadd.f32 %v2261, %v2504
  %v2562 = vadd.f32 %v2262, %v2509
  %v2563 = vadd.f32 %v2263, %v2514
  %v2564 = vadd.f32 %v2264, %v2519
  %v2565 = vadd.f32 %v2265, %v2524
  %v2566 = vadd.f32 %v2266, %v2529
  %v2567 = vadd.f32 %v2267, %v2534
  %v2568 = vadd.f32 %v2268, %v2539
  %v2569 = vadd.f32 %v2269, %v2544
  %v2570 = vld [vmem:[#allocation2 + $0x16] sm:$0xff]
  %v2571 = vld [vmem:[#allocation2 + $0x1e] sm:$0xff]
  %v2572 = vld [vmem:[#allocation2 + $0x26] sm:$0xff]
  %v2573 = vld [vmem:[#allocation2 + $0x2e] sm:$0xff]
  %v2574 = vld [vmem:[#allocation2 + $0x36] sm:$0xff]
  %v2575 = vld [vmem:[#allocation2 + $0x3e] sm:$0xff]
  %v2576 = vld [vmem:[#allocation2 + $0x46] sm:$0xff]
  %v2577 = vld [vmem:[#allocation2 + $0x4e] sm:$0xff]
  %v2578 = vld [vmem:[#allocation2 + $0x56] sm:$0xff]
  %v2579 = vld [vmem:[#allocation2 + $0x5e] sm:$0xff]
  %v2580 = vld [vmem:[#allocation2 + $0x66] sm:$0xff]
  %v2581 = vld [vmem:[#allocation2 + $0x6e] sm:$0xff]
  %v2582 = vld [vmem:[#allocation2 + $0x76] sm:$0xff]
  %v2583 = vld [vmem:[#allocation2 + $0x7e] sm:$0xff]
  %v2584 = vld [vmem:[#allocation2 + $0x86] sm:$0xff]
  %v2585 = vld [vmem:[#allocation2 + $0x8e] sm:$0xff]
  %v2586 = vld [vmem:[#allocation2 + $0x96] sm:$0xff]
  %v2587 = vld [vmem:[#allocation2 + $0x9e] sm:$0xff]
  %v2588 = vld [vmem:[#allocation2 + $0xa6] sm:$0xff]
  %v2589 = vld [vmem:[#allocation2 + $0xae] sm:$0xff]
  %v2590 = vld [vmem:[#allocation2 + $0xb6] sm:$0xff]
  %v2591 = vld [vmem:[#allocation2 + $0xbe] sm:$0xff]
  %v2592 = vld [vmem:[#allocation2 + $0xc6] sm:$0xff]
  %s2593 = scalar_lea.vmem %s2, 32
  %v2594 = vld [vmem:[%s2593] sm:$0xf]
  %v2596 = vsel %vm29, %v2570, 0
  %v2599 = vsel %vm29, %v2571, 0
  %v2602 = vsel %vm29, %v2572, 0
  %v2605 = vsel %vm29, %v2573, 0
  %v2608 = vsel %vm29, %v2574, 0
  %v2611 = vsel %vm29, %v2575, 0
  %v2614 = vsel %vm29, %v2576, 0
  %v2617 = vsel %vm29, %v2577, 0
  %v2620 = vsel %vm29, %v2578, 0
  %v2623 = vsel %vm29, %v2579, 0
  %v2626 = vsel %vm29, %v2580, 0
  %v2629 = vsel %vm29, %v2581, 0
  %v2632 = vsel %vm29, %v2582, 0
  %v2635 = vsel %vm29, %v2583, 0
  %v2638 = vsel %vm29, %v2584, 0
  %v2641 = vsel %vm29, %v2585, 0
  %v2644 = vsel %vm29, %v2586, 0
  %v2647 = vsel %vm29, %v2587, 0
  %v2650 = vsel %vm29, %v2588, 0
  %v2653 = vsel %vm29, %v2589, 0
  %v2656 = vsel %vm29, %v2590, 0
  %v2659 = vsel %vm29, %v2591, 0
  %v2662 = vsel %vm29, %v2592, 0
  %v2665 = vsel %vm334, %v2594, 0
  %2667 = vmatprep.subr.mxu0 0.0
  %2668 = vmatpush1.msra.mxu0 %v2665
  %2669 = vmatprep.subr.mxu0 0.0
  %2670 = vmatpush1.msra.mxu0 0.0
  %2671 = vmatprep.subr.mxu0 0.0
  %2672 = vmatpush1.msra.mxu0 0.0
  %2673 = vmatprep.subr.mxu0 0.0
  %2674 = vmatpush1.msra.mxu0 0.0
  %2675 = vmatprep.subr.mxu0 0.0
  %2676 = vmatpush1.msra.mxu0 0.0
  %2677 = vmatprep.subr.mxu0 0.0
  %2678 = vmatpush1.msra.mxu0 0.0
  %2679 = vmatprep.subr.mxu0 0.0
  %2680 = vmatpush1.msra.mxu0 0.0
  %2681 = vmatprep.subr.mxu0 0.0
  %2682 = vmatpush1.msra.mxu0 0.0
  %2683 = vmatprep.subr.mxu0 0.0
  %2684 = vmatpush1.msra.mxu0 0.0
  %2685 = vmatprep.subr.mxu0 0.0
  %2686 = vmatpush1.msra.mxu0 0.0
  %2687 = vmatprep.subr.mxu0 0.0
  %2688 = vmatpush1.msra.mxu0 0.0
  %2689 = vmatprep.subr.mxu0 0.0
  %2690 = vmatpush1.msra.mxu0 0.0
  %2691 = vmatprep.subr.mxu0 0.0
  %2692 = vmatpush1.msra.mxu0 0.0
  %2693 = vmatprep.subr.mxu0 0.0
  %2694 = vmatpush1.msra.mxu0 0.0
  %2695 = vmatprep.subr.mxu0 0.0
  %2696 = vmatpush1.msra.mxu0 0.0
  %2697 = vmatprep.subr.mxu0 0.0
  %2698 = vmatpush1.msra.mxu0 0.0
  %2699 = vmatprep.subr.mxu0 0.0
  %2700 = vmatpush1.msra.mxu0 0.0
  %2701 = vmatprep.subr.mxu0 0.0
  %2702 = vmatpush1.msra.mxu0 0.0
  %2703 = vmatprep.subr.mxu0 0.0
  %2704 = vmatpush1.msra.mxu0 0.0
  %2705 = vmatprep.subr.mxu0 0.0
  %2706 = vmatpush1.msra.mxu0 0.0
  %2707 = vmatprep.subr.mxu0 0.0
  %2708 = vmatpush1.msra.mxu0 0.0
  %2709 = vmatprep.subr.mxu0 0.0
  %2710 = vmatpush1.msra.mxu0 0.0
  %2711 = vmatprep.subr.mxu0 0.0
  %2712 = vmatpush1.msra.mxu0 0.0
  %2713 = vmatprep.subr.mxu0 0.0
  %2714 = vmatpush1.msra.mxu0 0.0
  %2715 = vmatprep.subr.mxu0 0.0
  %2716 = vmatpush1.msra.mxu0 0.0
  %2717 = vmatprep.subr.mxu0 0.0
  %2718 = vmatpush1.msra.mxu0 0.0
  %2719 = vmatprep.subr.mxu0 0.0
  %2720 = vmatpush1.msra.mxu0 0.0
  %2721 = vmatprep.subr.mxu0 0.0
  %2722 = vmatpush1.msra.mxu0 0.0
  %2723 = vmatprep.subr.mxu0 0.0
  %2724 = vmatpush1.msra.mxu0 0.0
  %2725 = vmatprep.subr.mxu0 0.0
  %2726 = vmatpush1.msra.mxu0 0.0
  %2727 = vmatprep.subr.mxu0 0.0
  %2728 = vmatpush1.msra.mxu0 0.0
  %2729 = vmatprep.subr.mxu0 0.0
  %2730 = vmatpush1.msra.mxu0 0.0
  %2731 = vmatprep.mubr.f32.mxu0 0.0
  %2732 = vmatmul.mubr.f32.gmra.mrb[0].mxu0 %v2596
  %v2733 = vpop.f32.mrb[0].mxu0
  %v2734 = vadd.f32 0.0, %v2733
  %v2735 = vpop.f32.mrb[0].mxu0
  %2736 = vmatprep.mubr.f32.mxu0 0.0
  %2737 = vmatmul.mubr.f32.gmra.mrb[0].mxu0 %v2599
  %v2738 = vpop.f32.mrb[0].mxu0
  %v2739 = vadd.f32 0.0, %v2738
  %v2740 = vpop.f32.mrb[0].mxu0
  %2741 = vmatprep.mubr.f32.mxu0 0.0
  %2742 = vmatmul.mubr.f32.gmra.mrb[0].mxu0 %v2602
  %v2743 = vpop.f32.mrb[0].mxu0
  %v2744 = vadd.f32 0.0, %v2743
  %v2745 = vpop.f32.mrb[0].mxu0
  %2746 = vmatprep.mubr.f32.mxu0 0.0
  %2747 = vmatmul.mubr.f32.gmra.mrb[0].mxu0 %v2605
  %v2748 = vpop.f32.mrb[0].mxu0
  %v2749 = vadd.f32 0.0, %v2748
  %v2750 = vpop.f32.mrb[0].mxu0
  %2751 = vmatprep.mubr.f32.mxu0 0.0
  %2752 = vmatmul.mubr.f32.gmra.mrb[0].mxu0 %v2608
  %v2753 = vpop.f32.mrb[0].mxu0
  %v2754 = vadd.f32 0.0, %v2753
  %v2755 = vpop.f32.mrb[0].mxu0
  %2756 = vmatprep.mubr.f32.mxu0 0.0
  %2757 = vmatmul.mubr.f32.gmra.mrb[0].mxu0 %v2611
  %v2758 = vpop.f32.mrb[0].mxu0
  %v2759 = vadd.f32 0.0, %v2758
  %v2760 = vpop.f32.mrb[0].mxu0
  %2761 = vmatprep.mubr.f32.mxu0 0.0
  %2762 = vmatmul.mubr.f32.gmra.mrb[0].mxu0 %v2614
  %v2763 = vpop.f32.mrb[0].mxu0
  %v2764 = vadd.f32 0.0, %v2763
  %v2765 = vpop.f32.mrb[0].mxu0
  %2766 = vmatprep.mubr.f32.mxu0 0.0
  %2767 = vmatmul.mubr.f32.gmra.mrb[0].mxu0 %v2617
  %v2768 = vpop.f32.mrb[0].mxu0
  %v2769 = vadd.f32 0.0, %v2768
  %v2770 = vpop.f32.mrb[0].mxu0
  %2771 = vmatprep.mubr.f32.mxu0 0.0
  %2772 = vmatmul.mubr.f32.gmra.mrb[0].mxu0 %v2620
  %v2773 = vpop.f32.mrb[0].mxu0
  %v2774 = vadd.f32 0.0, %v2773
  %v2775 = vpop.f32.mrb[0].mxu0
  %2776 = vmatprep.mubr.f32.mxu0 0.0
  %2777 = vmatmul.mubr.f32.gmra.mrb[0].mxu0 %v2623
  %v2778 = vpop.f32.mrb[0].mxu0
  %v2779 = vadd.f32 0.0, %v2778
  %v2780 = vpop.f32.mrb[0].mxu0
  %2781 = vmatprep.mubr.f32.mxu0 0.0
  %2782 = vmatmul.mubr.f32.gmra.mrb[0].mxu0 %v2626
  %v2783 = vpop.f32.mrb[0].mxu0
  %v2784 = vadd.f32 0.0, %v2783
  %v2785 = vpop.f32.mrb[0].mxu0
  %2786 = vmatprep.mubr.f32.mxu0 0.0
  %2787 = vmatmul.mubr.f32.gmra.mrb[0].mxu0 %v2629
  %v2788 = vpop.f32.mrb[0].mxu0
  %v2789 = vadd.f32 0.0, %v2788
  %v2790 = vpop.f32.mrb[0].mxu0
  %2791 = vmatprep.mubr.f32.mxu0 0.0
  %2792 = vmatmul.mubr.f32.gmra.mrb[0].mxu0 %v2632
  %v2793 = vpop.f32.mrb[0].mxu0
  %v2794 = vadd.f32 0.0, %v2793
  %v2795 = vpop.f32.mrb[0].mxu0
  %2796 = vmatprep.mubr.f32.mxu0 0.0
  %2797 = vmatmul.mubr.f32.gmra.mrb[0].mxu0 %v2635
  %v2798 = vpop.f32.mrb[0].mxu0
  %v2799 = vadd.f32 0.0, %v2798
  %v2800 = vpop.f32.mrb[0].mxu0
  %2801 = vmatprep.mubr.f32.mxu0 0.0
  %2802 = vmatmul.mubr.f32.gmra.mrb[0].mxu0 %v2638
  %v2803 = vpop.f32.mrb[0].mxu0
  %v2804 = vadd.f32 0.0, %v2803
  %v2805 = vpop.f32.mrb[0].mxu0
  %2806 = vmatprep.mubr.f32.mxu0 0.0
  %2807 = vmatmul.mubr.f32.gmra.mrb[0].mxu0 %v2641
  %v2808 = vpop.f32.mrb[0].mxu0
  %v2809 = vadd.f32 0.0, %v2808
  %v2810 = vpop.f32.mrb[0].mxu0
  %2811 = vmatprep.mubr.f32.mxu0 0.0
  %2812 = vmatmul.mubr.f32.gmra.mrb[0].mxu0 %v2644
  %v2813 = vpop.f32.mrb[0].mxu0
  %v2814 = vadd.f32 0.0, %v2813
  %v2815 = vpop.f32.mrb[0].mxu0
  %2816 = vmatprep.mubr.f32.mxu0 0.0
  %2817 = vmatmul.mubr.f32.gmra.mrb[0].mxu0 %v2647
  %v2818 = vpop.f32.mrb[0].mxu0
  %v2819 = vadd.f32 0.0, %v2818
  %v2820 = vpop.f32.mrb[0].mxu0
  %2821 = vmatprep.mubr.f32.mxu0 0.0
  %2822 = vmatmul.mubr.f32.gmra.mrb[0].mxu0 %v2650
  %v2823 = vpop.f32.mrb[0].mxu0
  %v2824 = vadd.f32 0.0, %v2823
  %v2825 = vpop.f32.mrb[0].mxu0
  %2826 = vmatprep.mubr.f32.mxu0 0.0
  %2827 = vmatmul.mubr.f32.gmra.mrb[0].mxu0 %v2653
  %v2828 = vpop.f32.mrb[0].mxu0
  %v2829 = vadd.f32 0.0, %v2828
  %v2830 = vpop.f32.mrb[0].mxu0
  %2831 = vmatprep.mubr.f32.mxu0 0.0
  %2832 = vmatmul.mubr.f32.gmra.mrb[0].mxu0 %v2656
  %v2833 = vpop.f32.mrb[0].mxu0
  %v2834 = vadd.f32 0.0, %v2833
  %v2835 = vpop.f32.mrb[0].mxu0
  %2836 = vmatprep.mubr.f32.mxu0 0.0
  %2837 = vmatmul.mubr.f32.gmra.mrb[0].mxu0 %v2659
  %v2838 = vpop.f32.mrb[0].mxu0
  %v2839 = vadd.f32 0.0, %v2838
  %v2840 = vpop.f32.mrb[0].mxu0
  %2841 = vmatprep.mubr.f32.mxu0 0.0
  %2842 = vmatmul.mubr.f32.gmra.mrb[0].mxu0 %v2662
  %v2843 = vpop.f32.mrb[0].mxu0
  %v2844 = vadd.f32 0.0, %v2843
  %v2845 = vpop.f32.mrb[0].mxu0
  %2846 = vdwg.mxu0
  %v2847 = vadd.f32 %v2547, %v2734
  %v2848 = vadd.f32 %v2548, %v2739
  %v2849 = vadd.f32 %v2549, %v2744
  %v2850 = vadd.f32 %v2550, %v2749
  %v2851 = vadd.f32 %v2551, %v2754
  %v2852 = vadd.f32 %v2552, %v2759
  %v2853 = vadd.f32 %v2553, %v2764
  %v2854 = vadd.f32 %v2554, %v2769
  %v2855 = vadd.f32 %v2555, %v2774
  %v2856 = vadd.f32 %v2556, %v2779
  %v2857 = vadd.f32 %v2557, %v2784
  %v2858 = vadd.f32 %v2558, %v2789
  %v2859 = vadd.f32 %v2559, %v2794
  %v2860 = vadd.f32 %v2560, %v2799
  %v2861 = vadd.f32 %v2561, %v2804
  %v2862 = vadd.f32 %v2562, %v2809
  %v2863 = vadd.f32 %v2563, %v2814
  %v2864 = vadd.f32 %v2564, %v2819
  %v2865 = vadd.f32 %v2565, %v2824
  %v2866 = vadd.f32 %v2566, %v2829
  %v2867 = vadd.f32 %v2567, %v2834
  %v2868 = vadd.f32 %v2568, %v2839
  %v2869 = vadd.f32 %v2569, %v2844
  %v2870 = vld [vmem:[%s3] sm:$0x1]
  %v2872 = vlaneseq
  %v2873 = vshrl.u32 %v2872, 7
  %v2874 = vsub.s32 0, %v2873
  %v2875 = vrot.slane %v2870, %v2874
  %v2877 = vmul.f32 %v2847, %v2875
  %v2878 = vmul.f32 %v2848, %v2875
  %v2879 = vmul.f32 %v2849, %v2875
  %v2880 = vmul.f32 %v2850, %v2875
  %v2881 = vmul.f32 %v2851, %v2875
  %v2882 = vmul.f32 %v2852, %v2875
  %v2883 = vmul.f32 %v2853, %v2875
  %v2884 = vmul.f32 %v2854, %v2875
  %v2885 = vmul.f32 %v2855, %v2875
  %v2886 = vmul.f32 %v2856, %v2875
  %v2887 = vmul.f32 %v2857, %v2875
  %v2888 = vmul.f32 %v2858, %v2875
  %v2889 = vmul.f32 %v2859, %v2875
  %v2890 = vmul.f32 %v2860, %v2875
  %v2891 = vmul.f32 %v2861, %v2875
  %v2892 = vmul.f32 %v2862, %v2875
  %v2893 = vmul.f32 %v2863, %v2875
  %v2894 = vmul.f32 %v2864, %v2875
  %v2895 = vmul.f32 %v2865, %v2875
  %v2896 = vmul.f32 %v2866, %v2875
  %v2897 = vmul.f32 %v2867, %v2875
  %v2898 = vmul.f32 %v2868, %v2875
  %v2899 = vmul.f32 %v2869, %v2875
  %v2900 = vld [vmem:[%s4] sm:$0x1]
  %v2902 = vlaneseq
  %v2903 = vshrl.u32 %v2902, 7
  %v2904 = vsub.s32 0, %v2903
  %v2905 = vrot.slane %v2900, %v2904
  %v2907 = vadd.f32 %v2877, %v2905
  %v2908 = vadd.f32 %v2878, %v2905
  %v2909 = vadd.f32 %v2879, %v2905
  %v2910 = vadd.f32 %v2880, %v2905
  %v2911 = vadd.f32 %v2881, %v2905
  %v2912 = vadd.f32 %v2882, %v2905
  %v2913 = vadd.f32 %v2883, %v2905
  %v2914 = vadd.f32 %v2884, %v2905
  %v2915 = vadd.f32 %v2885, %v2905
  %v2916 = vadd.f32 %v2886, %v2905
  %v2917 = vadd.f32 %v2887, %v2905
  %v2918 = vadd.f32 %v2888, %v2905
  %v2919 = vadd.f32 %v2889, %v2905
  %v2920 = vadd.f32 %v2890, %v2905
  %v2921 = vadd.f32 %v2891, %v2905
  %v2922 = vadd.f32 %v2892, %v2905
  %v2923 = vadd.f32 %v2893, %v2905
  %v2924 = vadd.f32 %v2894, %v2905
  %v2925 = vadd.f32 %v2895, %v2905
  %v2926 = vadd.f32 %v2896, %v2905
  %v2927 = vadd.f32 %v2897, %v2905
  %v2928 = vadd.f32 %v2898, %v2905
  %v2929 = vadd.f32 %v2899, %v2905
  %v2930 = vmax.f32 %v2907, 0.0
  %v2931 = vmax.f32 %v2908, 0.0
  %v2932 = vmax.f32 %v2909, 0.0
  %v2933 = vmax.f32 %v2910, 0.0
  %v2934 = vmax.f32 %v2911, 0.0
  %v2935 = vmax.f32 %v2912, 0.0
  %v2936 = vmax.f32 %v2913, 0.0
  %v2937 = vmax.f32 %v2914, 0.0
  %v2938 = vmax.f32 %v2915, 0.0
  %v2939 = vmax.f32 %v2916, 0.0
  %v2940 = vmax.f32 %v2917, 0.0
  %v2941 = vmax.f32 %v2918, 0.0
  %v2942 = vmax.f32 %v2919, 0.0
  %v2943 = vmax.f32 %v2920, 0.0
  %v2944 = vmax.f32 %v2921, 0.0
  %v2945 = vmax.f32 %v2922, 0.0
  %v2946 = vmax.f32 %v2923, 0.0
  %v2947 = vmax.f32 %v2924, 0.0
  %v2948 = vmax.f32 %v2925, 0.0
  %v2949 = vmax.f32 %v2926, 0.0
  %v2950 = vmax.f32 %v2927, 0.0
  %v2951 = vmax.f32 %v2928, 0.0
  %v2952 = vmax.f32 %v2929, 0.0
  %v2953 = vld [vmem:[%s1] sm:$0xff]
  %v2954 = vld [vmem:[%s1 + $0x8] sm:$0xff]
  %v2955 = vld [vmem:[%s1 + $0x10] sm:$0xff]
  %v2956 = vld [vmem:[%s1 + $0x18] sm:$0xff]
  %v2957 = vld [vmem:[%s1 + $0x20] sm:$0xff]
  %v2958 = vld [vmem:[%s1 + $0x28] sm:$0xff]
  %v2959 = vld [vmem:[%s1 + $0x30] sm:$0xff]
  %v2960 = vld [vmem:[%s1 + $0x38] sm:$0xff]
  %v2961 = vld [vmem:[%s1 + $0x40] sm:$0xff]
  %v2962 = vld [vmem:[%s1 + $0x48] sm:$0xff]
  %v2963 = vld [vmem:[%s1 + $0x50] sm:$0xff]
  %v2964 = vld [vmem:[%s1 + $0x58] sm:$0xff]
  %v2965 = vld [vmem:[%s1 + $0x60] sm:$0xff]
  %v2966 = vld [vmem:[%s1 + $0x68] sm:$0xff]
  %v2967 = vld [vmem:[%s1 + $0x70] sm:$0xff]
  %v2968 = vld [vmem:[%s1 + $0x78] sm:$0xff]
  %v2969 = vld [vmem:[%s1 + $0x80] sm:$0xff]
  %v2970 = vld [vmem:[%s1 + $0x88] sm:$0xff]
  %v2971 = vld [vmem:[%s1 + $0x90] sm:$0xff]
  %v2972 = vld [vmem:[%s1 + $0x98] sm:$0xff]
  %v2973 = vld [vmem:[%s1 + $0xa0] sm:$0xff]
  %v2974 = vld [vmem:[%s1 + $0xa8] sm:$0xff]
  %v2975 = vld [vmem:[%s1 + $0xb0] sm:$0xff]
  %2977 = vset.pattern.permute.xlu0 0
  %2978 = vperm.xlu0 %2977, %v2953
  %v2979 = vpop.permute.xlu0 %2978
  %2982 = vset.pattern.permute.xlu0 0
  %2983 = vperm.xlu0 %2982, %v2954
  %v2984 = vpop.permute.xlu0 %2983
  %2987 = vset.pattern.permute.xlu0 0
  %2988 = vperm.xlu0 %2987, %v2955
  %v2989 = vpop.permute.xlu0 %2988
  %2992 = vset.pattern.permute.xlu0 0
  %2993 = vperm.xlu0 %2992, %v2956
  %v2994 = vpop.permute.xlu0 %2993
  %2997 = vset.pattern.permute.xlu0 0
  %2998 = vperm.xlu0 %2997, %v2957
  %v2999 = vpop.permute.xlu0 %2998
  %3002 = vset.pattern.permute.xlu0 0
  %3003 = vperm.xlu0 %3002, %v2958
  %v3004 = vpop.permute.xlu0 %3003
  %3007 = vset.pattern.permute.xlu0 0
  %3008 = vperm.xlu0 %3007, %v2959
  %v3009 = vpop.permute.xlu0 %3008
  %3012 = vset.pattern.permute.xlu0 0
  %3013 = vperm.xlu0 %3012, %v2960
  %v3014 = vpop.permute.xlu0 %3013
  %3017 = vset.pattern.permute.xlu0 0
  %3018 = vperm.xlu0 %3017, %v2961
  %v3019 = vpop.permute.xlu0 %3018
  %3022 = vset.pattern.permute.xlu0 0
  %3023 = vperm.xlu0 %3022, %v2962
  %v3024 = vpop.permute.xlu0 %3023
  %3027 = vset.pattern.permute.xlu0 0
  %3028 = vperm.xlu0 %3027, %v2963
  %v3029 = vpop.permute.xlu0 %3028
  %3032 = vset.pattern.permute.xlu0 0
  %3033 = vperm.xlu0 %3032, %v2964
  %v3034 = vpop.permute.xlu0 %3033
  %3037 = vset.pattern.permute.xlu0 0
  %3038 = vperm.xlu0 %3037, %v2965
  %v3039 = vpop.permute.xlu0 %3038
  %3042 = vset.pattern.permute.xlu0 0
  %3043 = vperm.xlu0 %3042, %v2966
  %v3044 = vpop.permute.xlu0 %3043
  %3047 = vset.pattern.permute.xlu0 0
  %3048 = vperm.xlu0 %3047, %v2967
  %v3049 = vpop.permute.xlu0 %3048
  %3052 = vset.pattern.permute.xlu0 0
  %3053 = vperm.xlu0 %3052, %v2968
  %v3054 = vpop.permute.xlu0 %3053
  %3057 = vset.pattern.permute.xlu0 0
  %3058 = vperm.xlu0 %3057, %v2969
  %v3059 = vpop.permute.xlu0 %3058
  %3062 = vset.pattern.permute.xlu0 0
  %3063 = vperm.xlu0 %3062, %v2970
  %v3064 = vpop.permute.xlu0 %3063
  %3067 = vset.pattern.permute.xlu0 0
  %3068 = vperm.xlu0 %3067, %v2971
  %v3069 = vpop.permute.xlu0 %3068
  %3072 = vset.pattern.permute.xlu0 0
  %3073 = vperm.xlu0 %3072, %v2972
  %v3074 = vpop.permute.xlu0 %3073
  %3077 = vset.pattern.permute.xlu0 0
  %3078 = vperm.xlu0 %3077, %v2973
  %v3079 = vpop.permute.xlu0 %3078
  %3082 = vset.pattern.permute.xlu0 0
  %3083 = vperm.xlu0 %3082, %v2974
  %v3084 = vpop.permute.xlu0 %3083
  %3087 = vset.pattern.permute.xlu0 0
  %3088 = vperm.xlu0 %3087, %v2975
  %v3089 = vpop.permute.xlu0 %3088
  %v3091 = vmul.f32 %v2930, %v2979
  %v3092 = vmul.f32 %v2931, %v2984
  %v3093 = vmul.f32 %v2932, %v2989
  %v3094 = vmul.f32 %v2933, %v2994
  %v3095 = vmul.f32 %v2934, %v2999
  %v3096 = vmul.f32 %v2935, %v3004
  %v3097 = vmul.f32 %v2936, %v3009
  %v3098 = vmul.f32 %v2937, %v3014
  %v3099 = vmul.f32 %v2938, %v3019
  %v3100 = vmul.f32 %v2939, %v3024
  %v3101 = vmul.f32 %v2940, %v3029
  %v3102 = vmul.f32 %v2941, %v3034
  %v3103 = vmul.f32 %v2942, %v3039
  %v3104 = vmul.f32 %v2943, %v3044
  %v3105 = vmul.f32 %v2944, %v3049
  %v3106 = vmul.f32 %v2945, %v3054
  %v3107 = vmul.f32 %v2946, %v3059
  %v3108 = vmul.f32 %v2947, %v3064
  %v3109 = vmul.f32 %v2948, %v3069
  %v3110 = vmul.f32 %v2949, %v3074
  %v3111 = vmul.f32 %v2950, %v3079
  %v3112 = vmul.f32 %v2951, %v3084
  %v3113 = vmul.f32 %v2952, %v3089
  %3114 = vst.msk [vmem:[#allocation3 + $0xb] sm:$0xff] %vm39, %v3091
  %3115 = vst.msk [vmem:[#allocation3 + $0x13] sm:$0xff] %vm39, %v3092
  %3116 = vst.msk [vmem:[#allocation3 + $0x1b] sm:$0xff] %vm39, %v3093
  %3117 = vst.msk [vmem:[#allocation3 + $0x23] sm:$0xff] %vm39, %v3094
  %3118 = vst.msk [vmem:[#allocation3 + $0x2b] sm:$0xff] %vm39, %v3095
  %3119 = vst.msk [vmem:[#allocation3 + $0x33] sm:$0xff] %vm39, %v3096
  %3120 = vst.msk [vmem:[#allocation3 + $0x3b] sm:$0xff] %vm39, %v3097
  %3121 = vst.msk [vmem:[#allocation3 + $0x43] sm:$0xff] %vm39, %v3098
  %3122 = vst.msk [vmem:[#allocation3 + $0x4b] sm:$0xff] %vm39, %v3099
  %3123 = vst.msk [vmem:[#allocation3 + $0x53] sm:$0xff] %vm39, %v3100
  %3124 = vst.msk [vmem:[#allocation3 + $0x5b] sm:$0xff] %vm39, %v3101
  %3125 = vst.msk [vmem:[#allocation3 + $0x63] sm:$0xff] %vm39, %v3102
  %3126 = vst.msk [vmem:[#allocation3 + $0x6b] sm:$0xff] %vm39, %v3103
  %3127 = vst.msk [vmem:[#allocation3 + $0x73] sm:$0xff] %vm39, %v3104
  %3128 = vst.msk [vmem:[#allocation3 + $0x7b] sm:$0xff] %vm39, %v3105
  %3129 = vst.msk [vmem:[#allocation3 + $0x83] sm:$0xff] %vm39, %v3106
  %3130 = vst.msk [vmem:[#allocation3 + $0x8b] sm:$0xff] %vm39, %v3107
  %3131 = vst.msk [vmem:[#allocation3 + $0x93] sm:$0xff] %vm39, %v3108
  %3132 = vst.msk [vmem:[#allocation3 + $0x9b] sm:$0xff] %vm39, %v3109
  %3133 = vst.msk [vmem:[#allocation3 + $0xa3] sm:$0xff] %vm39, %v3110
  %3134 = vst.msk [vmem:[#allocation3 + $0xab] sm:$0xff] %vm39, %v3111
  %3135 = vst.msk [vmem:[#allocation3 + $0xb3] sm:$0xff] %vm39, %v3112
  %3136 = vst.msk [vmem:[#allocation3 + $0xbb] sm:$0xff] %vm39, %v3113
  %v3137 = vld [vmem:[#allocation3] sm:$0xff]
  %v3138 = vld [vmem:[#allocation3 + $0x8] sm:$0xff]
  %v3139 = vld [vmem:[#allocation3 + $0x10] sm:$0xff]
  %v3140 = vld [vmem:[#allocation3 + $0x18] sm:$0xff]
  %v3141 = vld [vmem:[#allocation3 + $0x20] sm:$0xff]
  %v3142 = vld [vmem:[#allocation3 + $0x28] sm:$0xff]
  %v3143 = vld [vmem:[#allocation3 + $0x30] sm:$0xff]
  %v3144 = vld [vmem:[#allocation3 + $0x38] sm:$0xff]
  %v3145 = vld [vmem:[#allocation3 + $0x40] sm:$0xff]
  %v3146 = vld [vmem:[#allocation3 + $0x48] sm:$0xff]
  %v3147 = vld [vmem:[#allocation3 + $0x50] sm:$0xff]
  %v3148 = vld [vmem:[#allocation3 + $0x58] sm:$0xff]
  %v3149 = vld [vmem:[#allocation3 + $0x60] sm:$0xff]
  %v3150 = vld [vmem:[#allocation3 + $0x68] sm:$0xff]
  %v3151 = vld [vmem:[#allocation3 + $0x70] sm:$0xff]
  %v3152 = vld [vmem:[#allocation3 + $0x78] sm:$0xff]
  %v3153 = vld [vmem:[#allocation3 + $0x80] sm:$0xff]
  %v3154 = vld [vmem:[#allocation3 + $0x88] sm:$0xff]
  %v3155 = vld [vmem:[#allocation3 + $0x90] sm:$0xff]
  %v3156 = vld [vmem:[#allocation3 + $0x98] sm:$0xff]
  %v3157 = vld [vmem:[#allocation3 + $0xa0] sm:$0xff]
  %v3158 = vld [vmem:[#allocation3 + $0xa8] sm:$0xff]
  %v3159 = vld [vmem:[#allocation3 + $0xb0] sm:$0xff]
  %v3160 = vld [vmem:[%s5] sm:$0xff]
  %v3161 = vld [vmem:[#allocation3 + $0x1] sm:$0xff]
  %v3162 = vld [vmem:[#allocation3 + $0x9] sm:$0xff]
  %v3163 = vld [vmem:[#allocation3 + $0x11] sm:$0xff]
  %v3164 = vld [vmem:[#allocation3 + $0x19] sm:$0xff]
  %v3165 = vld [vmem:[#allocation3 + $0x21] sm:$0xff]
  %v3166 = vld [vmem:[#allocation3 + $0x29] sm:$0xff]
  %v3167 = vld [vmem:[#allocation3 + $0x31] sm:$0xff]
  %v3168 = vld [vmem:[#allocation3 + $0x39] sm:$0xff]
  %v3169 = vld [vmem:[#allocation3 + $0x41] sm:$0xff]
  %v3170 = vld [vmem:[#allocation3 + $0x49] sm:$0xff]
  %v3171 = vld [vmem:[#allocation3 + $0x51] sm:$0xff]
  %v3172 = vld [vmem:[#allocation3 + $0x59] sm:$0xff]
  %v3173 = vld [vmem:[#allocation3 + $0x61] sm:$0xff]
  %v3174 = vld [vmem:[#allocation3 + $0x69] sm:$0xff]
  %v3175 = vld [vmem:[#allocation3 + $0x71] sm:$0xff]
  %v3176 = vld [vmem:[#allocation3 + $0x79] sm:$0xff]
  %v3177 = vld [vmem:[#allocation3 + $0x81] sm:$0xff]
  %v3178 = vld [vmem:[#allocation3 + $0x89] sm:$0xff]
  %v3179 = vld [vmem:[#allocation3 + $0x91] sm:$0xff]
  %v3180 = vld [vmem:[#allocation3 + $0x99] sm:$0xff]
  %v3181 = vld [vmem:[#allocation3 + $0xa1] sm:$0xff]
  %v3182 = vld [vmem:[#allocation3 + $0xa9] sm:$0xff]
  %v3183 = vld [vmem:[#allocation3 + $0xb1] sm:$0xff]
  %s3184 = scalar_lea.vmem %s5, 8
  %v3185 = vld [vmem:[%s3184] sm:$0xff]
  %v3187 = vsel %vm39, %v3161, 0
  %v3190 = vsel %vm39, %v3162, 0
  %v3193 = vsel %vm39, %v3163, 0
  %v3196 = vsel %vm39, %v3164, 0
  %v3199 = vsel %vm39, %v3165, 0
  %v3202 = vsel %vm39, %v3166, 0
  %v3205 = vsel %vm39, %v3167, 0
  %v3208 = vsel %vm39, %v3168, 0
  %v3211 = vsel %vm39, %v3169, 0
  %v3214 = vsel %vm39, %v3170, 0
  %v3217 = vsel %vm39, %v3171, 0
  %v3220 = vsel %vm39, %v3172, 0
  %v3223 = vsel %vm39, %v3173, 0
  %v3226 = vsel %vm39, %v3174, 0
  %v3229 = vsel %vm39, %v3175, 0
  %v3232 = vsel %vm39, %v3176, 0
  %v3235 = vsel %vm39, %v3177, 0
  %v3238 = vsel %vm39, %v3178, 0
  %v3241 = vsel %vm39, %v3179, 0
  %v3244 = vsel %vm39, %v3180, 0
  %v3247 = vsel %vm39, %v3181, 0
  %v3250 = vsel %vm39, %v3182, 0
  %v3253 = vsel %vm39, %v3183, 0
  %3255 = vmatprep.subr.mxu0 0.0
  %3256 = vmatpush1.msra.mxu0 %v3185
  %3257 = vmatprep.subr.mxu0 0.0
  %3258 = vmatpush1.msra.mxu0 0.0
  %3259 = vmatprep.subr.mxu0 0.0
  %3260 = vmatpush1.msra.mxu0 0.0
  %3261 = vmatprep.subr.mxu0 0.0
  %3262 = vmatpush1.msra.mxu0 0.0
  %3263 = vmatprep.subr.mxu0 0.0
  %3264 = vmatpush1.msra.mxu0 0.0
  %3265 = vmatprep.subr.mxu0 0.0
  %3266 = vmatpush1.msra.mxu0 0.0
  %3267 = vmatprep.subr.mxu0 0.0
  %3268 = vmatpush1.msra.mxu0 0.0
  %3269 = vmatprep.subr.mxu0 0.0
  %3270 = vmatpush1.msra.mxu0 0.0
  %3271 = vmatprep.subr.mxu0 0.0
  %3272 = vmatpush1.msra.mxu0 0.0
  %3273 = vmatprep.subr.mxu0 0.0
  %3274 = vmatpush1.msra.mxu0 0.0
  %3275 = vmatprep.subr.mxu0 0.0
  %3276 = vmatpush1.msra.mxu0 0.0
  %3277 = vmatprep.subr.mxu0 0.0
  %3278 = vmatpush1.msra.mxu0 0.0
  %3279 = vmatprep.subr.mxu0 0.0
  %3280 = vmatpush1.msra.mxu0 0.0
  %3281 = vmatprep.subr.mxu0 0.0
  %3282 = vmatpush1.msra.mxu0 0.0
  %3283 = vmatprep.subr.mxu0 0.0
  %3284 = vmatpush1.msra.mxu0 0.0
  %3285 = vmatprep.subr.mxu0 0.0
  %3286 = vmatpush1.msra.mxu0 0.0
  %3287 = vmatprep.subr.mxu0 0.0
  %3288 = vmatpush1.msra.mxu0 0.0
  %3289 = vmatprep.subr.mxu0 0.0
  %3290 = vmatpush1.msra.mxu0 0.0
  %3291 = vmatprep.subr.mxu0 0.0
  %3292 = vmatpush1.msra.mxu0 0.0
  %3293 = vmatprep.subr.mxu0 0.0
  %3294 = vmatpush1.msra.mxu0 0.0
  %3295 = vmatprep.subr.mxu0 0.0
  %3296 = vmatpush1.msra.mxu0 0.0
  %3297 = vmatprep.subr.mxu0 0.0
  %3298 = vmatpush1.msra.mxu0 0.0
  %3299 = vmatprep.subr.mxu0 0.0
  %3300 = vmatpush1.msra.mxu0 0.0
  %3301 = vmatprep.subr.mxu0 0.0
  %3302 = vmatpush1.msra.mxu0 0.0
  %3303 = vmatprep.subr.mxu0 0.0
  %3304 = vmatpush1.msra.mxu0 0.0
  %3305 = vmatprep.subr.mxu0 0.0
  %3306 = vmatpush1.msra.mxu0 0.0
  %3307 = vmatprep.subr.mxu0 0.0
  %3308 = vmatpush1.msra.mxu0 0.0
  %3309 = vmatprep.subr.mxu0 0.0
  %3310 = vmatpush1.msra.mxu0 0.0
  %3311 = vmatprep.subr.mxu0 0.0
  %3312 = vmatpush1.msra.mxu0 0.0
  %3313 = vmatprep.subr.mxu0 0.0
  %3314 = vmatpush1.msra.mxu0 0.0
  %3315 = vmatprep.subr.mxu0 0.0
  %3316 = vmatpush1.msra.mxu0 0.0
  %3317 = vmatprep.subr.mxu0 0.0
  %3318 = vmatpush1.msra.mxu0 0.0
  %3319 = vmatprep.mubr.f32.mxu0 0.0
  %3320 = vmatmul.mubr.f32.gmra.mrb[0].mxu0 %v3187
  %v3321 = vpop.f32.mrb[0].mxu0
  %v3322 = vadd.f32 0.0, %v3321
  %v3323 = vpop.f32.mrb[0].mxu0
  %3324 = vmatprep.mubr.f32.mxu0 0.0
  %3325 = vmatmul.mubr.f32.gmra.mrb[0].mxu0 %v3190
  %v3326 = vpop.f32.mrb[0].mxu0
  %v3327 = vadd.f32 0.0, %v3326
  %v3328 = vpop.f32.mrb[0].mxu0
  %3329 = vmatprep.mubr.f32.mxu0 0.0
  %3330 = vmatmul.mubr.f32.gmra.mrb[0].mxu0 %v3193
  %v3331 = vpop.f32.mrb[0].mxu0
  %v3332 = vadd.f32 0.0, %v3331
  %v3333 = vpop.f32.mrb[0].mxu0
  %3334 = vmatprep.mubr.f32.mxu0 0.0
  %3335 = vmatmul.mubr.f32.gmra.mrb[0].mxu0 %v3196
  %v3336 = vpop.f32.mrb[0].mxu0
  %v3337 = vadd.f32 0.0, %v3336
  %v3338 = vpop.f32.mrb[0].mxu0
  %3339 = vmatprep.mubr.f32.mxu0 0.0
  %3340 = vmatmul.mubr.f32.gmra.mrb[0].mxu0 %v3199
  %v3341 = vpop.f32.mrb[0].mxu0
  %v3342 = vadd.f32 0.0, %v3341
  %v3343 = vpop.f32.mrb[0].mxu0
  %3344 = vmatprep.mubr.f32.mxu0 0.0
  %3345 = vmatmul.mubr.f32.gmra.mrb[0].mxu0 %v3202
  %v3346 = vpop.f32.mrb[0].mxu0
  %v3347 = vadd.f32 0.0, %v3346
  %v3348 = vpop.f32.mrb[0].mxu0
  %3349 = vmatprep.mubr.f32.mxu0 0.0
  %3350 = vmatmul.mubr.f32.gmra.mrb[0].mxu0 %v3205
  %v3351 = vpop.f32.mrb[0].mxu0
  %v3352 = vadd.f32 0.0, %v3351
  %v3353 = vpop.f32.mrb[0].mxu0
  %3354 = vmatprep.mubr.f32.mxu0 0.0
  %3355 = vmatmul.mubr.f32.gmra.mrb[0].mxu0 %v3208
  %v3356 = vpop.f32.mrb[0].mxu0
  %v3357 = vadd.f32 0.0, %v3356
  %v3358 = vpop.f32.mrb[0].mxu0
  %3359 = vmatprep.mubr.f32.mxu0 0.0
  %3360 = vmatmul.mubr.f32.gmra.mrb[0].mxu0 %v3211
  %v3361 = vpop.f32.mrb[0].mxu0
  %v3362 = vadd.f32 0.0, %v3361
  %v3363 = vpop.f32.mrb[0].mxu0
  %3364 = vmatprep.mubr.f32.mxu0 0.0
  %3365 = vmatmul.mubr.f32.gmra.mrb[0].mxu0 %v3214
  %v3366 = vpop.f32.mrb[0].mxu0
  %v3367 = vadd.f32 0.0, %v3366
  %v3368 = vpop.f32.mrb[0].mxu0
  %3369 = vmatprep.mubr.f32.mxu0 0.0
  %3370 = vmatmul.mubr.f32.gmra.mrb[0].mxu0 %v3217
  %v3371 = vpop.f32.mrb[0].mxu0
  %v3372 = vpop.f32.mrb[0].mxu0
  %3373 = vmatprep.mubr.f32.mxu0 0.0
  %3374 = vmatmul.mubr.f32.gmra.mrb[0].mxu0 %v3220
  %v3375 = vpop.f32.mrb[0].mxu0
  %v3376 = vpop.f32.mrb[0].mxu0
  %3377 = vmatprep.mubr.f32.mxu0 0.0
  %3378 = vmatmul.mubr.f32.gmra.mrb[0].mxu0 %v3223
  %v3379 = vpop.f32.mrb[0].mxu0
  %v3380 = vpop.f32.mrb[0].mxu0
  %3381 = vmatprep.mubr.f32.mxu0 0.0
  %3382 = vmatmul.mubr.f32.gmra.mrb[0].mxu0 %v3226
  %v3383 = vpop.f32.mrb[0].mxu0
  %v3384 = vadd.f32 0.0, %v3383
  %v3385 = vpop.f32.mrb[0].mxu0
  %3386 = vmatprep.mubr.f32.mxu0 0.0
  %3387 = vmatmul.mubr.f32.gmra.mrb[0].mxu0 %v3229
  %v3388 = vpop.f32.mrb[0].mxu0
  %v3389 = vadd.f32 0.0, %v3388
  %v3390 = vpop.f32.mrb[0].mxu0
  %3391 = vmatprep.mubr.f32.mxu0 0.0
  %3392 = vmatmul.mubr.f32.gmra.mrb[0].mxu0 %v3232
  %v3393 = vpop.f32.mrb[0].mxu0
  %v3394 = vadd.f32 0.0, %v3393
  %v3395 = vpop.f32.mrb[0].mxu0
  %3396 = vmatprep.mubr.f32.mxu0 0.0
  %3397 = vmatmul.mubr.f32.gmra.mrb[0].mxu0 %v3235
  %v3398 = vpop.f32.mrb[0].mxu0
  %v3399 = vadd.f32 0.0, %v3398
  %v3400 = vpop.f32.mrb[0].mxu0
  %3401 = vmatprep.mubr.f32.mxu0 0.0
  %3402 = vmatmul.mubr.f32.gmra.mrb[0].mxu0 %v3238
  %v3403 = vpop.f32.mrb[0].mxu0
  %v3404 = vadd.f32 0.0, %v3403
  %v3405 = vpop.f32.mrb[0].mxu0
  %3406 = vmatprep.mubr.f32.mxu0 0.0
  %3407 = vmatmul.mubr.f32.gmra.mrb[0].mxu0 %v3241
  %v3408 = vpop.f32.mrb[0].mxu0
  %v3409 = vadd.f32 0.0, %v3408
  %v3410 = vpop.f32.mrb[0].mxu0
  %3411 = vmatprep.mubr.f32.mxu0 0.0
  %3412 = vmatmul.mubr.f32.gmra.mrb[0].mxu0 %v3244
  %v3413 = vpop.f32.mrb[0].mxu0
  %v3414 = vadd.f32 0.0, %v3413
  %v3415 = vpop.f32.mrb[0].mxu0
  %3416 = vmatprep.mubr.f32.mxu0 0.0
  %3417 = vmatmul.mubr.f32.gmra.mrb[0].mxu0 %v3247
  %v3418 = vpop.f32.mrb[0].mxu0
  %v3419 = vadd.f32 0.0, %v3418
  %v3420 = vpop.f32.mrb[0].mxu0
  %3421 = vmatprep.mubr.f32.mxu0 0.0
  %3422 = vmatmul.mubr.f32.gmra.mrb[0].mxu0 %v3250
  %v3423 = vpop.f32.mrb[0].mxu0
  %v3424 = vadd.f32 0.0, %v3423
  %v3425 = vpop.f32.mrb[0].mxu0
  %3426 = vmatprep.mubr.f32.mxu0 0.0
  %3427 = vmatmul.mubr.f32.gmra.mrb[0].mxu0 %v3253
  %v3428 = vpop.f32.mrb[0].mxu0
  %v3429 = vadd.f32 0.0, %v3428
  %v3430 = vpop.f32.mrb[0].mxu0
  %3431 = vdwg.mxu0
  %v3433 = vsel %vm39, %v3137, 0
  %v3436 = vsel %vm39, %v3138, 0
  %v3439 = vsel %vm39, %v3139, 0
  %v3442 = vsel %vm39, %v3140, 0
  %v3445 = vsel %vm39, %v3141, 0
  %v3448 = vsel %vm39, %v3142, 0
  %v3451 = vsel %vm39, %v3143, 0
  %v3454 = vsel %vm39, %v3144, 0
  %v3457 = vsel %vm39, %v3145, 0
  %v3460 = vsel %vm39, %v3146, 0
  %v3463 = vsel %vm39, %v3147, 0
  %v3466 = vsel %vm39, %v3148, 0
  %v3469 = vsel %vm39, %v3149, 0
  %v3472 = vsel %vm39, %v3150, 0
  %v3475 = vsel %vm39, %v3151, 0
  %v3478 = vsel %vm39, %v3152, 0
  %v3481 = vsel %vm39, %v3153, 0
  %v3484 = vsel %vm39, %v3154, 0
  %v3487 = vsel %vm39, %v3155, 0
  %v3490 = vsel %vm39, %v3156, 0
  %v3493 = vsel %vm39, %v3157, 0
  %v3496 = vsel %vm39, %v3158, 0
  %v3499 = vsel %vm39, %v3159, 0
  %3501 = vmatprep.subr.mxu0 0.0
  %3502 = vmatpush1.msra.mxu0 %v3160
  %3503 = vmatprep.subr.mxu0 0.0
  %3504 = vmatpush1.msra.mxu0 0.0
  %3505 = vmatprep.subr.mxu0 0.0
  %3506 = vmatpush1.msra.mxu0 0.0
  %3507 = vmatprep.subr.mxu0 0.0
  %3508 = vmatpush1.msra.mxu0 0.0
  %3509 = vmatprep.subr.mxu0 0.0
  %3510 = vmatpush1.msra.mxu0 0.0
  %3511 = vmatprep.subr.mxu0 0.0
  %3512 = vmatpush1.msra.mxu0 0.0
  %3513 = vmatprep.subr.mxu0 0.0
  %3514 = vmatpush1.msra.mxu0 0.0
  %3515 = vmatprep.subr.mxu0 0.0
  %3516 = vmatpush1.msra.mxu0 0.0
  %3517 = vmatprep.subr.mxu0 0.0
  %3518 = vmatpush1.msra.mxu0 0.0
  %3519 = vmatprep.subr.mxu0 0.0
  %3520 = vmatpush1.msra.mxu0 0.0
  %3521 = vmatprep.subr.mxu0 0.0
  %3522 = vmatpush1.msra.mxu0 0.0
  %3523 = vmatprep.subr.mxu0 0.0
  %3524 = vmatpush1.msra.mxu0 0.0
  %3525 = vmatprep.subr.mxu0 0.0
  %3526 = vmatpush1.msra.mxu0 0.0
  %3527 = vmatprep.subr.mxu0 0.0
  %3528 = vmatpush1.msra.mxu0 0.0
  %3529 = vmatprep.subr.mxu0 0.0
  %3530 = vmatpush1.msra.mxu0 0.0
  %3531 = vmatprep.subr.mxu0 0.0
  %3532 = vmatpush1.msra.mxu0 0.0
  %3533 = vmatprep.subr.mxu0 0.0
  %3534 = vmatpush1.msra.mxu0 0.0
  %3535 = vmatprep.subr.mxu0 0.0
  %3536 = vmatpush1.msra.mxu0 0.0
  %3537 = vmatprep.subr.mxu0 0.0
  %3538 = vmatpush1.msra.mxu0 0.0
  %3539 = vmatprep.subr.mxu0 0.0
  %3540 = vmatpush1.msra.mxu0 0.0
  %3541 = vmatprep.subr.mxu0 0.0
  %3542 = vmatpush1.msra.mxu0 0.0
  %3543 = vmatprep.subr.mxu0 0.0
  %3544 = vmatpush1.msra.mxu0 0.0
  %3545 = vmatprep.subr.mxu0 0.0
  %3546 = vmatpush1.msra.mxu0 0.0
  %3547 = vmatprep.subr.mxu0 0.0
  %3548 = vmatpush1.msra.mxu0 0.0
  %3549 = vmatprep.subr.mxu0 0.0
  %3550 = vmatpush1.msra.mxu0 0.0
  %3551 = vmatprep.subr.mxu0 0.0
  %3552 = vmatpush1.msra.mxu0 0.0
  %3553 = vmatprep.subr.mxu0 0.0
  %3554 = vmatpush1.msra.mxu0 0.0
  %3555 = vmatprep.subr.mxu0 0.0
  %3556 = vmatpush1.msra.mxu0 0.0
  %3557 = vmatprep.subr.mxu0 0.0
  %3558 = vmatpush1.msra.mxu0 0.0
  %3559 = vmatprep.subr.mxu0 0.0
  %3560 = vmatpush1.msra.mxu0 0.0
  %3561 = vmatprep.subr.mxu0 0.0
  %3562 = vmatpush1.msra.mxu0 0.0
  %3563 = vmatprep.subr.mxu0 0.0
  %3564 = vmatpush1.msra.mxu0 0.0
  %3565 = vmatprep.mubr.f32.mxu0 0.0
  %3566 = vmatmul.mubr.f32.gmra.mrb[0].mxu0 %v3433
  %v3567 = vpop.f32.mrb[0].mxu0
  %v3568 = vadd.f32 %v3322, %v3567
  %v3569 = vpop.f32.mrb[0].mxu0
  %3570 = vmatprep.mubr.f32.mxu0 0.0
  %3571 = vmatmul.mubr.f32.gmra.mrb[0].mxu0 %v3436
  %v3572 = vpop.f32.mrb[0].mxu0
  %v3573 = vadd.f32 %v3327, %v3572
  %v3574 = vpop.f32.mrb[0].mxu0
  %3575 = vmatprep.mubr.f32.mxu0 0.0
  %3576 = vmatmul.mubr.f32.gmra.mrb[0].mxu0 %v3439
  %v3577 = vpop.f32.mrb[0].mxu0
  %v3578 = vadd.f32 %v3332, %v3577
  %v3579 = vpop.f32.mrb[0].mxu0
  %3580 = vmatprep.mubr.f32.mxu0 0.0
  %3581 = vmatmul.mubr.f32.gmra.mrb[0].mxu0 %v3442
  %v3582 = vpop.f32.mrb[0].mxu0
  %v3583 = vadd.f32 %v3337, %v3582
  %v3584 = vpop.f32.mrb[0].mxu0
  %3585 = vmatprep.mubr.f32.mxu0 0.0
  %3586 = vmatmul.mubr.f32.gmra.mrb[0].mxu0 %v3445
  %v3587 = vpop.f32.mrb[0].mxu0
  %v3588 = vadd.f32 %v3342, %v3587
  %v3589 = vpop.f32.mrb[0].mxu0
  %3590 = vmatprep.mubr.f32.mxu0 0.0
  %3591 = vmatmul.mubr.f32.gmra.mrb[0].mxu0 %v3448
  %v3592 = vpop.f32.mrb[0].mxu0
  %v3593 = vadd.f32 %v3347, %v3592
  %v3594 = vpop.f32.mrb[0].mxu0
  %3595 = vmatprep.mubr.f32.mxu0 0.0
  %3596 = vmatmul.mubr.f32.gmra.mrb[0].mxu0 %v3451
  %v3597 = vpop.f32.mrb[0].mxu0
  %v3598 = vadd.f32 %v3352, %v3597
  %v3599 = vpop.f32.mrb[0].mxu0
  %3600 = vmatprep.mubr.f32.mxu0 0.0
  %3601 = vmatmul.mubr.f32.gmra.mrb[0].mxu0 %v3454
  %v3602 = vpop.f32.mrb[0].mxu0
  %v3603 = vadd.f32 %v3357, %v3602
  %v3604 = vpop.f32.mrb[0].mxu0
  %3605 = vmatprep.mubr.f32.mxu0 0.0
  %3606 = vmatmul.mubr.f32.gmra.mrb[0].mxu0 %v3457
  %v3607 = vpop.f32.mrb[0].mxu0
  %v3608 = vadd.f32 %v3362, %v3607
  %v3609 = vpop.f32.mrb[0].mxu0
  %3610 = vmatprep.mubr.f32.mxu0 0.0
  %3611 = vmatmul.mubr.f32.gmra.mrb[0].mxu0 %v3460
  %v3612 = vpop.f32.mrb[0].mxu0
  %v3613 = vadd.f32 %v3367, %v3612
  %v3614 = vpop.f32.mrb[0].mxu0
  %3615 = vmatprep.mubr.f32.mxu0 0.0
  %3616 = vmatmul.mubr.f32.gmra.mrb[0].mxu0 %v3463
  %v3617 = vpop.f32.mrb[0].mxu0
  %v3618 = vpop.f32.mrb[0].mxu0
  %3619 = vmatprep.mubr.f32.mxu0 0.0
  %3620 = vmatmul.mubr.f32.gmra.mrb[0].mxu0 %v3466
  %v3621 = vpop.f32.mrb[0].mxu0
  %v3622 = vpop.f32.mrb[0].mxu0
  %3623 = vmatprep.mubr.f32.mxu0 0.0
  %3624 = vmatmul.mubr.f32.gmra.mrb[0].mxu0 %v3469
  %v3625 = vpop.f32.mrb[0].mxu0
  %v3626 = vpop.f32.mrb[0].mxu0
  %3627 = vmatprep.mubr.f32.mxu0 0.0
  %3628 = vmatmul.mubr.f32.gmra.mrb[0].mxu0 %v3472
  %v3629 = vpop.f32.mrb[0].mxu0
  %v3630 = vadd.f32 %v3384, %v3629
  %v3631 = vpop.f32.mrb[0].mxu0
  %3632 = vmatprep.mubr.f32.mxu0 0.0
  %3633 = vmatmul.mubr.f32.gmra.mrb[0].mxu0 %v3475
  %v3634 = vpop.f32.mrb[0].mxu0
  %v3635 = vadd.f32 %v3389, %v3634
  %v3636 = vpop.f32.mrb[0].mxu0
  %3637 = vmatprep.mubr.f32.mxu0 0.0
  %3638 = vmatmul.mubr.f32.gmra.mrb[0].mxu0 %v3478
  %v3639 = vpop.f32.mrb[0].mxu0
  %v3640 = vadd.f32 %v3394, %v3639
  %v3641 = vpop.f32.mrb[0].mxu0
  %3642 = vmatprep.mubr.f32.mxu0 0.0
  %3643 = vmatmul.mubr.f32.gmra.mrb[0].mxu0 %v3481
  %v3644 = vpop.f32.mrb[0].mxu0
  %v3645 = vadd.f32 %v3399, %v3644
  %v3646 = vpop.f32.mrb[0].mxu0
  %3647 = vmatprep.mubr.f32.mxu0 0.0
  %3648 = vmatmul.mubr.f32.gmra.mrb[0].mxu0 %v3484
  %v3649 = vpop.f32.mrb[0].mxu0
  %v3650 = vadd.f32 %v3404, %v3649
  %v3651 = vpop.f32.mrb[0].mxu0
  %3652 = vmatprep.mubr.f32.mxu0 0.0
  %3653 = vmatmul.mubr.f32.gmra.mrb[0].mxu0 %v3487
  %v3654 = vpop.f32.mrb[0].mxu0
  %v3655 = vadd.f32 %v3409, %v3654
  %v3656 = vpop.f32.mrb[0].mxu0
  %3657 = vmatprep.mubr.f32.mxu0 0.0
  %3658 = vmatmul.mubr.f32.gmra.mrb[0].mxu0 %v3490
  %v3659 = vpop.f32.mrb[0].mxu0
  %v3660 = vadd.f32 %v3414, %v3659
  %v3661 = vpop.f32.mrb[0].mxu0
  %3662 = vmatprep.mubr.f32.mxu0 0.0
  %3663 = vmatmul.mubr.f32.gmra.mrb[0].mxu0 %v3493
  %v3664 = vpop.f32.mrb[0].mxu0
  %v3665 = vadd.f32 %v3419, %v3664
  %v3666 = vpop.f32.mrb[0].mxu0
  %3667 = vmatprep.mubr.f32.mxu0 0.0
  %3668 = vmatmul.mubr.f32.gmra.mrb[0].mxu0 %v3496
  %v3669 = vpop.f32.mrb[0].mxu0
  %v3670 = vadd.f32 %v3424, %v3669
  %v3671 = vpop.f32.mrb[0].mxu0
  %3672 = vmatprep.mubr.f32.mxu0 0.0
  %3673 = vmatmul.mubr.f32.gmra.mrb[0].mxu0 %v3499
  %v3674 = vpop.f32.mrb[0].mxu0
  %v3675 = vadd.f32 %v3429, %v3674
  %v3676 = vpop.f32.mrb[0].mxu0
  %3677 = vdwg.mxu0
  %v3678 = vld [vmem:[#allocation3 + $0x2] sm:$0xff]
  %v3679 = vld [vmem:[#allocation3 + $0xa] sm:$0xff]
  %v3680 = vld [vmem:[#allocation3 + $0x12] sm:$0xff]
  %v3681 = vld [vmem:[#allocation3 + $0x1a] sm:$0xff]
  %v3682 = vld [vmem:[#allocation3 + $0x22] sm:$0xff]
  %v3683 = vld [vmem:[#allocation3 + $0x2a] sm:$0xff]
  %v3684 = vld [vmem:[#allocation3 + $0x32] sm:$0xff]
  %v3685 = vld [vmem:[#allocation3 + $0x3a] sm:$0xff]
  %v3686 = vld [vmem:[#allocation3 + $0x42] sm:$0xff]
  %v3687 = vld [vmem:[#allocation3 + $0x4a] sm:$0xff]
  %v3688 = vld [vmem:[#allocation3 + $0x52] sm:$0xff]
  %v3689 = vld [vmem:[#allocation3 + $0x5a] sm:$0xff]
  %v3690 = vld [vmem:[#allocation3 + $0x62] sm:$0xff]
  %v3691 = vld [vmem:[#allocation3 + $0x6a] sm:$0xff]
  %v3692 = vld [vmem:[#allocation3 + $0x72] sm:$0xff]
  %v3693 = vld [vmem:[#allocation3 + $0x7a] sm:$0xff]
  %v3694 = vld [vmem:[#allocation3 + $0x82] sm:$0xff]
  %v3695 = vld [vmem:[#allocation3 + $0x8a] sm:$0xff]
  %v3696 = vld [vmem:[#allocation3 + $0x92] sm:$0xff]
  %v3697 = vld [vmem:[#allocation3 + $0x9a] sm:$0xff]
  %v3698 = vld [vmem:[#allocation3 + $0xa2] sm:$0xff]
  %v3699 = vld [vmem:[#allocation3 + $0xaa] sm:$0xff]
  %v3700 = vld [vmem:[#allocation3 + $0xb2] sm:$0xff]
  %s3701 = scalar_lea.vmem %s5, 16
  %v3702 = vld [vmem:[%s3701] sm:$0xff]
  %v3704 = vsel %vm39, %v3678, 0
  %v3707 = vsel %vm39, %v3679, 0
  %v3710 = vsel %vm39, %v3680, 0
  %v3713 = vsel %vm39, %v3681, 0
  %v3716 = vsel %vm39, %v3682, 0
  %v3719 = vsel %vm39, %v3683, 0
  %v3722 = vsel %vm39, %v3684, 0
  %v3725 = vsel %vm39, %v3685, 0
  %v3728 = vsel %vm39, %v3686, 0
  %v3731 = vsel %vm39, %v3687, 0
  %v3734 = vsel %vm39, %v3688, 0
  %v3737 = vsel %vm39, %v3689, 0
  %v3740 = vsel %vm39, %v3690, 0
  %v3743 = vsel %vm39, %v3691, 0
  %v3746 = vsel %vm39, %v3692, 0
  %v3749 = vsel %vm39, %v3693, 0
  %v3752 = vsel %vm39, %v3694, 0
  %v3755 = vsel %vm39, %v3695, 0
  %v3758 = vsel %vm39, %v3696, 0
  %v3761 = vsel %vm39, %v3697, 0
  %v3764 = vsel %vm39, %v3698, 0
  %v3767 = vsel %vm39, %v3699, 0
  %v3770 = vsel %vm39, %v3700, 0
  %3772 = vmatprep.subr.mxu0 0.0
  %3773 = vmatpush1.msra.mxu0 %v3702
  %3774 = vmatprep.subr.mxu0 0.0
  %3775 = vmatpush1.msra.mxu0 0.0
  %3776 = vmatprep.subr.mxu0 0.0
  %3777 = vmatpush1.msra.mxu0 0.0
  %3778 = vmatprep.subr.mxu0 0.0
  %3779 = vmatpush1.msra.mxu0 0.0
  %3780 = vmatprep.subr.mxu0 0.0
  %3781 = vmatpush1.msra.mxu0 0.0
  %3782 = vmatprep.subr.mxu0 0.0
  %3783 = vmatpush1.msra.mxu0 0.0
  %3784 = vmatprep.subr.mxu0 0.0
  %3785 = vmatpush1.msra.mxu0 0.0
  %3786 = vmatprep.subr.mxu0 0.0
  %3787 = vmatpush1.msra.mxu0 0.0
  %3788 = vmatprep.subr.mxu0 0.0
  %3789 = vmatpush1.msra.mxu0 0.0
  %3790 = vmatprep.subr.mxu0 0.0
  %3791 = vmatpush1.msra.mxu0 0.0
  %3792 = vmatprep.subr.mxu0 0.0
  %3793 = vmatpush1.msra.mxu0 0.0
  %3794 = vmatprep.subr.mxu0 0.0
  %3795 = vmatpush1.msra.mxu0 0.0
  %3796 = vmatprep.subr.mxu0 0.0
  %3797 = vmatpush1.msra.mxu0 0.0
  %3798 = vmatprep.subr.mxu0 0.0
  %3799 = vmatpush1.msra.mxu0 0.0
  %3800 = vmatprep.subr.mxu0 0.0
  %3801 = vmatpush1.msra.mxu0 0.0
  %3802 = vmatprep.subr.mxu0 0.0
  %3803 = vmatpush1.msra.mxu0 0.0
  %3804 = vmatprep.subr.mxu0 0.0
  %3805 = vmatpush1.msra.mxu0 0.0
  %3806 = vmatprep.subr.mxu0 0.0
  %3807 = vmatpush1.msra.mxu0 0.0
  %3808 = vmatprep.subr.mxu0 0.0
  %3809 = vmatpush1.msra.mxu0 0.0
  %3810 = vmatprep.subr.mxu0 0.0
  %3811 = vmatpush1.msra.mxu0 0.0
  %3812 = vmatprep.subr.mxu0 0.0
  %3813 = vmatpush1.msra.mxu0 0.0
  %3814 = vmatprep.subr.mxu0 0.0
  %3815 = vmatpush1.msra.mxu0 0.0
  %3816 = vmatprep.subr.mxu0 0.0
  %3817 = vmatpush1.msra.mxu0 0.0
  %3818 = vmatprep.subr.mxu0 0.0
  %3819 = vmatpush1.msra.mxu0 0.0
  %3820 = vmatprep.subr.mxu0 0.0
  %3821 = vmatpush1.msra.mxu0 0.0
  %3822 = vmatprep.subr.mxu0 0.0
  %3823 = vmatpush1.msra.mxu0 0.0
  %3824 = vmatprep.subr.mxu0 0.0
  %3825 = vmatpush1.msra.mxu0 0.0
  %3826 = vmatprep.subr.mxu0 0.0
  %3827 = vmatpush1.msra.mxu0 0.0
  %3828 = vmatprep.subr.mxu0 0.0
  %3829 = vmatpush1.msra.mxu0 0.0
  %3830 = vmatprep.subr.mxu0 0.0
  %3831 = vmatpush1.msra.mxu0 0.0
  %3832 = vmatprep.subr.mxu0 0.0
  %3833 = vmatpush1.msra.mxu0 0.0
  %3834 = vmatprep.subr.mxu0 0.0
  %3835 = vmatpush1.msra.mxu0 0.0
  %3836 = vmatprep.mubr.f32.mxu0 0.0
  %3837 = vmatmul.mubr.f32.gmra.mrb[0].mxu0 %v3704
  %v3838 = vpop.f32.mrb[0].mxu0
  %v3839 = vadd.f32 0.0, %v3838
  %v3840 = vpop.f32.mrb[0].mxu0
  %3841 = vmatprep.mubr.f32.mxu0 0.0
  %3842 = vmatmul.mubr.f32.gmra.mrb[0].mxu0 %v3707
  %v3843 = vpop.f32.mrb[0].mxu0
  %v3844 = vadd.f32 0.0, %v3843
  %v3845 = vpop.f32.mrb[0].mxu0
  %3846 = vmatprep.mubr.f32.mxu0 0.0
  %3847 = vmatmul.mubr.f32.gmra.mrb[0].mxu0 %v3710
  %v3848 = vpop.f32.mrb[0].mxu0
  %v3849 = vadd.f32 0.0, %v3848
  %v3850 = vpop.f32.mrb[0].mxu0
  %3851 = vmatprep.mubr.f32.mxu0 0.0
  %3852 = vmatmul.mubr.f32.gmra.mrb[0].mxu0 %v3713
  %v3853 = vpop.f32.mrb[0].mxu0
  %v3854 = vadd.f32 0.0, %v3853
  %v3855 = vpop.f32.mrb[0].mxu0
  %3856 = vmatprep.mubr.f32.mxu0 0.0
  %3857 = vmatmul.mubr.f32.gmra.mrb[0].mxu0 %v3716
  %v3858 = vpop.f32.mrb[0].mxu0
  %v3859 = vadd.f32 0.0, %v3858
  %v3860 = vpop.f32.mrb[0].mxu0
  %3861 = vmatprep.mubr.f32.mxu0 0.0
  %3862 = vmatmul.mubr.f32.gmra.mrb[0].mxu0 %v3719
  %v3863 = vpop.f32.mrb[0].mxu0
  %v3864 = vadd.f32 0.0, %v3863
  %v3865 = vpop.f32.mrb[0].mxu0
  %3866 = vmatprep.mubr.f32.mxu0 0.0
  %3867 = vmatmul.mubr.f32.gmra.mrb[0].mxu0 %v3722
  %v3868 = vpop.f32.mrb[0].mxu0
  %v3869 = vadd.f32 0.0, %v3868
  %v3870 = vpop.f32.mrb[0].mxu0
  %3871 = vmatprep.mubr.f32.mxu0 0.0
  %3872 = vmatmul.mubr.f32.gmra.mrb[0].mxu0 %v3725
  %v3873 = vpop.f32.mrb[0].mxu0
  %v3874 = vadd.f32 0.0, %v3873
  %v3875 = vpop.f32.mrb[0].mxu0
  %3876 = vmatprep.mubr.f32.mxu0 0.0
  %3877 = vmatmul.mubr.f32.gmra.mrb[0].mxu0 %v3728
  %v3878 = vpop.f32.mrb[0].mxu0
  %v3879 = vadd.f32 0.0, %v3878
  %v3880 = vpop.f32.mrb[0].mxu0
  %3881 = vmatprep.mubr.f32.mxu0 0.0
  %3882 = vmatmul.mubr.f32.gmra.mrb[0].mxu0 %v3731
  %v3883 = vpop.f32.mrb[0].mxu0
  %v3884 = vadd.f32 0.0, %v3883
  %v3885 = vpop.f32.mrb[0].mxu0
  %3886 = vmatprep.mubr.f32.mxu0 0.0
  %3887 = vmatmul.mubr.f32.gmra.mrb[0].mxu0 %v3734
  %v3888 = vpop.f32.mrb[0].mxu0
  %v3889 = vpop.f32.mrb[0].mxu0
  %3890 = vmatprep.mubr.f32.mxu0 0.0
  %3891 = vmatmul.mubr.f32.gmra.mrb[0].mxu0 %v3737
  %v3892 = vpop.f32.mrb[0].mxu0
  %v3893 = vpop.f32.mrb[0].mxu0
  %3894 = vmatprep.mubr.f32.mxu0 0.0
  %3895 = vmatmul.mubr.f32.gmra.mrb[0].mxu0 %v3740
  %v3896 = vpop.f32.mrb[0].mxu0
  %v3897 = vpop.f32.mrb[0].mxu0
  %3898 = vmatprep.mubr.f32.mxu0 0.0
  %3899 = vmatmul.mubr.f32.gmra.mrb[0].mxu0 %v3743
  %v3900 = vpop.f32.mrb[0].mxu0
  %v3901 = vadd.f32 0.0, %v3900
  %v3902 = vpop.f32.mrb[0].mxu0
  %3903 = vmatprep.mubr.f32.mxu0 0.0
  %3904 = vmatmul.mubr.f32.gmra.mrb[0].mxu0 %v3746
  %v3905 = vpop.f32.mrb[0].mxu0
  %v3906 = vadd.f32 0.0, %v3905
  %v3907 = vpop.f32.mrb[0].mxu0
  %3908 = vmatprep.mubr.f32.mxu0 0.0
  %3909 = vmatmul.mubr.f32.gmra.mrb[0].mxu0 %v3749
  %v3910 = vpop.f32.mrb[0].mxu0
  %v3911 = vadd.f32 0.0, %v3910
  %v3912 = vpop.f32.mrb[0].mxu0
  %3913 = vmatprep.mubr.f32.mxu0 0.0
  %3914 = vmatmul.mubr.f32.gmra.mrb[0].mxu0 %v3752
  %v3915 = vpop.f32.mrb[0].mxu0
  %v3916 = vadd.f32 0.0, %v3915
  %v3917 = vpop.f32.mrb[0].mxu0
  %3918 = vmatprep.mubr.f32.mxu0 0.0
  %3919 = vmatmul.mubr.f32.gmra.mrb[0].mxu0 %v3755
  %v3920 = vpop.f32.mrb[0].mxu0
  %v3921 = vadd.f32 0.0, %v3920
  %v3922 = vpop.f32.mrb[0].mxu0
  %3923 = vmatprep.mubr.f32.mxu0 0.0
  %3924 = vmatmul.mubr.f32.gmra.mrb[0].mxu0 %v3758
  %v3925 = vpop.f32.mrb[0].mxu0
  %v3926 = vadd.f32 0.0, %v3925
  %v3927 = vpop.f32.mrb[0].mxu0
  %3928 = vmatprep.mubr.f32.mxu0 0.0
  %3929 = vmatmul.mubr.f32.gmra.mrb[0].mxu0 %v3761
  %v3930 = vpop.f32.mrb[0].mxu0
  %v3931 = vadd.f32 0.0, %v3930
  %v3932 = vpop.f32.mrb[0].mxu0
  %3933 = vmatprep.mubr.f32.mxu0 0.0
  %3934 = vmatmul.mubr.f32.gmra.mrb[0].mxu0 %v3764
  %v3935 = vpop.f32.mrb[0].mxu0
  %v3936 = vadd.f32 0.0, %v3935
  %v3937 = vpop.f32.mrb[0].mxu0
  %3938 = vmatprep.mubr.f32.mxu0 0.0
  %3939 = vmatmul.mubr.f32.gmra.mrb[0].mxu0 %v3767
  %v3940 = vpop.f32.mrb[0].mxu0
  %v3941 = vadd.f32 0.0, %v3940
  %v3942 = vpop.f32.mrb[0].mxu0
  %3943 = vmatprep.mubr.f32.mxu0 0.0
  %3944 = vmatmul.mubr.f32.gmra.mrb[0].mxu0 %v3770
  %v3945 = vpop.f32.mrb[0].mxu0
  %v3946 = vadd.f32 0.0, %v3945
  %v3947 = vpop.f32.mrb[0].mxu0
  %3948 = vdwg.mxu0
  %v3949 = vadd.f32 %v3568, %v3839
  %v3950 = vadd.f32 %v3573, %v3844
  %v3951 = vadd.f32 %v3578, %v3849
  %v3952 = vadd.f32 %v3583, %v3854
  %v3953 = vadd.f32 %v3588, %v3859
  %v3954 = vadd.f32 %v3593, %v3864
  %v3955 = vadd.f32 %v3598, %v3869
  %v3956 = vadd.f32 %v3603, %v3874
  %v3957 = vadd.f32 %v3608, %v3879
  %v3958 = vadd.f32 %v3613, %v3884
  %v3959 = vadd.f32 %v3630, %v3901
  %v3960 = vadd.f32 %v3635, %v3906
  %v3961 = vadd.f32 %v3640, %v3911
  %v3962 = vadd.f32 %v3645, %v3916
  %v3963 = vadd.f32 %v3650, %v3921
  %v3964 = vadd.f32 %v3655, %v3926
  %v3965 = vadd.f32 %v3660, %v3931
  %v3966 = vadd.f32 %v3665, %v3936
  %v3967 = vadd.f32 %v3670, %v3941
  %v3968 = vadd.f32 %v3675, %v3946
  %v3969 = vld [vmem:[#allocation3 + $0xa] sm:$0xff]
  %v3970 = vld [vmem:[#allocation3 + $0x12] sm:$0xff]
  %v3971 = vld [vmem:[#allocation3 + $0x1a] sm:$0xff]
  %v3972 = vld [vmem:[#allocation3 + $0x22] sm:$0xff]
  %v3973 = vld [vmem:[#allocation3 + $0x2a] sm:$0xff]
  %v3974 = vld [vmem:[#allocation3 + $0x32] sm:$0xff]
  %v3975 = vld [vmem:[#allocation3 + $0x3a] sm:$0xff]
  %v3976 = vld [vmem:[#allocation3 + $0x42] sm:$0xff]
  %v3977 = vld [vmem:[#allocation3 + $0x4a] sm:$0xff]
  %v3978 = vld [vmem:[#allocation3 + $0x52] sm:$0xff]
  %v3979 = vld [vmem:[#allocation3 + $0x5a] sm:$0xff]
  %v3980 = vld [vmem:[#allocation3 + $0x62] sm:$0xff]
  %v3981 = vld [vmem:[#allocation3 + $0x6a] sm:$0xff]
  %v3982 = vld [vmem:[#allocation3 + $0x72] sm:$0xff]
  %v3983 = vld [vmem:[#allocation3 + $0x7a] sm:$0xff]
  %v3984 = vld [vmem:[#allocation3 + $0x82] sm:$0xff]
  %v3985 = vld [vmem:[#allocation3 + $0x8a] sm:$0xff]
  %v3986 = vld [vmem:[#allocation3 + $0x92] sm:$0xff]
  %v3987 = vld [vmem:[#allocation3 + $0x9a] sm:$0xff]
  %v3988 = vld [vmem:[#allocation3 + $0xa2] sm:$0xff]
  %v3989 = vld [vmem:[#allocation3 + $0xaa] sm:$0xff]
  %v3990 = vld [vmem:[#allocation3 + $0xb2] sm:$0xff]
  %v3991 = vld [vmem:[#allocation3 + $0xba] sm:$0xff]
  %s3992 = scalar_lea.vmem %s5, 24
  %v3993 = vld [vmem:[%s3992] sm:$0xff]
  %v3995 = vsel %vm39, %v3969, 0
  %v3998 = vsel %vm39, %v3970, 0
  %v4001 = vsel %vm39, %v3971, 0
  %v4004 = vsel %vm39, %v3972, 0
  %v4007 = vsel %vm39, %v3973, 0
  %v4010 = vsel %vm39, %v3974, 0
  %v4013 = vsel %vm39, %v3975, 0
  %v4016 = vsel %vm39, %v3976, 0
  %v4019 = vsel %vm39, %v3977, 0
  %v4022 = vsel %vm39, %v3978, 0
  %v4025 = vsel %vm39, %v3979, 0
  %v4028 = vsel %vm39, %v3980, 0
  %v4031 = vsel %vm39, %v3981, 0
  %v4034 = vsel %vm39, %v3982, 0
  %v4037 = vsel %vm39, %v3983, 0
  %v4040 = vsel %vm39, %v3984, 0
  %v4043 = vsel %vm39, %v3985, 0
  %v4046 = vsel %vm39, %v3986, 0
  %v4049 = vsel %vm39, %v3987, 0
  %v4052 = vsel %vm39, %v3988, 0
  %v4055 = vsel %vm39, %v3989, 0
  %v4058 = vsel %vm39, %v3990, 0
  %v4061 = vsel %vm39, %v3991, 0
  %4063 = vmatprep.subr.mxu0 0.0
  %4064 = vmatpush1.msra.mxu0 %v3993
  %4065 = vmatprep.subr.mxu0 0.0
  %4066 = vmatpush1.msra.mxu0 0.0
  %4067 = vmatprep.subr.mxu0 0.0
  %4068 = vmatpush1.msra.mxu0 0.0
  %4069 = vmatprep.subr.mxu0 0.0
  %4070 = vmatpush1.msra.mxu0 0.0
  %4071 = vmatprep.subr.mxu0 0.0
  %4072 = vmatpush1.msra.mxu0 0.0
  %4073 = vmatprep.subr.mxu0 0.0
  %4074 = vmatpush1.msra.mxu0 0.0
  %4075 = vmatprep.subr.mxu0 0.0
  %4076 = vmatpush1.msra.mxu0 0.0
  %4077 = vmatprep.subr.mxu0 0.0
  %4078 = vmatpush1.msra.mxu0 0.0
  %4079 = vmatprep.subr.mxu0 0.0
  %4080 = vmatpush1.msra.mxu0 0.0
  %4081 = vmatprep.subr.mxu0 0.0
  %4082 = vmatpush1.msra.mxu0 0.0
  %4083 = vmatprep.subr.mxu0 0.0
  %4084 = vmatpush1.msra.mxu0 0.0
  %4085 = vmatprep.subr.mxu0 0.0
  %4086 = vmatpush1.msra.mxu0 0.0
  %4087 = vmatprep.subr.mxu0 0.0
  %4088 = vmatpush1.msra.mxu0 0.0
  %4089 = vmatprep.subr.mxu0 0.0
  %4090 = vmatpush1.msra.mxu0 0.0
  %4091 = vmatprep.subr.mxu0 0.0
  %4092 = vmatpush1.msra.mxu0 0.0
  %4093 = vmatprep.subr.mxu0 0.0
  %4094 = vmatpush1.msra.mxu0 0.0
  %4095 = vmatprep.subr.mxu0 0.0
  %4096 = vmatpush1.msra.mxu0 0.0
  %4097 = vmatprep.subr.mxu0 0.0
  %4098 = vmatpush1.msra.mxu0 0.0
  %4099 = vmatprep.subr.mxu0 0.0
  %4100 = vmatpush1.msra.mxu0 0.0
  %4101 = vmatprep.subr.mxu0 0.0
  %4102 = vmatpush1.msra.mxu0 0.0
  %4103 = vmatprep.subr.mxu0 0.0
  %4104 = vmatpush1.msra.mxu0 0.0
  %4105 = vmatprep.subr.mxu0 0.0
  %4106 = vmatpush1.msra.mxu0 0.0
  %4107 = vmatprep.subr.mxu0 0.0
  %4108 = vmatpush1.msra.mxu0 0.0
  %4109 = vmatprep.subr.mxu0 0.0
  %4110 = vmatpush1.msra.mxu0 0.0
  %4111 = vmatprep.subr.mxu0 0.0
  %4112 = vmatpush1.msra.mxu0 0.0
  %4113 = vmatprep.subr.mxu0 0.0
  %4114 = vmatpush1.msra.mxu0 0.0
  %4115 = vmatprep.subr.mxu0 0.0
  %4116 = vmatpush1.msra.mxu0 0.0
  %4117 = vmatprep.subr.mxu0 0.0
  %4118 = vmatpush1.msra.mxu0 0.0
  %4119 = vmatprep.subr.mxu0 0.0
  %4120 = vmatpush1.msra.mxu0 0.0
  %4121 = vmatprep.subr.mxu0 0.0
  %4122 = vmatpush1.msra.mxu0 0.0
  %4123 = vmatprep.subr.mxu0 0.0
  %4124 = vmatpush1.msra.mxu0 0.0
  %4125 = vmatprep.subr.mxu0 0.0
  %4126 = vmatpush1.msra.mxu0 0.0
  %4127 = vmatprep.mubr.f32.mxu0 0.0
  %4128 = vmatmul.mubr.f32.gmra.mrb[0].mxu0 %v3995
  %v4129 = vpop.f32.mrb[0].mxu0
  %v4130 = vadd.f32 0.0, %v4129
  %v4131 = vpop.f32.mrb[0].mxu0
  %4132 = vmatprep.mubr.f32.mxu0 0.0
  %4133 = vmatmul.mubr.f32.gmra.mrb[0].mxu0 %v3998
  %v4134 = vpop.f32.mrb[0].mxu0
  %v4135 = vadd.f32 0.0, %v4134
  %v4136 = vpop.f32.mrb[0].mxu0
  %4137 = vmatprep.mubr.f32.mxu0 0.0
  %4138 = vmatmul.mubr.f32.gmra.mrb[0].mxu0 %v4001
  %v4139 = vpop.f32.mrb[0].mxu0
  %v4140 = vadd.f32 0.0, %v4139
  %v4141 = vpop.f32.mrb[0].mxu0
  %4142 = vmatprep.mubr.f32.mxu0 0.0
  %4143 = vmatmul.mubr.f32.gmra.mrb[0].mxu0 %v4004
  %v4144 = vpop.f32.mrb[0].mxu0
  %v4145 = vadd.f32 0.0, %v4144
  %v4146 = vpop.f32.mrb[0].mxu0
  %4147 = vmatprep.mubr.f32.mxu0 0.0
  %4148 = vmatmul.mubr.f32.gmra.mrb[0].mxu0 %v4007
  %v4149 = vpop.f32.mrb[0].mxu0
  %v4150 = vadd.f32 0.0, %v4149
  %v4151 = vpop.f32.mrb[0].mxu0
  %4152 = vmatprep.mubr.f32.mxu0 0.0
  %4153 = vmatmul.mubr.f32.gmra.mrb[0].mxu0 %v4010
  %v4154 = vpop.f32.mrb[0].mxu0
  %v4155 = vadd.f32 0.0, %v4154
  %v4156 = vpop.f32.mrb[0].mxu0
  %4157 = vmatprep.mubr.f32.mxu0 0.0
  %4158 = vmatmul.mubr.f32.gmra.mrb[0].mxu0 %v4013
  %v4159 = vpop.f32.mrb[0].mxu0
  %v4160 = vadd.f32 0.0, %v4159
  %v4161 = vpop.f32.mrb[0].mxu0
  %4162 = vmatprep.mubr.f32.mxu0 0.0
  %4163 = vmatmul.mubr.f32.gmra.mrb[0].mxu0 %v4016
  %v4164 = vpop.f32.mrb[0].mxu0
  %v4165 = vadd.f32 0.0, %v4164
  %v4166 = vpop.f32.mrb[0].mxu0
  %4167 = vmatprep.mubr.f32.mxu0 0.0
  %4168 = vmatmul.mubr.f32.gmra.mrb[0].mxu0 %v4019
  %v4169 = vpop.f32.mrb[0].mxu0
  %v4170 = vadd.f32 0.0, %v4169
  %v4171 = vpop.f32.mrb[0].mxu0
  %4172 = vmatprep.mubr.f32.mxu0 0.0
  %4173 = vmatmul.mubr.f32.gmra.mrb[0].mxu0 %v4022
  %v4174 = vpop.f32.mrb[0].mxu0
  %v4175 = vadd.f32 0.0, %v4174
  %v4176 = vpop.f32.mrb[0].mxu0
  %4177 = vmatprep.mubr.f32.mxu0 0.0
  %4178 = vmatmul.mubr.f32.gmra.mrb[0].mxu0 %v4025
  %v4179 = vpop.f32.mrb[0].mxu0
  %v4180 = vpop.f32.mrb[0].mxu0
  %4181 = vmatprep.mubr.f32.mxu0 0.0
  %4182 = vmatmul.mubr.f32.gmra.mrb[0].mxu0 %v4028
  %v4183 = vpop.f32.mrb[0].mxu0
  %v4184 = vpop.f32.mrb[0].mxu0
  %4185 = vmatprep.mubr.f32.mxu0 0.0
  %4186 = vmatmul.mubr.f32.gmra.mrb[0].mxu0 %v4031
  %v4187 = vpop.f32.mrb[0].mxu0
  %v4188 = vpop.f32.mrb[0].mxu0
  %4189 = vmatprep.mubr.f32.mxu0 0.0
  %4190 = vmatmul.mubr.f32.gmra.mrb[0].mxu0 %v4034
  %v4191 = vpop.f32.mrb[0].mxu0
  %v4192 = vadd.f32 0.0, %v4191
  %v4193 = vpop.f32.mrb[0].mxu0
  %4194 = vmatprep.mubr.f32.mxu0 0.0
  %4195 = vmatmul.mubr.f32.gmra.mrb[0].mxu0 %v4037
  %v4196 = vpop.f32.mrb[0].mxu0
  %v4197 = vadd.f32 0.0, %v4196
  %v4198 = vpop.f32.mrb[0].mxu0
  %4199 = vmatprep.mubr.f32.mxu0 0.0
  %4200 = vmatmul.mubr.f32.gmra.mrb[0].mxu0 %v4040
  %v4201 = vpop.f32.mrb[0].mxu0
  %v4202 = vadd.f32 0.0, %v4201
  %v4203 = vpop.f32.mrb[0].mxu0
  %4204 = vmatprep.mubr.f32.mxu0 0.0
  %4205 = vmatmul.mubr.f32.gmra.mrb[0].mxu0 %v4043
  %v4206 = vpop.f32.mrb[0].mxu0
  %v4207 = vadd.f32 0.0, %v4206
  %v4208 = vpop.f32.mrb[0].mxu0
  %4209 = vmatprep.mubr.f32.mxu0 0.0
  %4210 = vmatmul.mubr.f32.gmra.mrb[0].mxu0 %v4046
  %v4211 = vpop.f32.mrb[0].mxu0
  %v4212 = vadd.f32 0.0, %v4211
  %v4213 = vpop.f32.mrb[0].mxu0
  %4214 = vmatprep.mubr.f32.mxu0 0.0
  %4215 = vmatmul.mubr.f32.gmra.mrb[0].mxu0 %v4049
  %v4216 = vpop.f32.mrb[0].mxu0
  %v4217 = vadd.f32 0.0, %v4216
  %v4218 = vpop.f32.mrb[0].mxu0
  %4219 = vmatprep.mubr.f32.mxu0 0.0
  %4220 = vmatmul.mubr.f32.gmra.mrb[0].mxu0 %v4052
  %v4221 = vpop.f32.mrb[0].mxu0
  %v4222 = vadd.f32 0.0, %v4221
  %v4223 = vpop.f32.mrb[0].mxu0
  %4224 = vmatprep.mubr.f32.mxu0 0.0
  %4225 = vmatmul.mubr.f32.gmra.mrb[0].mxu0 %v4055
  %v4226 = vpop.f32.mrb[0].mxu0
  %v4227 = vadd.f32 0.0, %v4226
  %v4228 = vpop.f32.mrb[0].mxu0
  %4229 = vmatprep.mubr.f32.mxu0 0.0
  %4230 = vmatmul.mubr.f32.gmra.mrb[0].mxu0 %v4058
  %v4231 = vpop.f32.mrb[0].mxu0
  %v4232 = vadd.f32 0.0, %v4231
  %v4233 = vpop.f32.mrb[0].mxu0
  %4234 = vmatprep.mubr.f32.mxu0 0.0
  %4235 = vmatmul.mubr.f32.gmra.mrb[0].mxu0 %v4061
  %v4236 = vpop.f32.mrb[0].mxu0
  %v4237 = vadd.f32 0.0, %v4236
  %v4238 = vpop.f32.mrb[0].mxu0
  %4239 = vdwg.mxu0
  %v4240 = vadd.f32 %v3949, %v4130
  %v4241 = vadd.f32 %v3950, %v4135
  %v4242 = vadd.f32 %v3951, %v4140
  %v4243 = vadd.f32 %v3952, %v4145
  %v4244 = vadd.f32 %v3953, %v4150
  %v4245 = vadd.f32 %v3954, %v4155
  %v4246 = vadd.f32 %v3955, %v4160
  %v4247 = vadd.f32 %v3956, %v4165
  %v4248 = vadd.f32 %v3957, %v4170
  %v4249 = vadd.f32 %v3958, %v4175
  %v4250 = vadd.f32 %v3959, %v4192
  %v4251 = vadd.f32 %v3960, %v4197
  %v4252 = vadd.f32 %v3961, %v4202
  %v4253 = vadd.f32 %v3962, %v4207
  %v4254 = vadd.f32 %v3963, %v4212
  %v4255 = vadd.f32 %v3964, %v4217
  %v4256 = vadd.f32 %v3965, %v4222
  %v4257 = vadd.f32 %v3966, %v4227
  %v4258 = vadd.f32 %v3967, %v4232
  %v4259 = vadd.f32 %v3968, %v4237
  %v4260 = vld [vmem:[#allocation3 + $0xb] sm:$0xff]
  %v4261 = vld [vmem:[#allocation3 + $0x13] sm:$0xff]
  %v4262 = vld [vmem:[#allocation3 + $0x1b] sm:$0xff]
  %v4263 = vld [vmem:[#allocation3 + $0x23] sm:$0xff]
  %v4264 = vld [vmem:[#allocation3 + $0x2b] sm:$0xff]
  %v4265 = vld [vmem:[#allocation3 + $0x33] sm:$0xff]
  %v4266 = vld [vmem:[#allocation3 + $0x3b] sm:$0xff]
  %v4267 = vld [vmem:[#allocation3 + $0x43] sm:$0xff]
  %v4268 = vld [vmem:[#allocation3 + $0x4b] sm:$0xff]
  %v4269 = vld [vmem:[#allocation3 + $0x53] sm:$0xff]
  %v4270 = vld [vmem:[#allocation3 + $0x5b] sm:$0xff]
  %v4271 = vld [vmem:[#allocation3 + $0x63] sm:$0xff]
  %v4272 = vld [vmem:[#allocation3 + $0x6b] sm:$0xff]
  %v4273 = vld [vmem:[#allocation3 + $0x73] sm:$0xff]
  %v4274 = vld [vmem:[#allocation3 + $0x7b] sm:$0xff]
  %v4275 = vld [vmem:[#allocation3 + $0x83] sm:$0xff]
  %v4276 = vld [vmem:[#allocation3 + $0x8b] sm:$0xff]
  %v4277 = vld [vmem:[#allocation3 + $0x93] sm:$0xff]
  %v4278 = vld [vmem:[#allocation3 + $0x9b] sm:$0xff]
  %v4279 = vld [vmem:[#allocation3 + $0xa3] sm:$0xff]
  %v4280 = vld [vmem:[#allocation3 + $0xab] sm:$0xff]
  %v4281 = vld [vmem:[#allocation3 + $0xb3] sm:$0xff]
  %v4282 = vld [vmem:[#allocation3 + $0xbb] sm:$0xff]
  %s4283 = scalar_lea.vmem %s5, 32
  %v4284 = vld [vmem:[%s4283] sm:$0xff]
  %v4286 = vsel %vm39, %v4260, 0
  %v4289 = vsel %vm39, %v4261, 0
  %v4292 = vsel %vm39, %v4262, 0
  %v4295 = vsel %vm39, %v4263, 0
  %v4298 = vsel %vm39, %v4264, 0
  %v4301 = vsel %vm39, %v4265, 0
  %v4304 = vsel %vm39, %v4266, 0
  %v4307 = vsel %vm39, %v4267, 0
  %v4310 = vsel %vm39, %v4268, 0
  %v4313 = vsel %vm39, %v4269, 0
  %v4316 = vsel %vm39, %v4270, 0
  %v4319 = vsel %vm39, %v4271, 0
  %v4322 = vsel %vm39, %v4272, 0
  %v4325 = vsel %vm39, %v4273, 0
  %v4328 = vsel %vm39, %v4274, 0
  %v4331 = vsel %vm39, %v4275, 0
  %v4334 = vsel %vm39, %v4276, 0
  %v4337 = vsel %vm39, %v4277, 0
  %v4340 = vsel %vm39, %v4278, 0
  %v4343 = vsel %vm39, %v4279, 0
  %v4346 = vsel %vm39, %v4280, 0
  %v4349 = vsel %vm39, %v4281, 0
  %v4352 = vsel %vm39, %v4282, 0
  %4354 = vmatprep.subr.mxu0 0.0
  %4355 = vmatpush1.msra.mxu0 %v4284
  %4356 = vmatprep.subr.mxu0 0.0
  %4357 = vmatpush1.msra.mxu0 0.0
  %4358 = vmatprep.subr.mxu0 0.0
  %4359 = vmatpush1.msra.mxu0 0.0
  %4360 = vmatprep.subr.mxu0 0.0
  %4361 = vmatpush1.msra.mxu0 0.0
  %4362 = vmatprep.subr.mxu0 0.0
  %4363 = vmatpush1.msra.mxu0 0.0
  %4364 = vmatprep.subr.mxu0 0.0
  %4365 = vmatpush1.msra.mxu0 0.0
  %4366 = vmatprep.subr.mxu0 0.0
  %4367 = vmatpush1.msra.mxu0 0.0
  %4368 = vmatprep.subr.mxu0 0.0
  %4369 = vmatpush1.msra.mxu0 0.0
  %4370 = vmatprep.subr.mxu0 0.0
  %4371 = vmatpush1.msra.mxu0 0.0
  %4372 = vmatprep.subr.mxu0 0.0
  %4373 = vmatpush1.msra.mxu0 0.0
  %4374 = vmatprep.subr.mxu0 0.0
  %4375 = vmatpush1.msra.mxu0 0.0
  %4376 = vmatprep.subr.mxu0 0.0
  %4377 = vmatpush1.msra.mxu0 0.0
  %4378 = vmatprep.subr.mxu0 0.0
  %4379 = vmatpush1.msra.mxu0 0.0
  %4380 = vmatprep.subr.mxu0 0.0
  %4381 = vmatpush1.msra.mxu0 0.0
  %4382 = vmatprep.subr.mxu0 0.0
  %4383 = vmatpush1.msra.mxu0 0.0
  %4384 = vmatprep.subr.mxu0 0.0
  %4385 = vmatpush1.msra.mxu0 0.0
  %4386 = vmatprep.subr.mxu0 0.0
  %4387 = vmatpush1.msra.mxu0 0.0
  %4388 = vmatprep.subr.mxu0 0.0
  %4389 = vmatpush1.msra.mxu0 0.0
  %4390 = vmatprep.subr.mxu0 0.0
  %4391 = vmatpush1.msra.mxu0 0.0
  %4392 = vmatprep.subr.mxu0 0.0
  %4393 = vmatpush1.msra.mxu0 0.0
  %4394 = vmatprep.subr.mxu0 0.0
  %4395 = vmatpush1.msra.mxu0 0.0
  %4396 = vmatprep.subr.mxu0 0.0
  %4397 = vmatpush1.msra.mxu0 0.0
  %4398 = vmatprep.subr.mxu0 0.0
  %4399 = vmatpush1.msra.mxu0 0.0
  %4400 = vmatprep.subr.mxu0 0.0
  %4401 = vmatpush1.msra.mxu0 0.0
  %4402 = vmatprep.subr.mxu0 0.0
  %4403 = vmatpush1.msra.mxu0 0.0
  %4404 = vmatprep.subr.mxu0 0.0
  %4405 = vmatpush1.msra.mxu0 0.0
  %4406 = vmatprep.subr.mxu0 0.0
  %4407 = vmatpush1.msra.mxu0 0.0
  %4408 = vmatprep.subr.mxu0 0.0
  %4409 = vmatpush1.msra.mxu0 0.0
  %4410 = vmatprep.subr.mxu0 0.0
  %4411 = vmatpush1.msra.mxu0 0.0
  %4412 = vmatprep.subr.mxu0 0.0
  %4413 = vmatpush1.msra.mxu0 0.0
  %4414 = vmatprep.subr.mxu0 0.0
  %4415 = vmatpush1.msra.mxu0 0.0
  %4416 = vmatprep.subr.mxu0 0.0
  %4417 = vmatpush1.msra.mxu0 0.0
  %4418 = vmatprep.mubr.f32.mxu0 0.0
  %4419 = vmatmul.mubr.f32.gmra.mrb[0].mxu0 %v4286
  %v4420 = vpop.f32.mrb[0].mxu0
  %v4421 = vadd.f32 0.0, %v4420
  %v4422 = vpop.f32.mrb[0].mxu0
  %4423 = vmatprep.mubr.f32.mxu0 0.0
  %4424 = vmatmul.mubr.f32.gmra.mrb[0].mxu0 %v4289
  %v4425 = vpop.f32.mrb[0].mxu0
  %v4426 = vadd.f32 0.0, %v4425
  %v4427 = vpop.f32.mrb[0].mxu0
  %4428 = vmatprep.mubr.f32.mxu0 0.0
  %4429 = vmatmul.mubr.f32.gmra.mrb[0].mxu0 %v4292
  %v4430 = vpop.f32.mrb[0].mxu0
  %v4431 = vadd.f32 0.0, %v4430
  %v4432 = vpop.f32.mrb[0].mxu0
  %4433 = vmatprep.mubr.f32.mxu0 0.0
  %4434 = vmatmul.mubr.f32.gmra.mrb[0].mxu0 %v4295
  %v4435 = vpop.f32.mrb[0].mxu0
  %v4436 = vadd.f32 0.0, %v4435
  %v4437 = vpop.f32.mrb[0].mxu0
  %4438 = vmatprep.mubr.f32.mxu0 0.0
  %4439 = vmatmul.mubr.f32.gmra.mrb[0].mxu0 %v4298
  %v4440 = vpop.f32.mrb[0].mxu0
  %v4441 = vadd.f32 0.0, %v4440
  %v4442 = vpop.f32.mrb[0].mxu0
  %4443 = vmatprep.mubr.f32.mxu0 0.0
  %4444 = vmatmul.mubr.f32.gmra.mrb[0].mxu0 %v4301
  %v4445 = vpop.f32.mrb[0].mxu0
  %v4446 = vadd.f32 0.0, %v4445
  %v4447 = vpop.f32.mrb[0].mxu0
  %4448 = vmatprep.mubr.f32.mxu0 0.0
  %4449 = vmatmul.mubr.f32.gmra.mrb[0].mxu0 %v4304
  %v4450 = vpop.f32.mrb[0].mxu0
  %v4451 = vadd.f32 0.0, %v4450
  %v4452 = vpop.f32.mrb[0].mxu0
  %4453 = vmatprep.mubr.f32.mxu0 0.0
  %4454 = vmatmul.mubr.f32.gmra.mrb[0].mxu0 %v4307
  %v4455 = vpop.f32.mrb[0].mxu0
  %v4456 = vadd.f32 0.0, %v4455
  %v4457 = vpop.f32.mrb[0].mxu0
  %4458 = vmatprep.mubr.f32.mxu0 0.0
  %4459 = vmatmul.mubr.f32.gmra.mrb[0].mxu0 %v4310
  %v4460 = vpop.f32.mrb[0].mxu0
  %v4461 = vadd.f32 0.0, %v4460
  %v4462 = vpop.f32.mrb[0].mxu0
  %4463 = vmatprep.mubr.f32.mxu0 0.0
  %4464 = vmatmul.mubr.f32.gmra.mrb[0].mxu0 %v4313
  %v4465 = vpop.f32.mrb[0].mxu0
  %v4466 = vadd.f32 0.0, %v4465
  %v4467 = vpop.f32.mrb[0].mxu0
  %4468 = vmatprep.mubr.f32.mxu0 0.0
  %4469 = vmatmul.mubr.f32.gmra.mrb[0].mxu0 %v4316
  %v4470 = vpop.f32.mrb[0].mxu0
  %v4471 = vpop.f32.mrb[0].mxu0
  %4472 = vmatprep.mubr.f32.mxu0 0.0
  %4473 = vmatmul.mubr.f32.gmra.mrb[0].mxu0 %v4319
  %v4474 = vpop.f32.mrb[0].mxu0
  %v4475 = vpop.f32.mrb[0].mxu0
  %4476 = vmatprep.mubr.f32.mxu0 0.0
  %4477 = vmatmul.mubr.f32.gmra.mrb[0].mxu0 %v4322
  %v4478 = vpop.f32.mrb[0].mxu0
  %v4479 = vpop.f32.mrb[0].mxu0
  %4480 = vmatprep.mubr.f32.mxu0 0.0
  %4481 = vmatmul.mubr.f32.gmra.mrb[0].mxu0 %v4325
  %v4482 = vpop.f32.mrb[0].mxu0
  %v4483 = vadd.f32 0.0, %v4482
  %v4484 = vpop.f32.mrb[0].mxu0
  %4485 = vmatprep.mubr.f32.mxu0 0.0
  %4486 = vmatmul.mubr.f32.gmra.mrb[0].mxu0 %v4328
  %v4487 = vpop.f32.mrb[0].mxu0
  %v4488 = vadd.f32 0.0, %v4487
  %v4489 = vpop.f32.mrb[0].mxu0
  %4490 = vmatprep.mubr.f32.mxu0 0.0
  %4491 = vmatmul.mubr.f32.gmra.mrb[0].mxu0 %v4331
  %v4492 = vpop.f32.mrb[0].mxu0
  %v4493 = vadd.f32 0.0, %v4492
  %v4494 = vpop.f32.mrb[0].mxu0
  %4495 = vmatprep.mubr.f32.mxu0 0.0
  %4496 = vmatmul.mubr.f32.gmra.mrb[0].mxu0 %v4334
  %v4497 = vpop.f32.mrb[0].mxu0
  %v4498 = vadd.f32 0.0, %v4497
  %v4499 = vpop.f32.mrb[0].mxu0
  %4500 = vmatprep.mubr.f32.mxu0 0.0
  %4501 = vmatmul.mubr.f32.gmra.mrb[0].mxu0 %v4337
  %v4502 = vpop.f32.mrb[0].mxu0
  %v4503 = vadd.f32 0.0, %v4502
  %v4504 = vpop.f32.mrb[0].mxu0
  %4505 = vmatprep.mubr.f32.mxu0 0.0
  %4506 = vmatmul.mubr.f32.gmra.mrb[0].mxu0 %v4340
  %v4507 = vpop.f32.mrb[0].mxu0
  %v4508 = vadd.f32 0.0, %v4507
  %v4509 = vpop.f32.mrb[0].mxu0
  %4510 = vmatprep.mubr.f32.mxu0 0.0
  %4511 = vmatmul.mubr.f32.gmra.mrb[0].mxu0 %v4343
  %v4512 = vpop.f32.mrb[0].mxu0
  %v4513 = vadd.f32 0.0, %v4512
  %v4514 = vpop.f32.mrb[0].mxu0
  %4515 = vmatprep.mubr.f32.mxu0 0.0
  %4516 = vmatmul.mubr.f32.gmra.mrb[0].mxu0 %v4346
  %v4517 = vpop.f32.mrb[0].mxu0
  %v4518 = vadd.f32 0.0, %v4517
  %v4519 = vpop.f32.mrb[0].mxu0
  %4520 = vmatprep.mubr.f32.mxu0 0.0
  %4521 = vmatmul.mubr.f32.gmra.mrb[0].mxu0 %v4349
  %v4522 = vpop.f32.mrb[0].mxu0
  %v4523 = vadd.f32 0.0, %v4522
  %v4524 = vpop.f32.mrb[0].mxu0
  %4525 = vmatprep.mubr.f32.mxu0 0.0
  %4526 = vmatmul.mubr.f32.gmra.mrb[0].mxu0 %v4352
  %v4527 = vpop.f32.mrb[0].mxu0
  %v4528 = vadd.f32 0.0, %v4527
  %v4529 = vpop.f32.mrb[0].mxu0
  %4530 = vdwg.mxu0
  %v4531 = vadd.f32 %v4240, %v4421
  %v4532 = vadd.f32 %v4241, %v4426
  %v4533 = vadd.f32 %v4242, %v4431
  %v4534 = vadd.f32 %v4243, %v4436
  %v4535 = vadd.f32 %v4244, %v4441
  %v4536 = vadd.f32 %v4245, %v4446
  %v4537 = vadd.f32 %v4246, %v4451
  %v4538 = vadd.f32 %v4247, %v4456
  %v4539 = vadd.f32 %v4248, %v4461
  %v4540 = vadd.f32 %v4249, %v4466
  %v4541 = vadd.f32 %v4250, %v4483
  %v4542 = vadd.f32 %v4251, %v4488
  %v4543 = vadd.f32 %v4252, %v4493
  %v4544 = vadd.f32 %v4253, %v4498
  %v4545 = vadd.f32 %v4254, %v4503
  %v4546 = vadd.f32 %v4255, %v4508
  %v4547 = vadd.f32 %v4256, %v4513
  %v4548 = vadd.f32 %v4257, %v4518
  %v4549 = vadd.f32 %v4258, %v4523
  %v4550 = vadd.f32 %v4259, %v4528
  %v4551 = vld [vmem:[#allocation3 + $0xc] sm:$0xff]
  %v4552 = vld [vmem:[#allocation3 + $0x14] sm:$0xff]
  %v4553 = vld [vmem:[#allocation3 + $0x1c] sm:$0xff]
  %v4554 = vld [vmem:[#allocation3 + $0x24] sm:$0xff]
  %v4555 = vld [vmem:[#allocation3 + $0x2c] sm:$0xff]
  %v4556 = vld [vmem:[#allocation3 + $0x34] sm:$0xff]
  %v4557 = vld [vmem:[#allocation3 + $0x3c] sm:$0xff]
  %v4558 = vld [vmem:[#allocation3 + $0x44] sm:$0xff]
  %v4559 = vld [vmem:[#allocation3 + $0x4c] sm:$0xff]
  %v4560 = vld [vmem:[#allocation3 + $0x54] sm:$0xff]
  %v4561 = vld [vmem:[#allocation3 + $0x5c] sm:$0xff]
  %v4562 = vld [vmem:[#allocation3 + $0x64] sm:$0xff]
  %v4563 = vld [vmem:[#allocation3 + $0x6c] sm:$0xff]
  %v4564 = vld [vmem:[#allocation3 + $0x74] sm:$0xff]
  %v4565 = vld [vmem:[#allocation3 + $0x7c] sm:$0xff]
  %v4566 = vld [vmem:[#allocation3 + $0x84] sm:$0xff]
  %v4567 = vld [vmem:[#allocation3 + $0x8c] sm:$0xff]
  %v4568 = vld [vmem:[#allocation3 + $0x94] sm:$0xff]
  %v4569 = vld [vmem:[#allocation3 + $0x9c] sm:$0xff]
  %v4570 = vld [vmem:[#allocation3 + $0xa4] sm:$0xff]
  %v4571 = vld [vmem:[#allocation3 + $0xac] sm:$0xff]
  %v4572 = vld [vmem:[#allocation3 + $0xb4] sm:$0xff]
  %v4573 = vld [vmem:[#allocation3 + $0xbc] sm:$0xff]
  %s4574 = scalar_lea.vmem %s5, 40
  %v4575 = vld [vmem:[%s4574] sm:$0xff]
  %v4577 = vsel %vm39, %v4551, 0
  %v4580 = vsel %vm39, %v4552, 0
  %v4583 = vsel %vm39, %v4553, 0
  %v4586 = vsel %vm39, %v4554, 0
  %v4589 = vsel %vm39, %v4555, 0
  %v4592 = vsel %vm39, %v4556, 0
  %v4595 = vsel %vm39, %v4557, 0
  %v4598 = vsel %vm39, %v4558, 0
  %v4601 = vsel %vm39, %v4559, 0
  %v4604 = vsel %vm39, %v4560, 0
  %v4607 = vsel %vm39, %v4561, 0
  %v4610 = vsel %vm39, %v4562, 0
  %v4613 = vsel %vm39, %v4563, 0
  %v4616 = vsel %vm39, %v4564, 0
  %v4619 = vsel %vm39, %v4565, 0
  %v4622 = vsel %vm39, %v4566, 0
  %v4625 = vsel %vm39, %v4567, 0
  %v4628 = vsel %vm39, %v4568, 0
  %v4631 = vsel %vm39, %v4569, 0
  %v4634 = vsel %vm39, %v4570, 0
  %v4637 = vsel %vm39, %v4571, 0
  %v4640 = vsel %vm39, %v4572, 0
  %v4643 = vsel %vm39, %v4573, 0
  %4645 = vmatprep.subr.mxu0 0.0
  %4646 = vmatpush1.msra.mxu0 %v4575
  %4647 = vmatprep.subr.mxu0 0.0
  %4648 = vmatpush1.msra.mxu0 0.0
  %4649 = vmatprep.subr.mxu0 0.0
  %4650 = vmatpush1.msra.mxu0 0.0
  %4651 = vmatprep.subr.mxu0 0.0
  %4652 = vmatpush1.msra.mxu0 0.0
  %4653 = vmatprep.subr.mxu0 0.0
  %4654 = vmatpush1.msra.mxu0 0.0
  %4655 = vmatprep.subr.mxu0 0.0
  %4656 = vmatpush1.msra.mxu0 0.0
  %4657 = vmatprep.subr.mxu0 0.0
  %4658 = vmatpush1.msra.mxu0 0.0
  %4659 = vmatprep.subr.mxu0 0.0
  %4660 = vmatpush1.msra.mxu0 0.0
  %4661 = vmatprep.subr.mxu0 0.0
  %4662 = vmatpush1.msra.mxu0 0.0
  %4663 = vmatprep.subr.mxu0 0.0
  %4664 = vmatpush1.msra.mxu0 0.0
  %4665 = vmatprep.subr.mxu0 0.0
  %4666 = vmatpush1.msra.mxu0 0.0
  %4667 = vmatprep.subr.mxu0 0.0
  %4668 = vmatpush1.msra.mxu0 0.0
  %4669 = vmatprep.subr.mxu0 0.0
  %4670 = vmatpush1.msra.mxu0 0.0
  %4671 = vmatprep.subr.mxu0 0.0
  %4672 = vmatpush1.msra.mxu0 0.0
  %4673 = vmatprep.subr.mxu0 0.0
  %4674 = vmatpush1.msra.mxu0 0.0
  %4675 = vmatprep.subr.mxu0 0.0
  %4676 = vmatpush1.msra.mxu0 0.0
  %4677 = vmatprep.subr.mxu0 0.0
  %4678 = vmatpush1.msra.mxu0 0.0
  %4679 = vmatprep.subr.mxu0 0.0
  %4680 = vmatpush1.msra.mxu0 0.0
  %4681 = vmatprep.subr.mxu0 0.0
  %4682 = vmatpush1.msra.mxu0 0.0
  %4683 = vmatprep.subr.mxu0 0.0
  %4684 = vmatpush1.msra.mxu0 0.0
  %4685 = vmatprep.subr.mxu0 0.0
  %4686 = vmatpush1.msra.mxu0 0.0
  %4687 = vmatprep.subr.mxu0 0.0
  %4688 = vmatpush1.msra.mxu0 0.0
  %4689 = vmatprep.subr.mxu0 0.0
  %4690 = vmatpush1.msra.mxu0 0.0
  %4691 = vmatprep.subr.mxu0 0.0
  %4692 = vmatpush1.msra.mxu0 0.0
  %4693 = vmatprep.subr.mxu0 0.0
  %4694 = vmatpush1.msra.mxu0 0.0
  %4695 = vmatprep.subr.mxu0 0.0
  %4696 = vmatpush1.msra.mxu0 0.0
  %4697 = vmatprep.subr.mxu0 0.0
  %4698 = vmatpush1.msra.mxu0 0.0
  %4699 = vmatprep.subr.mxu0 0.0
  %4700 = vmatpush1.msra.mxu0 0.0
  %4701 = vmatprep.subr.mxu0 0.0
  %4702 = vmatpush1.msra.mxu0 0.0
  %4703 = vmatprep.subr.mxu0 0.0
  %4704 = vmatpush1.msra.mxu0 0.0
  %4705 = vmatprep.subr.mxu0 0.0
  %4706 = vmatpush1.msra.mxu0 0.0
  %4707 = vmatprep.subr.mxu0 0.0
  %4708 = vmatpush1.msra.mxu0 0.0
  %4709 = vmatprep.mubr.f32.mxu0 0.0
  %4710 = vmatmul.mubr.f32.gmra.mrb[0].mxu0 %v4577
  %v4711 = vpop.f32.mrb[0].mxu0
  %v4712 = vadd.f32 0.0, %v4711
  %v4713 = vpop.f32.mrb[0].mxu0
  %4714 = vmatprep.mubr.f32.mxu0 0.0
  %4715 = vmatmul.mubr.f32.gmra.mrb[0].mxu0 %v4580
  %v4716 = vpop.f32.mrb[0].mxu0
  %v4717 = vadd.f32 0.0, %v4716
  %v4718 = vpop.f32.mrb[0].mxu0
  %4719 = vmatprep.mubr.f32.mxu0 0.0
  %4720 = vmatmul.mubr.f32.gmra.mrb[0].mxu0 %v4583
  %v4721 = vpop.f32.mrb[0].mxu0
  %v4722 = vadd.f32 0.0, %v4721
  %v4723 = vpop.f32.mrb[0].mxu0
  %4724 = vmatprep.mubr.f32.mxu0 0.0
  %4725 = vmatmul.mubr.f32.gmra.mrb[0].mxu0 %v4586
  %v4726 = vpop.f32.mrb[0].mxu0
  %v4727 = vadd.f32 0.0, %v4726
  %v4728 = vpop.f32.mrb[0].mxu0
  %4729 = vmatprep.mubr.f32.mxu0 0.0
  %4730 = vmatmul.mubr.f32.gmra.mrb[0].mxu0 %v4589
  %v4731 = vpop.f32.mrb[0].mxu0
  %v4732 = vadd.f32 0.0, %v4731
  %v4733 = vpop.f32.mrb[0].mxu0
  %4734 = vmatprep.mubr.f32.mxu0 0.0
  %4735 = vmatmul.mubr.f32.gmra.mrb[0].mxu0 %v4592
  %v4736 = vpop.f32.mrb[0].mxu0
  %v4737 = vadd.f32 0.0, %v4736
  %v4738 = vpop.f32.mrb[0].mxu0
  %4739 = vmatprep.mubr.f32.mxu0 0.0
  %4740 = vmatmul.mubr.f32.gmra.mrb[0].mxu0 %v4595
  %v4741 = vpop.f32.mrb[0].mxu0
  %v4742 = vadd.f32 0.0, %v4741
  %v4743 = vpop.f32.mrb[0].mxu0
  %4744 = vmatprep.mubr.f32.mxu0 0.0
  %4745 = vmatmul.mubr.f32.gmra.mrb[0].mxu0 %v4598
  %v4746 = vpop.f32.mrb[0].mxu0
  %v4747 = vadd.f32 0.0, %v4746
  %v4748 = vpop.f32.mrb[0].mxu0
  %4749 = vmatprep.mubr.f32.mxu0 0.0
  %4750 = vmatmul.mubr.f32.gmra.mrb[0].mxu0 %v4601
  %v4751 = vpop.f32.mrb[0].mxu0
  %v4752 = vadd.f32 0.0, %v4751
  %v4753 = vpop.f32.mrb[0].mxu0
  %4754 = vmatprep.mubr.f32.mxu0 0.0
  %4755 = vmatmul.mubr.f32.gmra.mrb[0].mxu0 %v4604
  %v4756 = vpop.f32.mrb[0].mxu0
  %v4757 = vadd.f32 0.0, %v4756
  %v4758 = vpop.f32.mrb[0].mxu0
  %4759 = vmatprep.mubr.f32.mxu0 0.0
  %4760 = vmatmul.mubr.f32.gmra.mrb[0].mxu0 %v4607
  %v4761 = vpop.f32.mrb[0].mxu0
  %v4762 = vpop.f32.mrb[0].mxu0
  %4763 = vmatprep.mubr.f32.mxu0 0.0
  %4764 = vmatmul.mubr.f32.gmra.mrb[0].mxu0 %v4610
  %v4765 = vpop.f32.mrb[0].mxu0
  %v4766 = vpop.f32.mrb[0].mxu0
  %4767 = vmatprep.mubr.f32.mxu0 0.0
  %4768 = vmatmul.mubr.f32.gmra.mrb[0].mxu0 %v4613
  %v4769 = vpop.f32.mrb[0].mxu0
  %v4770 = vpop.f32.mrb[0].mxu0
  %4771 = vmatprep.mubr.f32.mxu0 0.0
  %4772 = vmatmul.mubr.f32.gmra.mrb[0].mxu0 %v4616
  %v4773 = vpop.f32.mrb[0].mxu0
  %v4774 = vadd.f32 0.0, %v4773
  %v4775 = vpop.f32.mrb[0].mxu0
  %4776 = vmatprep.mubr.f32.mxu0 0.0
  %4777 = vmatmul.mubr.f32.gmra.mrb[0].mxu0 %v4619
  %v4778 = vpop.f32.mrb[0].mxu0
  %v4779 = vadd.f32 0.0, %v4778
  %v4780 = vpop.f32.mrb[0].mxu0
  %4781 = vmatprep.mubr.f32.mxu0 0.0
  %4782 = vmatmul.mubr.f32.gmra.mrb[0].mxu0 %v4622
  %v4783 = vpop.f32.mrb[0].mxu0
  %v4784 = vadd.f32 0.0, %v4783
  %v4785 = vpop.f32.mrb[0].mxu0
  %4786 = vmatprep.mubr.f32.mxu0 0.0
  %4787 = vmatmul.mubr.f32.gmra.mrb[0].mxu0 %v4625
  %v4788 = vpop.f32.mrb[0].mxu0
  %v4789 = vadd.f32 0.0, %v4788
  %v4790 = vpop.f32.mrb[0].mxu0
  %4791 = vmatprep.mubr.f32.mxu0 0.0
  %4792 = vmatmul.mubr.f32.gmra.mrb[0].mxu0 %v4628
  %v4793 = vpop.f32.mrb[0].mxu0
  %v4794 = vadd.f32 0.0, %v4793
  %v4795 = vpop.f32.mrb[0].mxu0
  %4796 = vmatprep.mubr.f32.mxu0 0.0
  %4797 = vmatmul.mubr.f32.gmra.mrb[0].mxu0 %v4631
  %v4798 = vpop.f32.mrb[0].mxu0
  %v4799 = vadd.f32 0.0, %v4798
  %v4800 = vpop.f32.mrb[0].mxu0
  %4801 = vmatprep.mubr.f32.mxu0 0.0
  %4802 = vmatmul.mubr.f32.gmra.mrb[0].mxu0 %v4634
  %v4803 = vpop.f32.mrb[0].mxu0
  %v4804 = vadd.f32 0.0, %v4803
  %v4805 = vpop.f32.mrb[0].mxu0
  %4806 = vmatprep.mubr.f32.mxu0 0.0
  %4807 = vmatmul.mubr.f32.gmra.mrb[0].mxu0 %v4637
  %v4808 = vpop.f32.mrb[0].mxu0
  %v4809 = vadd.f32 0.0, %v4808
  %v4810 = vpop.f32.mrb[0].mxu0
  %4811 = vmatprep.mubr.f32.mxu0 0.0
  %4812 = vmatmul.mubr.f32.gmra.mrb[0].mxu0 %v4640
  %v4813 = vpop.f32.mrb[0].mxu0
  %v4814 = vadd.f32 0.0, %v4813
  %v4815 = vpop.f32.mrb[0].mxu0
  %4816 = vmatprep.mubr.f32.mxu0 0.0
  %4817 = vmatmul.mubr.f32.gmra.mrb[0].mxu0 %v4643
  %v4818 = vpop.f32.mrb[0].mxu0
  %v4819 = vadd.f32 0.0, %v4818
  %v4820 = vpop.f32.mrb[0].mxu0
  %4821 = vdwg.mxu0
  %v4822 = vadd.f32 %v4531, %v4712
  %v4823 = vadd.f32 %v4532, %v4717
  %v4824 = vadd.f32 %v4533, %v4722
  %v4825 = vadd.f32 %v4534, %v4727
  %v4826 = vadd.f32 %v4535, %v4732
  %v4827 = vadd.f32 %v4536, %v4737
  %v4828 = vadd.f32 %v4537, %v4742
  %v4829 = vadd.f32 %v4538, %v4747
  %v4830 = vadd.f32 %v4539, %v4752
  %v4831 = vadd.f32 %v4540, %v4757
  %v4832 = vadd.f32 %v4541, %v4774
  %v4833 = vadd.f32 %v4542, %v4779
  %v4834 = vadd.f32 %v4543, %v4784
  %v4835 = vadd.f32 %v4544, %v4789
  %v4836 = vadd.f32 %v4545, %v4794
  %v4837 = vadd.f32 %v4546, %v4799
  %v4838 = vadd.f32 %v4547, %v4804
  %v4839 = vadd.f32 %v4548, %v4809
  %v4840 = vadd.f32 %v4549, %v4814
  %v4841 = vadd.f32 %v4550, %v4819
  %v4842 = vld [vmem:[#allocation3 + $0x14] sm:$0xff]
  %v4843 = vld [vmem:[#allocation3 + $0x1c] sm:$0xff]
  %v4844 = vld [vmem:[#allocation3 + $0x24] sm:$0xff]
  %v4845 = vld [vmem:[#allocation3 + $0x2c] sm:$0xff]
  %v4846 = vld [vmem:[#allocation3 + $0x34] sm:$0xff]
  %v4847 = vld [vmem:[#allocation3 + $0x3c] sm:$0xff]
  %v4848 = vld [vmem:[#allocation3 + $0x44] sm:$0xff]
  %v4849 = vld [vmem:[#allocation3 + $0x4c] sm:$0xff]
  %v4850 = vld [vmem:[#allocation3 + $0x54] sm:$0xff]
  %v4851 = vld [vmem:[#allocation3 + $0x5c] sm:$0xff]
  %v4852 = vld [vmem:[#allocation3 + $0x64] sm:$0xff]
  %v4853 = vld [vmem:[#allocation3 + $0x6c] sm:$0xff]
  %v4854 = vld [vmem:[#allocation3 + $0x74] sm:$0xff]
  %v4855 = vld [vmem:[#allocation3 + $0x7c] sm:$0xff]
  %v4856 = vld [vmem:[#allocation3 + $0x84] sm:$0xff]
  %v4857 = vld [vmem:[#allocation3 + $0x8c] sm:$0xff]
  %v4858 = vld [vmem:[#allocation3 + $0x94] sm:$0xff]
  %v4859 = vld [vmem:[#allocation3 + $0x9c] sm:$0xff]
  %v4860 = vld [vmem:[#allocation3 + $0xa4] sm:$0xff]
  %v4861 = vld [vmem:[#allocation3 + $0xac] sm:$0xff]
  %v4862 = vld [vmem:[#allocation3 + $0xb4] sm:$0xff]
  %v4863 = vld [vmem:[#allocation3 + $0xbc] sm:$0xff]
  %v4864 = vld [vmem:[#allocation3 + $0xc4] sm:$0xff]
  %s4865 = scalar_lea.vmem %s5, 48
  %v4866 = vld [vmem:[%s4865] sm:$0xff]
  %v4868 = vsel %vm39, %v4842, 0
  %v4871 = vsel %vm39, %v4843, 0
  %v4874 = vsel %vm39, %v4844, 0
  %v4877 = vsel %vm39, %v4845, 0
  %v4880 = vsel %vm39, %v4846, 0
  %v4883 = vsel %vm39, %v4847, 0
  %v4886 = vsel %vm39, %v4848, 0
  %v4889 = vsel %vm39, %v4849, 0
  %v4892 = vsel %vm39, %v4850, 0
  %v4895 = vsel %vm39, %v4851, 0
  %v4898 = vsel %vm39, %v4852, 0
  %v4901 = vsel %vm39, %v4853, 0
  %v4904 = vsel %vm39, %v4854, 0
  %v4907 = vsel %vm39, %v4855, 0
  %v4910 = vsel %vm39, %v4856, 0
  %v4913 = vsel %vm39, %v4857, 0
  %v4916 = vsel %vm39, %v4858, 0
  %v4919 = vsel %vm39, %v4859, 0
  %v4922 = vsel %vm39, %v4860, 0
  %v4925 = vsel %vm39, %v4861, 0
  %v4928 = vsel %vm39, %v4862, 0
  %v4931 = vsel %vm39, %v4863, 0
  %v4934 = vsel %vm39, %v4864, 0
  %4936 = vmatprep.subr.mxu0 0.0
  %4937 = vmatpush1.msra.mxu0 %v4866
  %4938 = vmatprep.subr.mxu0 0.0
  %4939 = vmatpush1.msra.mxu0 0.0
  %4940 = vmatprep.subr.mxu0 0.0
  %4941 = vmatpush1.msra.mxu0 0.0
  %4942 = vmatprep.subr.mxu0 0.0
  %4943 = vmatpush1.msra.mxu0 0.0
  %4944 = vmatprep.subr.mxu0 0.0
  %4945 = vmatpush1.msra.mxu0 0.0
  %4946 = vmatprep.subr.mxu0 0.0
  %4947 = vmatpush1.msra.mxu0 0.0
  %4948 = vmatprep.subr.mxu0 0.0
  %4949 = vmatpush1.msra.mxu0 0.0
  %4950 = vmatprep.subr.mxu0 0.0
  %4951 = vmatpush1.msra.mxu0 0.0
  %4952 = vmatprep.subr.mxu0 0.0
  %4953 = vmatpush1.msra.mxu0 0.0
  %4954 = vmatprep.subr.mxu0 0.0
  %4955 = vmatpush1.msra.mxu0 0.0
  %4956 = vmatprep.subr.mxu0 0.0
  %4957 = vmatpush1.msra.mxu0 0.0
  %4958 = vmatprep.subr.mxu0 0.0
  %4959 = vmatpush1.msra.mxu0 0.0
  %4960 = vmatprep.subr.mxu0 0.0
  %4961 = vmatpush1.msra.mxu0 0.0
  %4962 = vmatprep.subr.mxu0 0.0
  %4963 = vmatpush1.msra.mxu0 0.0
  %4964 = vmatprep.subr.mxu0 0.0
  %4965 = vmatpush1.msra.mxu0 0.0
  %4966 = vmatprep.subr.mxu0 0.0
  %4967 = vmatpush1.msra.mxu0 0.0
  %4968 = vmatprep.subr.mxu0 0.0
  %4969 = vmatpush1.msra.mxu0 0.0
  %4970 = vmatprep.subr.mxu0 0.0
  %4971 = vmatpush1.msra.mxu0 0.0
  %4972 = vmatprep.subr.mxu0 0.0
  %4973 = vmatpush1.msra.mxu0 0.0
  %4974 = vmatprep.subr.mxu0 0.0
  %4975 = vmatpush1.msra.mxu0 0.0
  %4976 = vmatprep.subr.mxu0 0.0
  %4977 = vmatpush1.msra.mxu0 0.0
  %4978 = vmatprep.subr.mxu0 0.0
  %4979 = vmatpush1.msra.mxu0 0.0
  %4980 = vmatprep.subr.mxu0 0.0
  %4981 = vmatpush1.msra.mxu0 0.0
  %4982 = vmatprep.subr.mxu0 0.0
  %4983 = vmatpush1.msra.mxu0 0.0
  %4984 = vmatprep.subr.mxu0 0.0
  %4985 = vmatpush1.msra.mxu0 0.0
  %4986 = vmatprep.subr.mxu0 0.0
  %4987 = vmatpush1.msra.mxu0 0.0
  %4988 = vmatprep.subr.mxu0 0.0
  %4989 = vmatpush1.msra.mxu0 0.0
  %4990 = vmatprep.subr.mxu0 0.0
  %4991 = vmatpush1.msra.mxu0 0.0
  %4992 = vmatprep.subr.mxu0 0.0
  %4993 = vmatpush1.msra.mxu0 0.0
  %4994 = vmatprep.subr.mxu0 0.0
  %4995 = vmatpush1.msra.mxu0 0.0
  %4996 = vmatprep.subr.mxu0 0.0
  %4997 = vmatpush1.msra.mxu0 0.0
  %4998 = vmatprep.subr.mxu0 0.0
  %4999 = vmatpush1.msra.mxu0 0.0
  %5000 = vmatprep.mubr.f32.mxu0 0.0
  %5001 = vmatmul.mubr.f32.gmra.mrb[0].mxu0 %v4868
  %v5002 = vpop.f32.mrb[0].mxu0
  %v5003 = vadd.f32 0.0, %v5002
  %v5004 = vpop.f32.mrb[0].mxu0
  %5005 = vmatprep.mubr.f32.mxu0 0.0
  %5006 = vmatmul.mubr.f32.gmra.mrb[0].mxu0 %v4871
  %v5007 = vpop.f32.mrb[0].mxu0
  %v5008 = vadd.f32 0.0, %v5007
  %v5009 = vpop.f32.mrb[0].mxu0
  %5010 = vmatprep.mubr.f32.mxu0 0.0
  %5011 = vmatmul.mubr.f32.gmra.mrb[0].mxu0 %v4874
  %v5012 = vpop.f32.mrb[0].mxu0
  %v5013 = vadd.f32 0.0, %v5012
  %v5014 = vpop.f32.mrb[0].mxu0
  %5015 = vmatprep.mubr.f32.mxu0 0.0
  %5016 = vmatmul.mubr.f32.gmra.mrb[0].mxu0 %v4877
  %v5017 = vpop.f32.mrb[0].mxu0
  %v5018 = vadd.f32 0.0, %v5017
  %v5019 = vpop.f32.mrb[0].mxu0
  %5020 = vmatprep.mubr.f32.mxu0 0.0
  %5021 = vmatmul.mubr.f32.gmra.mrb[0].mxu0 %v4880
  %v5022 = vpop.f32.mrb[0].mxu0
  %v5023 = vadd.f32 0.0, %v5022
  %v5024 = vpop.f32.mrb[0].mxu0
  %5025 = vmatprep.mubr.f32.mxu0 0.0
  %5026 = vmatmul.mubr.f32.gmra.mrb[0].mxu0 %v4883
  %v5027 = vpop.f32.mrb[0].mxu0
  %v5028 = vadd.f32 0.0, %v5027
  %v5029 = vpop.f32.mrb[0].mxu0
  %5030 = vmatprep.mubr.f32.mxu0 0.0
  %5031 = vmatmul.mubr.f32.gmra.mrb[0].mxu0 %v4886
  %v5032 = vpop.f32.mrb[0].mxu0
  %v5033 = vadd.f32 0.0, %v5032
  %v5034 = vpop.f32.mrb[0].mxu0
  %5035 = vmatprep.mubr.f32.mxu0 0.0
  %5036 = vmatmul.mubr.f32.gmra.mrb[0].mxu0 %v4889
  %v5037 = vpop.f32.mrb[0].mxu0
  %v5038 = vadd.f32 0.0, %v5037
  %v5039 = vpop.f32.mrb[0].mxu0
  %5040 = vmatprep.mubr.f32.mxu0 0.0
  %5041 = vmatmul.mubr.f32.gmra.mrb[0].mxu0 %v4892
  %v5042 = vpop.f32.mrb[0].mxu0
  %v5043 = vadd.f32 0.0, %v5042
  %v5044 = vpop.f32.mrb[0].mxu0
  %5045 = vmatprep.mubr.f32.mxu0 0.0
  %5046 = vmatmul.mubr.f32.gmra.mrb[0].mxu0 %v4895
  %v5047 = vpop.f32.mrb[0].mxu0
  %v5048 = vadd.f32 0.0, %v5047
  %v5049 = vpop.f32.mrb[0].mxu0
  %5050 = vmatprep.mubr.f32.mxu0 0.0
  %5051 = vmatmul.mubr.f32.gmra.mrb[0].mxu0 %v4898
  %v5052 = vpop.f32.mrb[0].mxu0
  %v5053 = vpop.f32.mrb[0].mxu0
  %5054 = vmatprep.mubr.f32.mxu0 0.0
  %5055 = vmatmul.mubr.f32.gmra.mrb[0].mxu0 %v4901
  %v5056 = vpop.f32.mrb[0].mxu0
  %v5057 = vpop.f32.mrb[0].mxu0
  %5058 = vmatprep.mubr.f32.mxu0 0.0
  %5059 = vmatmul.mubr.f32.gmra.mrb[0].mxu0 %v4904
  %v5060 = vpop.f32.mrb[0].mxu0
  %v5061 = vpop.f32.mrb[0].mxu0
  %5062 = vmatprep.mubr.f32.mxu0 0.0
  %5063 = vmatmul.mubr.f32.gmra.mrb[0].mxu0 %v4907
  %v5064 = vpop.f32.mrb[0].mxu0
  %v5065 = vadd.f32 0.0, %v5064
  %v5066 = vpop.f32.mrb[0].mxu0
  %5067 = vmatprep.mubr.f32.mxu0 0.0
  %5068 = vmatmul.mubr.f32.gmra.mrb[0].mxu0 %v4910
  %v5069 = vpop.f32.mrb[0].mxu0
  %v5070 = vadd.f32 0.0, %v5069
  %v5071 = vpop.f32.mrb[0].mxu0
  %5072 = vmatprep.mubr.f32.mxu0 0.0
  %5073 = vmatmul.mubr.f32.gmra.mrb[0].mxu0 %v4913
  %v5074 = vpop.f32.mrb[0].mxu0
  %v5075 = vadd.f32 0.0, %v5074
  %v5076 = vpop.f32.mrb[0].mxu0
  %5077 = vmatprep.mubr.f32.mxu0 0.0
  %5078 = vmatmul.mubr.f32.gmra.mrb[0].mxu0 %v4916
  %v5079 = vpop.f32.mrb[0].mxu0
  %v5080 = vadd.f32 0.0, %v5079
  %v5081 = vpop.f32.mrb[0].mxu0
  %5082 = vmatprep.mubr.f32.mxu0 0.0
  %5083 = vmatmul.mubr.f32.gmra.mrb[0].mxu0 %v4919
  %v5084 = vpop.f32.mrb[0].mxu0
  %v5085 = vadd.f32 0.0, %v5084
  %v5086 = vpop.f32.mrb[0].mxu0
  %5087 = vmatprep.mubr.f32.mxu0 0.0
  %5088 = vmatmul.mubr.f32.gmra.mrb[0].mxu0 %v4922
  %v5089 = vpop.f32.mrb[0].mxu0
  %v5090 = vadd.f32 0.0, %v5089
  %v5091 = vpop.f32.mrb[0].mxu0
  %5092 = vmatprep.mubr.f32.mxu0 0.0
  %5093 = vmatmul.mubr.f32.gmra.mrb[0].mxu0 %v4925
  %v5094 = vpop.f32.mrb[0].mxu0
  %v5095 = vadd.f32 0.0, %v5094
  %v5096 = vpop.f32.mrb[0].mxu0
  %5097 = vmatprep.mubr.f32.mxu0 0.0
  %5098 = vmatmul.mubr.f32.gmra.mrb[0].mxu0 %v4928
  %v5099 = vpop.f32.mrb[0].mxu0
  %v5100 = vadd.f32 0.0, %v5099
  %v5101 = vpop.f32.mrb[0].mxu0
  %5102 = vmatprep.mubr.f32.mxu0 0.0
  %5103 = vmatmul.mubr.f32.gmra.mrb[0].mxu0 %v4931
  %v5104 = vpop.f32.mrb[0].mxu0
  %v5105 = vadd.f32 0.0, %v5104
  %v5106 = vpop.f32.mrb[0].mxu0
  %5107 = vmatprep.mubr.f32.mxu0 0.0
  %5108 = vmatmul.mubr.f32.gmra.mrb[0].mxu0 %v4934
  %v5109 = vpop.f32.mrb[0].mxu0
  %v5110 = vadd.f32 0.0, %v5109
  %v5111 = vpop.f32.mrb[0].mxu0
  %5112 = vdwg.mxu0
  %v5113 = vadd.f32 %v4822, %v5003
  %v5114 = vadd.f32 %v4823, %v5008
  %v5115 = vadd.f32 %v4824, %v5013
  %v5116 = vadd.f32 %v4825, %v5018
  %v5117 = vadd.f32 %v4826, %v5023
  %v5118 = vadd.f32 %v4827, %v5028
  %v5119 = vadd.f32 %v4828, %v5033
  %v5120 = vadd.f32 %v4829, %v5038
  %v5121 = vadd.f32 %v4830, %v5043
  %v5122 = vadd.f32 %v4831, %v5048
  %v5123 = vadd.f32 %v4832, %v5065
  %v5124 = vadd.f32 %v4833, %v5070
  %v5125 = vadd.f32 %v4834, %v5075
  %v5126 = vadd.f32 %v4835, %v5080
  %v5127 = vadd.f32 %v4836, %v5085
  %v5128 = vadd.f32 %v4837, %v5090
  %v5129 = vadd.f32 %v4838, %v5095
  %v5130 = vadd.f32 %v4839, %v5100
  %v5131 = vadd.f32 %v4840, %v5105
  %v5132 = vadd.f32 %v4841, %v5110
  %v5133 = vld [vmem:[#allocation3 + $0x15] sm:$0xff]
  %v5134 = vld [vmem:[#allocation3 + $0x1d] sm:$0xff]
  %v5135 = vld [vmem:[#allocation3 + $0x25] sm:$0xff]
  %v5136 = vld [vmem:[#allocation3 + $0x2d] sm:$0xff]
  %v5137 = vld [vmem:[#allocation3 + $0x35] sm:$0xff]
  %v5138 = vld [vmem:[#allocation3 + $0x3d] sm:$0xff]
  %v5139 = vld [vmem:[#allocation3 + $0x45] sm:$0xff]
  %v5140 = vld [vmem:[#allocation3 + $0x4d] sm:$0xff]
  %v5141 = vld [vmem:[#allocation3 + $0x55] sm:$0xff]
  %v5142 = vld [vmem:[#allocation3 + $0x5d] sm:$0xff]
  %v5143 = vld [vmem:[#allocation3 + $0x65] sm:$0xff]
  %v5144 = vld [vmem:[#allocation3 + $0x6d] sm:$0xff]
  %v5145 = vld [vmem:[#allocation3 + $0x75] sm:$0xff]
  %v5146 = vld [vmem:[#allocation3 + $0x7d] sm:$0xff]
  %v5147 = vld [vmem:[#allocation3 + $0x85] sm:$0xff]
  %v5148 = vld [vmem:[#allocation3 + $0x8d] sm:$0xff]
  %v5149 = vld [vmem:[#allocation3 + $0x95] sm:$0xff]
  %v5150 = vld [vmem:[#allocation3 + $0x9d] sm:$0xff]
  %v5151 = vld [vmem:[#allocation3 + $0xa5] sm:$0xff]
  %v5152 = vld [vmem:[#allocation3 + $0xad] sm:$0xff]
  %v5153 = vld [vmem:[#allocation3 + $0xb5] sm:$0xff]
  %v5154 = vld [vmem:[#allocation3 + $0xbd] sm:$0xff]
  %v5155 = vld [vmem:[#allocation3 + $0xc5] sm:$0xff]
  %s5156 = scalar_lea.vmem %s5, 56
  %v5157 = vld [vmem:[%s5156] sm:$0xff]
  %v5159 = vsel %vm39, %v5133, 0
  %v5162 = vsel %vm39, %v5134, 0
  %v5165 = vsel %vm39, %v5135, 0
  %v5168 = vsel %vm39, %v5136, 0
  %v5171 = vsel %vm39, %v5137, 0
  %v5174 = vsel %vm39, %v5138, 0
  %v5177 = vsel %vm39, %v5139, 0
  %v5180 = vsel %vm39, %v5140, 0
  %v5183 = vsel %vm39, %v5141, 0
  %v5186 = vsel %vm39, %v5142, 0
  %v5189 = vsel %vm39, %v5143, 0
  %v5192 = vsel %vm39, %v5144, 0
  %v5195 = vsel %vm39, %v5145, 0
  %v5198 = vsel %vm39, %v5146, 0
  %v5201 = vsel %vm39, %v5147, 0
  %v5204 = vsel %vm39, %v5148, 0
  %v5207 = vsel %vm39, %v5149, 0
  %v5210 = vsel %vm39, %v5150, 0
  %v5213 = vsel %vm39, %v5151, 0
  %v5216 = vsel %vm39, %v5152, 0
  %v5219 = vsel %vm39, %v5153, 0
  %v5222 = vsel %vm39, %v5154, 0
  %v5225 = vsel %vm39, %v5155, 0
  %5227 = vmatprep.subr.mxu0 0.0
  %5228 = vmatpush1.msra.mxu0 %v5157
  %5229 = vmatprep.subr.mxu0 0.0
  %5230 = vmatpush1.msra.mxu0 0.0
  %5231 = vmatprep.subr.mxu0 0.0
  %5232 = vmatpush1.msra.mxu0 0.0
  %5233 = vmatprep.subr.mxu0 0.0
  %5234 = vmatpush1.msra.mxu0 0.0
  %5235 = vmatprep.subr.mxu0 0.0
  %5236 = vmatpush1.msra.mxu0 0.0
  %5237 = vmatprep.subr.mxu0 0.0
  %5238 = vmatpush1.msra.mxu0 0.0
  %5239 = vmatprep.subr.mxu0 0.0
  %5240 = vmatpush1.msra.mxu0 0.0
  %5241 = vmatprep.subr.mxu0 0.0
  %5242 = vmatpush1.msra.mxu0 0.0
  %5243 = vmatprep.subr.mxu0 0.0
  %5244 = vmatpush1.msra.mxu0 0.0
  %5245 = vmatprep.subr.mxu0 0.0
  %5246 = vmatpush1.msra.mxu0 0.0
  %5247 = vmatprep.subr.mxu0 0.0
  %5248 = vmatpush1.msra.mxu0 0.0
  %5249 = vmatprep.subr.mxu0 0.0
  %5250 = vmatpush1.msra.mxu0 0.0
  %5251 = vmatprep.subr.mxu0 0.0
  %5252 = vmatpush1.msra.mxu0 0.0
  %5253 = vmatprep.subr.mxu0 0.0
  %5254 = vmatpush1.msra.mxu0 0.0
  %5255 = vmatprep.subr.mxu0 0.0
  %5256 = vmatpush1.msra.mxu0 0.0
  %5257 = vmatprep.subr.mxu0 0.0
  %5258 = vmatpush1.msra.mxu0 0.0
  %5259 = vmatprep.subr.mxu0 0.0
  %5260 = vmatpush1.msra.mxu0 0.0
  %5261 = vmatprep.subr.mxu0 0.0
  %5262 = vmatpush1.msra.mxu0 0.0
  %5263 = vmatprep.subr.mxu0 0.0
  %5264 = vmatpush1.msra.mxu0 0.0
  %5265 = vmatprep.subr.mxu0 0.0
  %5266 = vmatpush1.msra.mxu0 0.0
  %5267 = vmatprep.subr.mxu0 0.0
  %5268 = vmatpush1.msra.mxu0 0.0
  %5269 = vmatprep.subr.mxu0 0.0
  %5270 = vmatpush1.msra.mxu0 0.0
  %5271 = vmatprep.subr.mxu0 0.0
  %5272 = vmatpush1.msra.mxu0 0.0
  %5273 = vmatprep.subr.mxu0 0.0
  %5274 = vmatpush1.msra.mxu0 0.0
  %5275 = vmatprep.subr.mxu0 0.0
  %5276 = vmatpush1.msra.mxu0 0.0
  %5277 = vmatprep.subr.mxu0 0.0
  %5278 = vmatpush1.msra.mxu0 0.0
  %5279 = vmatprep.subr.mxu0 0.0
  %5280 = vmatpush1.msra.mxu0 0.0
  %5281 = vmatprep.subr.mxu0 0.0
  %5282 = vmatpush1.msra.mxu0 0.0
  %5283 = vmatprep.subr.mxu0 0.0
  %5284 = vmatpush1.msra.mxu0 0.0
  %5285 = vmatprep.subr.mxu0 0.0
  %5286 = vmatpush1.msra.mxu0 0.0
  %5287 = vmatprep.subr.mxu0 0.0
  %5288 = vmatpush1.msra.mxu0 0.0
  %5289 = vmatprep.subr.mxu0 0.0
  %5290 = vmatpush1.msra.mxu0 0.0
  %5291 = vmatprep.mubr.f32.mxu0 0.0
  %5292 = vmatmul.mubr.f32.gmra.mrb[0].mxu0 %v5159
  %v5293 = vpop.f32.mrb[0].mxu0
  %v5294 = vadd.f32 0.0, %v5293
  %v5295 = vpop.f32.mrb[0].mxu0
  %5296 = vmatprep.mubr.f32.mxu0 0.0
  %5297 = vmatmul.mubr.f32.gmra.mrb[0].mxu0 %v5162
  %v5298 = vpop.f32.mrb[0].mxu0
  %v5299 = vadd.f32 0.0, %v5298
  %v5300 = vpop.f32.mrb[0].mxu0
  %5301 = vmatprep.mubr.f32.mxu0 0.0
  %5302 = vmatmul.mubr.f32.gmra.mrb[0].mxu0 %v5165
  %v5303 = vpop.f32.mrb[0].mxu0
  %v5304 = vadd.f32 0.0, %v5303
  %v5305 = vpop.f32.mrb[0].mxu0
  %5306 = vmatprep.mubr.f32.mxu0 0.0
  %5307 = vmatmul.mubr.f32.gmra.mrb[0].mxu0 %v5168
  %v5308 = vpop.f32.mrb[0].mxu0
  %v5309 = vadd.f32 0.0, %v5308
  %v5310 = vpop.f32.mrb[0].mxu0
  %5311 = vmatprep.mubr.f32.mxu0 0.0
  %5312 = vmatmul.mubr.f32.gmra.mrb[0].mxu0 %v5171
  %v5313 = vpop.f32.mrb[0].mxu0
  %v5314 = vadd.f32 0.0, %v5313
  %v5315 = vpop.f32.mrb[0].mxu0
  %5316 = vmatprep.mubr.f32.mxu0 0.0
  %5317 = vmatmul.mubr.f32.gmra.mrb[0].mxu0 %v5174
  %v5318 = vpop.f32.mrb[0].mxu0
  %v5319 = vadd.f32 0.0, %v5318
  %v5320 = vpop.f32.mrb[0].mxu0
  %5321 = vmatprep.mubr.f32.mxu0 0.0
  %5322 = vmatmul.mubr.f32.gmra.mrb[0].mxu0 %v5177
  %v5323 = vpop.f32.mrb[0].mxu0
  %v5324 = vadd.f32 0.0, %v5323
  %v5325 = vpop.f32.mrb[0].mxu0
  %5326 = vmatprep.mubr.f32.mxu0 0.0
  %5327 = vmatmul.mubr.f32.gmra.mrb[0].mxu0 %v5180
  %v5328 = vpop.f32.mrb[0].mxu0
  %v5329 = vadd.f32 0.0, %v5328
  %v5330 = vpop.f32.mrb[0].mxu0
  %5331 = vmatprep.mubr.f32.mxu0 0.0
  %5332 = vmatmul.mubr.f32.gmra.mrb[0].mxu0 %v5183
  %v5333 = vpop.f32.mrb[0].mxu0
  %v5334 = vadd.f32 0.0, %v5333
  %v5335 = vpop.f32.mrb[0].mxu0
  %5336 = vmatprep.mubr.f32.mxu0 0.0
  %5337 = vmatmul.mubr.f32.gmra.mrb[0].mxu0 %v5186
  %v5338 = vpop.f32.mrb[0].mxu0
  %v5339 = vadd.f32 0.0, %v5338
  %v5340 = vpop.f32.mrb[0].mxu0
  %5341 = vmatprep.mubr.f32.mxu0 0.0
  %5342 = vmatmul.mubr.f32.gmra.mrb[0].mxu0 %v5189
  %v5343 = vpop.f32.mrb[0].mxu0
  %v5344 = vpop.f32.mrb[0].mxu0
  %5345 = vmatprep.mubr.f32.mxu0 0.0
  %5346 = vmatmul.mubr.f32.gmra.mrb[0].mxu0 %v5192
  %v5347 = vpop.f32.mrb[0].mxu0
  %v5348 = vpop.f32.mrb[0].mxu0
  %5349 = vmatprep.mubr.f32.mxu0 0.0
  %5350 = vmatmul.mubr.f32.gmra.mrb[0].mxu0 %v5195
  %v5351 = vpop.f32.mrb[0].mxu0
  %v5352 = vpop.f32.mrb[0].mxu0
  %5353 = vmatprep.mubr.f32.mxu0 0.0
  %5354 = vmatmul.mubr.f32.gmra.mrb[0].mxu0 %v5198
  %v5355 = vpop.f32.mrb[0].mxu0
  %v5356 = vadd.f32 0.0, %v5355
  %v5357 = vpop.f32.mrb[0].mxu0
  %5358 = vmatprep.mubr.f32.mxu0 0.0
  %5359 = vmatmul.mubr.f32.gmra.mrb[0].mxu0 %v5201
  %v5360 = vpop.f32.mrb[0].mxu0
  %v5361 = vadd.f32 0.0, %v5360
  %v5362 = vpop.f32.mrb[0].mxu0
  %5363 = vmatprep.mubr.f32.mxu0 0.0
  %5364 = vmatmul.mubr.f32.gmra.mrb[0].mxu0 %v5204
  %v5365 = vpop.f32.mrb[0].mxu0
  %v5366 = vadd.f32 0.0, %v5365
  %v5367 = vpop.f32.mrb[0].mxu0
  %5368 = vmatprep.mubr.f32.mxu0 0.0
  %5369 = vmatmul.mubr.f32.gmra.mrb[0].mxu0 %v5207
  %v5370 = vpop.f32.mrb[0].mxu0
  %v5371 = vadd.f32 0.0, %v5370
  %v5372 = vpop.f32.mrb[0].mxu0
  %5373 = vmatprep.mubr.f32.mxu0 0.0
  %5374 = vmatmul.mubr.f32.gmra.mrb[0].mxu0 %v5210
  %v5375 = vpop.f32.mrb[0].mxu0
  %v5376 = vadd.f32 0.0, %v5375
  %v5377 = vpop.f32.mrb[0].mxu0
  %5378 = vmatprep.mubr.f32.mxu0 0.0
  %5379 = vmatmul.mubr.f32.gmra.mrb[0].mxu0 %v5213
  %v5380 = vpop.f32.mrb[0].mxu0
  %v5381 = vadd.f32 0.0, %v5380
  %v5382 = vpop.f32.mrb[0].mxu0
  %5383 = vmatprep.mubr.f32.mxu0 0.0
  %5384 = vmatmul.mubr.f32.gmra.mrb[0].mxu0 %v5216
  %v5385 = vpop.f32.mrb[0].mxu0
  %v5386 = vadd.f32 0.0, %v5385
  %v5387 = vpop.f32.mrb[0].mxu0
  %5388 = vmatprep.mubr.f32.mxu0 0.0
  %5389 = vmatmul.mubr.f32.gmra.mrb[0].mxu0 %v5219
  %v5390 = vpop.f32.mrb[0].mxu0
  %v5391 = vadd.f32 0.0, %v5390
  %v5392 = vpop.f32.mrb[0].mxu0
  %5393 = vmatprep.mubr.f32.mxu0 0.0
  %5394 = vmatmul.mubr.f32.gmra.mrb[0].mxu0 %v5222
  %v5395 = vpop.f32.mrb[0].mxu0
  %v5396 = vadd.f32 0.0, %v5395
  %v5397 = vpop.f32.mrb[0].mxu0
  %5398 = vmatprep.mubr.f32.mxu0 0.0
  %5399 = vmatmul.mubr.f32.gmra.mrb[0].mxu0 %v5225
  %v5400 = vpop.f32.mrb[0].mxu0
  %v5401 = vadd.f32 0.0, %v5400
  %v5402 = vpop.f32.mrb[0].mxu0
  %5403 = vdwg.mxu0
  %v5404 = vadd.f32 %v5113, %v5294
  %v5405 = vadd.f32 %v5114, %v5299
  %v5406 = vadd.f32 %v5115, %v5304
  %v5407 = vadd.f32 %v5116, %v5309
  %v5408 = vadd.f32 %v5117, %v5314
  %v5409 = vadd.f32 %v5118, %v5319
  %v5410 = vadd.f32 %v5119, %v5324
  %v5411 = vadd.f32 %v5120, %v5329
  %v5412 = vadd.f32 %v5121, %v5334
  %v5413 = vadd.f32 %v5122, %v5339
  %v5414 = vadd.f32 %v5123, %v5356
  %v5415 = vadd.f32 %v5124, %v5361
  %v5416 = vadd.f32 %v5125, %v5366
  %v5417 = vadd.f32 %v5126, %v5371
  %v5418 = vadd.f32 %v5127, %v5376
  %v5419 = vadd.f32 %v5128, %v5381
  %v5420 = vadd.f32 %v5129, %v5386
  %v5421 = vadd.f32 %v5130, %v5391
  %v5422 = vadd.f32 %v5131, %v5396
  %v5423 = vadd.f32 %v5132, %v5401
  %v5424 = vld [vmem:[#allocation3 + $0x16] sm:$0xff]
  %v5425 = vld [vmem:[#allocation3 + $0x1e] sm:$0xff]
  %v5426 = vld [vmem:[#allocation3 + $0x26] sm:$0xff]
  %v5427 = vld [vmem:[#allocation3 + $0x2e] sm:$0xff]
  %v5428 = vld [vmem:[#allocation3 + $0x36] sm:$0xff]
  %v5429 = vld [vmem:[#allocation3 + $0x3e] sm:$0xff]
  %v5430 = vld [vmem:[#allocation3 + $0x46] sm:$0xff]
  %v5431 = vld [vmem:[#allocation3 + $0x4e] sm:$0xff]
  %v5432 = vld [vmem:[#allocation3 + $0x56] sm:$0xff]
  %v5433 = vld [vmem:[#allocation3 + $0x5e] sm:$0xff]
  %v5434 = vld [vmem:[#allocation3 + $0x66] sm:$0xff]
  %v5435 = vld [vmem:[#allocation3 + $0x6e] sm:$0xff]
  %v5436 = vld [vmem:[#allocation3 + $0x76] sm:$0xff]
  %v5437 = vld [vmem:[#allocation3 + $0x7e] sm:$0xff]
  %v5438 = vld [vmem:[#allocation3 + $0x86] sm:$0xff]
  %v5439 = vld [vmem:[#allocation3 + $0x8e] sm:$0xff]
  %v5440 = vld [vmem:[#allocation3 + $0x96] sm:$0xff]
  %v5441 = vld [vmem:[#allocation3 + $0x9e] sm:$0xff]
  %v5442 = vld [vmem:[#allocation3 + $0xa6] sm:$0xff]
  %v5443 = vld [vmem:[#allocation3 + $0xae] sm:$0xff]
  %v5444 = vld [vmem:[#allocation3 + $0xb6] sm:$0xff]
  %v5445 = vld [vmem:[#allocation3 + $0xbe] sm:$0xff]
  %v5446 = vld [vmem:[#allocation3 + $0xc6] sm:$0xff]
  %s5447 = scalar_lea.vmem %s5, 64
  %v5448 = vld [vmem:[%s5447] sm:$0xff]
  %v5450 = vsel %vm39, %v5424, 0
  %v5453 = vsel %vm39, %v5425, 0
  %v5456 = vsel %vm39, %v5426, 0
  %v5459 = vsel %vm39, %v5427, 0
  %v5462 = vsel %vm39, %v5428, 0
  %v5465 = vsel %vm39, %v5429, 0
  %v5468 = vsel %vm39, %v5430, 0
  %v5471 = vsel %vm39, %v5431, 0
  %v5474 = vsel %vm39, %v5432, 0
  %v5477 = vsel %vm39, %v5433, 0
  %v5480 = vsel %vm39, %v5434, 0
  %v5483 = vsel %vm39, %v5435, 0
  %v5486 = vsel %vm39, %v5436, 0
  %v5489 = vsel %vm39, %v5437, 0
  %v5492 = vsel %vm39, %v5438, 0
  %v5495 = vsel %vm39, %v5439, 0
  %v5498 = vsel %vm39, %v5440, 0
  %v5501 = vsel %vm39, %v5441, 0
  %v5504 = vsel %vm39, %v5442, 0
  %v5507 = vsel %vm39, %v5443, 0
  %v5510 = vsel %vm39, %v5444, 0
  %v5513 = vsel %vm39, %v5445, 0
  %v5516 = vsel %vm39, %v5446, 0
  %5518 = vmatprep.subr.mxu0 0.0
  %5519 = vmatpush1.msra.mxu0 %v5448
  %5520 = vmatprep.subr.mxu0 0.0
  %5521 = vmatpush1.msra.mxu0 0.0
  %5522 = vmatprep.subr.mxu0 0.0
  %5523 = vmatpush1.msra.mxu0 0.0
  %5524 = vmatprep.subr.mxu0 0.0
  %5525 = vmatpush1.msra.mxu0 0.0
  %5526 = vmatprep.subr.mxu0 0.0
  %5527 = vmatpush1.msra.mxu0 0.0
  %5528 = vmatprep.subr.mxu0 0.0
  %5529 = vmatpush1.msra.mxu0 0.0
  %5530 = vmatprep.subr.mxu0 0.0
  %5531 = vmatpush1.msra.mxu0 0.0
  %5532 = vmatprep.subr.mxu0 0.0
  %5533 = vmatpush1.msra.mxu0 0.0
  %5534 = vmatprep.subr.mxu0 0.0
  %5535 = vmatpush1.msra.mxu0 0.0
  %5536 = vmatprep.subr.mxu0 0.0
  %5537 = vmatpush1.msra.mxu0 0.0
  %5538 = vmatprep.subr.mxu0 0.0
  %5539 = vmatpush1.msra.mxu0 0.0
  %5540 = vmatprep.subr.mxu0 0.0
  %5541 = vmatpush1.msra.mxu0 0.0
  %5542 = vmatprep.subr.mxu0 0.0
  %5543 = vmatpush1.msra.mxu0 0.0
  %5544 = vmatprep.subr.mxu0 0.0
  %5545 = vmatpush1.msra.mxu0 0.0
  %5546 = vmatprep.subr.mxu0 0.0
  %5547 = vmatpush1.msra.mxu0 0.0
  %5548 = vmatprep.subr.mxu0 0.0
  %5549 = vmatpush1.msra.mxu0 0.0
  %5550 = vmatprep.subr.mxu0 0.0
  %5551 = vmatpush1.msra.mxu0 0.0
  %5552 = vmatprep.subr.mxu0 0.0
  %5553 = vmatpush1.msra.mxu0 0.0
  %5554 = vmatprep.subr.mxu0 0.0
  %5555 = vmatpush1.msra.mxu0 0.0
  %5556 = vmatprep.subr.mxu0 0.0
  %5557 = vmatpush1.msra.mxu0 0.0
  %5558 = vmatprep.subr.mxu0 0.0
  %5559 = vmatpush1.msra.mxu0 0.0
  %5560 = vmatprep.subr.mxu0 0.0
  %5561 = vmatpush1.msra.mxu0 0.0
  %5562 = vmatprep.subr.mxu0 0.0
  %5563 = vmatpush1.msra.mxu0 0.0
  %5564 = vmatprep.subr.mxu0 0.0
  %5565 = vmatpush1.msra.mxu0 0.0
  %5566 = vmatprep.subr.mxu0 0.0
  %5567 = vmatpush1.msra.mxu0 0.0
  %5568 = vmatprep.subr.mxu0 0.0
  %5569 = vmatpush1.msra.mxu0 0.0
  %5570 = vmatprep.subr.mxu0 0.0
  %5571 = vmatpush1.msra.mxu0 0.0
  %5572 = vmatprep.subr.mxu0 0.0
  %5573 = vmatpush1.msra.mxu0 0.0
  %5574 = vmatprep.subr.mxu0 0.0
  %5575 = vmatpush1.msra.mxu0 0.0
  %5576 = vmatprep.subr.mxu0 0.0
  %5577 = vmatpush1.msra.mxu0 0.0
  %5578 = vmatprep.subr.mxu0 0.0
  %5579 = vmatpush1.msra.mxu0 0.0
  %5580 = vmatprep.subr.mxu0 0.0
  %5581 = vmatpush1.msra.mxu0 0.0
  %5582 = vmatprep.mubr.f32.mxu0 0.0
  %5583 = vmatmul.mubr.f32.gmra.mrb[0].mxu0 %v5450
  %v5584 = vpop.f32.mrb[0].mxu0
  %v5585 = vadd.f32 0.0, %v5584
  %v5586 = vpop.f32.mrb[0].mxu0
  %5587 = vmatprep.mubr.f32.mxu0 0.0
  %5588 = vmatmul.mubr.f32.gmra.mrb[0].mxu0 %v5453
  %v5589 = vpop.f32.mrb[0].mxu0
  %v5590 = vadd.f32 0.0, %v5589
  %v5591 = vpop.f32.mrb[0].mxu0
  %5592 = vmatprep.mubr.f32.mxu0 0.0
  %5593 = vmatmul.mubr.f32.gmra.mrb[0].mxu0 %v5456
  %v5594 = vpop.f32.mrb[0].mxu0
  %v5595 = vadd.f32 0.0, %v5594
  %v5596 = vpop.f32.mrb[0].mxu0
  %5597 = vmatprep.mubr.f32.mxu0 0.0
  %5598 = vmatmul.mubr.f32.gmra.mrb[0].mxu0 %v5459
  %v5599 = vpop.f32.mrb[0].mxu0
  %v5600 = vadd.f32 0.0, %v5599
  %v5601 = vpop.f32.mrb[0].mxu0
  %5602 = vmatprep.mubr.f32.mxu0 0.0
  %5603 = vmatmul.mubr.f32.gmra.mrb[0].mxu0 %v5462
  %v5604 = vpop.f32.mrb[0].mxu0
  %v5605 = vadd.f32 0.0, %v5604
  %v5606 = vpop.f32.mrb[0].mxu0
  %5607 = vmatprep.mubr.f32.mxu0 0.0
  %5608 = vmatmul.mubr.f32.gmra.mrb[0].mxu0 %v5465
  %v5609 = vpop.f32.mrb[0].mxu0
  %v5610 = vadd.f32 0.0, %v5609
  %v5611 = vpop.f32.mrb[0].mxu0
  %5612 = vmatprep.mubr.f32.mxu0 0.0
  %5613 = vmatmul.mubr.f32.gmra.mrb[0].mxu0 %v5468
  %v5614 = vpop.f32.mrb[0].mxu0
  %v5615 = vadd.f32 0.0, %v5614
  %v5616 = vpop.f32.mrb[0].mxu0
  %5617 = vmatprep.mubr.f32.mxu0 0.0
  %5618 = vmatmul.mubr.f32.gmra.mrb[0].mxu0 %v5471
  %v5619 = vpop.f32.mrb[0].mxu0
  %v5620 = vadd.f32 0.0, %v5619
  %v5621 = vpop.f32.mrb[0].mxu0
  %5622 = vmatprep.mubr.f32.mxu0 0.0
  %5623 = vmatmul.mubr.f32.gmra.mrb[0].mxu0 %v5474
  %v5624 = vpop.f32.mrb[0].mxu0
  %v5625 = vadd.f32 0.0, %v5624
  %v5626 = vpop.f32.mrb[0].mxu0
  %5627 = vmatprep.mubr.f32.mxu0 0.0
  %5628 = vmatmul.mubr.f32.gmra.mrb[0].mxu0 %v5477
  %v5629 = vpop.f32.mrb[0].mxu0
  %v5630 = vadd.f32 0.0, %v5629
  %v5631 = vpop.f32.mrb[0].mxu0
  %5632 = vmatprep.mubr.f32.mxu0 0.0
  %5633 = vmatmul.mubr.f32.gmra.mrb[0].mxu0 %v5480
  %v5634 = vpop.f32.mrb[0].mxu0
  %v5635 = vpop.f32.mrb[0].mxu0
  %5636 = vmatprep.mubr.f32.mxu0 0.0
  %5637 = vmatmul.mubr.f32.gmra.mrb[0].mxu0 %v5483
  %v5638 = vpop.f32.mrb[0].mxu0
  %v5639 = vpop.f32.mrb[0].mxu0
  %5640 = vmatprep.mubr.f32.mxu0 0.0
  %5641 = vmatmul.mubr.f32.gmra.mrb[0].mxu0 %v5486
  %v5642 = vpop.f32.mrb[0].mxu0
  %v5643 = vpop.f32.mrb[0].mxu0
  %5644 = vmatprep.mubr.f32.mxu0 0.0
  %5645 = vmatmul.mubr.f32.gmra.mrb[0].mxu0 %v5489
  %v5646 = vpop.f32.mrb[0].mxu0
  %v5647 = vadd.f32 0.0, %v5646
  %v5648 = vpop.f32.mrb[0].mxu0
  %5649 = vmatprep.mubr.f32.mxu0 0.0
  %5650 = vmatmul.mubr.f32.gmra.mrb[0].mxu0 %v5492
  %v5651 = vpop.f32.mrb[0].mxu0
  %v5652 = vadd.f32 0.0, %v5651
  %v5653 = vpop.f32.mrb[0].mxu0
  %5654 = vmatprep.mubr.f32.mxu0 0.0
  %5655 = vmatmul.mubr.f32.gmra.mrb[0].mxu0 %v5495
  %v5656 = vpop.f32.mrb[0].mxu0
  %v5657 = vadd.f32 0.0, %v5656
  %v5658 = vpop.f32.mrb[0].mxu0
  %5659 = vmatprep.mubr.f32.mxu0 0.0
  %5660 = vmatmul.mubr.f32.gmra.mrb[0].mxu0 %v5498
  %v5661 = vpop.f32.mrb[0].mxu0
  %v5662 = vadd.f32 0.0, %v5661
  %v5663 = vpop.f32.mrb[0].mxu0
  %5664 = vmatprep.mubr.f32.mxu0 0.0
  %5665 = vmatmul.mubr.f32.gmra.mrb[0].mxu0 %v5501
  %v5666 = vpop.f32.mrb[0].mxu0
  %v5667 = vadd.f32 0.0, %v5666
  %v5668 = vpop.f32.mrb[0].mxu0
  %5669 = vmatprep.mubr.f32.mxu0 0.0
  %5670 = vmatmul.mubr.f32.gmra.mrb[0].mxu0 %v5504
  %v5671 = vpop.f32.mrb[0].mxu0
  %v5672 = vadd.f32 0.0, %v5671
  %v5673 = vpop.f32.mrb[0].mxu0
  %5674 = vmatprep.mubr.f32.mxu0 0.0
  %5675 = vmatmul.mubr.f32.gmra.mrb[0].mxu0 %v5507
  %v5676 = vpop.f32.mrb[0].mxu0
  %v5677 = vadd.f32 0.0, %v5676
  %v5678 = vpop.f32.mrb[0].mxu0
  %5679 = vmatprep.mubr.f32.mxu0 0.0
  %5680 = vmatmul.mubr.f32.gmra.mrb[0].mxu0 %v5510
  %v5681 = vpop.f32.mrb[0].mxu0
  %v5682 = vadd.f32 0.0, %v5681
  %v5683 = vpop.f32.mrb[0].mxu0
  %5684 = vmatprep.mubr.f32.mxu0 0.0
  %5685 = vmatmul.mubr.f32.gmra.mrb[0].mxu0 %v5513
  %v5686 = vpop.f32.mrb[0].mxu0
  %v5687 = vadd.f32 0.0, %v5686
  %v5688 = vpop.f32.mrb[0].mxu0
  %5689 = vmatprep.mubr.f32.mxu0 0.0
  %5690 = vmatmul.mubr.f32.gmra.mrb[0].mxu0 %v5516
  %v5691 = vpop.f32.mrb[0].mxu0
  %v5692 = vadd.f32 0.0, %v5691
  %v5693 = vpop.f32.mrb[0].mxu0
  %5694 = vdwg.mxu0
  %v5695 = vadd.f32 %v5404, %v5585
  %v5696 = vadd.f32 %v5405, %v5590
  %v5697 = vadd.f32 %v5406, %v5595
  %v5698 = vadd.f32 %v5407, %v5600
  %v5699 = vadd.f32 %v5408, %v5605
  %v5700 = vadd.f32 %v5409, %v5610
  %v5701 = vadd.f32 %v5410, %v5615
  %v5702 = vadd.f32 %v5411, %v5620
  %v5703 = vadd.f32 %v5412, %v5625
  %v5704 = vadd.f32 %v5413, %v5630
  %v5705 = vadd.f32 %v5414, %v5647
  %v5706 = vadd.f32 %v5415, %v5652
  %v5707 = vadd.f32 %v5416, %v5657
  %v5708 = vadd.f32 %v5417, %v5662
  %v5709 = vadd.f32 %v5418, %v5667
  %v5710 = vadd.f32 %v5419, %v5672
  %v5711 = vadd.f32 %v5420, %v5677
  %v5712 = vadd.f32 %v5421, %v5682
  %v5713 = vadd.f32 %v5422, %v5687
  %v5714 = vadd.f32 %v5423, %v5692
  %v5715 = vld [vmem:[%s6] sm:$0x1]
  %v5717 = vlaneseq
  %v5718 = vshrl.u32 %v5717, 7
  %v5719 = vsub.s32 0, %v5718
  %v5720 = vrot.slane %v5715, %v5719
  %v5722 = vmul.f32 %v5695, %v5720
  %v5723 = vmul.f32 %v5696, %v5720
  %v5724 = vmul.f32 %v5697, %v5720
  %v5725 = vmul.f32 %v5698, %v5720
  %v5726 = vmul.f32 %v5699, %v5720
  %v5727 = vmul.f32 %v5700, %v5720
  %v5728 = vmul.f32 %v5701, %v5720
  %v5729 = vmul.f32 %v5702, %v5720
  %v5730 = vmul.f32 %v5703, %v5720
  %v5731 = vmul.f32 %v5704, %v5720
  %v5732 = vmul.f32 %v5705, %v5720
  %v5733 = vmul.f32 %v5706, %v5720
  %v5734 = vmul.f32 %v5707, %v5720
  %v5735 = vmul.f32 %v5708, %v5720
  %v5736 = vmul.f32 %v5709, %v5720
  %v5737 = vmul.f32 %v5710, %v5720
  %v5738 = vmul.f32 %v5711, %v5720
  %v5739 = vmul.f32 %v5712, %v5720
  %v5740 = vmul.f32 %v5713, %v5720
  %v5741 = vmul.f32 %v5714, %v5720
  %v5742 = vld [vmem:[%s7] sm:$0x1]
  %v5744 = vlaneseq
  %v5745 = vshrl.u32 %v5744, 7
  %v5746 = vsub.s32 0, %v5745
  %v5747 = vrot.slane %v5742, %v5746
  %v5749 = vadd.f32 %v5722, %v5747
  %v5750 = vadd.f32 %v5723, %v5747
  %v5751 = vadd.f32 %v5724, %v5747
  %v5752 = vadd.f32 %v5725, %v5747
  %v5753 = vadd.f32 %v5726, %v5747
  %v5754 = vadd.f32 %v5727, %v5747
  %v5755 = vadd.f32 %v5728, %v5747
  %v5756 = vadd.f32 %v5729, %v5747
  %v5757 = vadd.f32 %v5730, %v5747
  %v5758 = vadd.f32 %v5731, %v5747
  %v5759 = vadd.f32 %v5732, %v5747
  %v5760 = vadd.f32 %v5733, %v5747
  %v5761 = vadd.f32 %v5734, %v5747
  %v5762 = vadd.f32 %v5735, %v5747
  %v5763 = vadd.f32 %v5736, %v5747
  %v5764 = vadd.f32 %v5737, %v5747
  %v5765 = vadd.f32 %v5738, %v5747
  %v5766 = vadd.f32 %v5739, %v5747
  %v5767 = vadd.f32 %v5740, %v5747
  %v5768 = vadd.f32 %v5741, %v5747
  %v5769 = vmax.f32 %v5749, 0.0
  %v5770 = vmax.f32 %v5750, 0.0
  %v5771 = vmax.f32 %v5751, 0.0
  %v5772 = vmax.f32 %v5752, 0.0
  %v5773 = vmax.f32 %v5753, 0.0
  %v5774 = vmax.f32 %v5754, 0.0
  %v5775 = vmax.f32 %v5755, 0.0
  %v5776 = vmax.f32 %v5756, 0.0
  %v5777 = vmax.f32 %v5757, 0.0
  %v5778 = vmax.f32 %v5758, 0.0
  %v5779 = vmax.f32 %v5759, 0.0
  %v5780 = vmax.f32 %v5760, 0.0
  %v5781 = vmax.f32 %v5761, 0.0
  %v5782 = vmax.f32 %v5762, 0.0
  %v5783 = vmax.f32 %v5763, 0.0
  %v5784 = vmax.f32 %v5764, 0.0
  %v5785 = vmax.f32 %v5765, 0.0
  %v5786 = vmax.f32 %v5766, 0.0
  %v5787 = vmax.f32 %v5767, 0.0
  %v5788 = vmax.f32 %v5768, 0.0
  %5789 = vst.msk [vmem:[%s8] sm:$0xff] %vm39, %v5769
  %5790 = vst.msk [vmem:[%s8 + $0x8] sm:$0xff] %vm39, %v5770
  %5791 = vst.msk [vmem:[%s8 + $0x10] sm:$0xff] %vm39, %v5771
  %5792 = vst.msk [vmem:[%s8 + $0x18] sm:$0xff] %vm39, %v5772
  %5793 = vst.msk [vmem:[%s8 + $0x20] sm:$0xff] %vm39, %v5773
  %5794 = vst.msk [vmem:[%s8 + $0x28] sm:$0xff] %vm39, %v5774
  %5795 = vst.msk [vmem:[%s8 + $0x30] sm:$0xff] %vm39, %v5775
  %5796 = vst.msk [vmem:[%s8 + $0x38] sm:$0xff] %vm39, %v5776
  %5797 = vst.msk [vmem:[%s8 + $0x40] sm:$0xff] %vm39, %v5777
  %5798 = vst.msk [vmem:[%s8 + $0x48] sm:$0xff] %vm39, %v5778
  %s5799 = scalar_lea.vmem %s8, 80
  %5800 = vst.msk [vmem:[%s5799] sm:$0xff] %vm39, %v5779
  %5801 = vst.msk [vmem:[%s5799 + $0x8] sm:$0xff] %vm39, %v5780
  %5802 = vst.msk [vmem:[%s5799 + $0x10] sm:$0xff] %vm39, %v5781
  %5803 = vst.msk [vmem:[%s5799 + $0x18] sm:$0xff] %vm39, %v5782
  %5804 = vst.msk [vmem:[%s5799 + $0x20] sm:$0xff] %vm39, %v5783
  %5805 = vst.msk [vmem:[%s5799 + $0x28] sm:$0xff] %vm39, %v5784
  %5806 = vst.msk [vmem:[%s5799 + $0x30] sm:$0xff] %vm39, %v5785
  %5807 = vst.msk [vmem:[%s5799 + $0x38] sm:$0xff] %vm39, %v5786
  %5808 = vst.msk [vmem:[%s5799 + $0x40] sm:$0xff] %vm39, %v5787
  %5809 = vst.msk [vmem:[%s5799 + $0x48] sm:$0xff] %vm39, %v5788
  // Predicated region
  $region34: #{tpu_custom_call.1} parent=0 // pred_check
    _
  $region35: #{tpu_custom_call.1} parent=0 // pred_check_branch
    %5811 = sbr.rel (0) target = $region37
  $region36: #{tpu_custom_call.1} parent=0 // pred_region
    _
  $region37: #{tpu_custom_call.1} parent=0 // pred_fallthru
    _
  // Predicated region
  $region38: #{tpu_custom_call.1} parent=0 // pred_check
    _
  $region39: #{tpu_custom_call.1} parent=0 // pred_check_branch
    %5813 = sbr.rel (0) target = $region41
  $region40: #{tpu_custom_call.1} parent=0 // pred_region
    _
  $region41: #{tpu_custom_call.1} parent=0 // pred_fallthru
    _

</llo_original>
